<compile_context>
chip_gen: v6e
topology: v6e:2x2x1
jax: 0.10.0
libtpu: 0.0.40
codegen_flags: <defaults>
</compile_context>

<pallas_src>
import math
from functools import partial

import jax
import jax.numpy as jnp
from jax.experimental import pallas as pl
from jax.experimental.pallas import tpu as pltpu

# ---------------- model hyper-parameters (consistent with the module) ----------------
LSTM_HIDDEN = 65          # CNN_LSTM_lstm_hidden_size
LSTM_INPUT = 65           # CNN_LSTM_lstm_input_size
NUM_LSTM_LAYERS = 2       # CNN_LSTM_num_lstm_layers

IN_C, IN_H, IN_W = 3, 16, 16      # input_shape (C, H, W)
REDUCTION = 8                      # stand-in backbone reduction factor
BACKBONE_OUT = 32                  # backbone.out_channels[-1] (stand-in)
POOL_CHANNELS = 16
FC_HIDDEN = 32
ANCHORS = 8

HP, WP = IN_H // REDUCTION, IN_W // REDUCTION
S = HP * WP                                   # spatial positions after backbone
P = IN_C * REDUCTION * REDUCTION              # flattened patch size
NUM_CHANNELS = POOL_CHANNELS * math.ceil(IN_H / REDUCTION) * math.ceil(IN_W / REDUCTION)
FC_H1 = int(FC_HIDDEN * 1.75)                 # 56
FC_H2 = int(FC_HIDDEN * 1.25)                 # 40
OUT_DIM = ANCHORS * 2 + 1                     # 17

HPAD = 128                                    # lane-padded hidden size per LSTM gate
G4P = 4 * HPAD                                # 512


# ---------------------------------------------------------------------------
# Single fused kernel: backbone stand-in + 1x1 conv + max-pool + fc_in
#                      + 2-layer LSTM + single-frame fc + concat + fc_out
# ---------------------------------------------------------------------------
def fused_kernel(n,
                 patch_ref,
                 w_bb_ref, b_bb_ref, w_cv_ref, b_cv_ref,
                 w_in1_ref, b_in1_ref, w_in2_ref, b_in2_ref,
                 w_ih0_ref, b_l0_ref, w_hh0_ref, w1_ref, b_l1_ref,
                 w_f1_ref, b_f1_ref, w_f2_ref, b_f2_ref,
                 w_f3_ref, b_f3_ref, w_f4_ref, b_f4_ref,
                 w_o1a_ref, w_o1b_ref, b_o1_ref, w_o2_ref, b_o2_ref,
                 reg_ref):
    f32 = jnp.float32
    bf16 = jnp.bfloat16

    def dense(x, w_ref, b_ref):
        return jnp.dot(x, w_ref[...], preferred_element_type=f32) + b_ref[...]

    # ---- stand-in backbone + 1x1 conv: all S*N rows batched in one matmul chain ----
    # TODO(synk): the real ResNet/EfficientNet backbone has no clean single-kernel Pallas
    # equivalent; it is replaced by one patch-embedding matmul + ReLU.
    feat = jnp.maximum(dense(patch_ref[...], w_bb_ref, b_bb_ref), 0.0)   # (S*N, 32)
    y = dense(feat, w_cv_ref, b_cv_ref)                                  # (S*N, 64)

    # AdaptiveMaxPool2d((1,1)) == max over the S spatial slabs (rows are s-major: s*n + frame)
    fb = y[0:n, :]
    for s in range(1, S):
        fb = jnp.maximum(fb, y[s * n:(s + 1) * n, :])                    # (N, 64)

    # ---- single-frame fc branch (depends only on fb) — hoisted before the recurrence ----
    fb_last = fb[n - 1:n, :]
    z = jnp.maximum(dense(fb_last, w_f1_ref, b_f1_ref), 0.0)
    z = jnp.maximum(dense(z, w_f2_ref, b_f2_ref), 0.0)
    z = jnp.maximum(dense(z, w_f3_ref, b_f3_ref), 0.0)
    single = dense(z, w_f4_ref, b_f4_ref)                                # (1, 128) lane-padded

    # ---- fc_in: Linear -> ReLU -> Linear -> ReLU (output lane-padded 65 -> 128) ----
    z = jnp.maximum(dense(fb, w_in1_ref, b_in1_ref), 0.0)
    fea = jnp.maximum(dense(z, w_in2_ref, b_in2_ref), 0.0)               # (N, 128)

    # ---- LSTM layer-0 input projection hoisted: one (N,128)@(128,512) bf16 matmul ----
    gates_x0 = (jnp.dot(fea.astype(bf16), w_ih0_ref[...],
                        preferred_element_type=f32)
                + b_l0_ref[...])                                         # (N, 512)

    def gate_math(g, c):
        # The tanh-gate ('g') column block of every LSTM weight/bias was pre-scaled by 2 at
        # pack time, so ONE sigmoid over the full 512-lane row gives i, f, o directly and
        # tanh(g) = 2*sigmoid(2g) - 1.  Padded lanes: g==0 -> sigmoid=0.5, gg=0 -> c,h stay 0.
        sg = jax.nn.sigmoid(g)
        i = sg[:, 0 * HPAD:1 * HPAD]
        f = sg[:, 1 * HPAD:2 * HPAD]
        gg = 2.0 * sg[:, 2 * HPAD:3 * HPAD] - 1.0
        o = sg[:, 3 * HPAD:4 * HPAD]
        c = f * c + i * gg
        h = o * jnp.tanh(c)
        return h, c

    zero = jnp.zeros((1, HPAD), f32)
    h0, c0, h1, c1 = zero, zero, zero, zero
    # fully unrolled recurrence (static trip count), both layers interleaved per step;
    # weights are streamed from VMEM refs per dot (no long-lived 64-vreg weight values).
    for t in range(n):
        g0 = gates_x0[t:t + 1, :] + jnp.dot(h0.astype(bf16), w_hh0_ref[...],
                                            preferred_element_type=f32)
        h0, c0 = gate_math(g0, c0)
        # layer-1: one stacked (1,256)@(256,512) dot instead of two 128-K dots
        hcat = jnp.concatenate([h0, h1], axis=1).astype(bf16)            # (1, 256)
        g1 = jnp.dot(hcat, w1_ref[...], preferred_element_type=f32) + b_l1_ref[...]
        h1, c1 = gate_math(g1, c1)
    # h1 == lstm_out[:, -1, :] (lane-padded with exact zeros beyond LSTM_HIDDEN)

    # ---- fc_out: ReLU -> Linear(130,17) -> ReLU -> Linear(17,17) ----
    # concat is folded into the first Linear:  [h | s] @ W = h @ Wa + s @ Wb
    lr = jnp.maximum(h1, 0.0)
    sr = jnp.maximum(single, 0.0)
    z = (jnp.dot(lr, w_o1a_ref[...], preferred_element_type=f32)
         + jnp.dot(sr, w_o1b_ref[...], preferred_element_type=f32)
         + b_o1_ref[...])
    z = jnp.maximum(z, 0.0)
    reg_ref[...] = dense(z, w_o2_ref, b_o2_ref)                          # (1, 17)


# ---------------------------------------------------------------------------
# Glue (plain JAX): patch extraction + one-time parameter packing
# ---------------------------------------------------------------------------
def extract_patches_sn(x5, rf):
    # (B, T, C, H, W) -> (S*N, P), rows ordered s-major: row = s*N + frame
    b, t, c, h, w = x5.shape
    n = b * t
    x = x5.reshape(n, c, h, w)
    hp, wp = h // rf, w // rf
    x = x.reshape(n, c, hp, rf, wp, rf)
    x = x.transpose(2, 4, 0, 1, 3, 5)            # (hp, wp, N, C, rf, rf)
    return x.reshape(hp * wp * n, c * rf * rf)


def extract_patches(x5, rf):
    # (B, T, C, H, W) -> (N, S, P)   (reference layout)
    b, t, c, h, w = x5.shape
    n = b * t
    x = x5.reshape(n, c, h, w)
    hp, wp = h // rf, w // rf
    x = x.reshape(n, c, hp, rf, wp, rf)
    x = x.transpose(0, 2, 4, 1, 3, 5)            # (N, hp, wp, C, rf, rf)
    return x.reshape(n, hp * wp, c * rf * rf)


def pack_params(p):
    """One-time packing of kernel parameters.

    * lane-pads each LSTM gate block 65 -> 128 columns (zeros)
    * lane-pads the LSTM input / single-frame output dim 65 -> 128
    * stacks layer-1 [w_ih1; w_hh1] into one (256, 512) weight
    * pre-scales the tanh-gate column block by 2 (tanh(x) = 2*sigmoid(2x) - 1 in-kernel)
    * stores the big LSTM matmul weights in bf16 (halves the entry HBM->VMEM DMA)
    Run this ONCE at parameter-prep time, not per forward call.
    """
    def pad_gate_cols(w):
        d = w.shape[0]
        w4 = w.reshape(d, 4, LSTM_HIDDEN)
        w4 = jnp.pad(w4, ((0, 0), (0, 0), (0, HPAD - LSTM_HIDDEN)))
        return w4.reshape(d, G4P)

    def scale_g_cols(w):
        return w.at[:, 2 * HPAD:3 * HPAD].multiply(2.0)

    def pad_rows(w, rows=HPAD):
        return jnp.pad(w, ((0, rows - w.shape[0]), (0, 0)))

    def pad_cols(w, cols=HPAD):
        return jnp.pad(w, ((0, 0), (0, cols - w.shape[1])))

    bf16 = jnp.bfloat16

    w_ih0_p = pad_rows(scale_g_cols(pad_gate_cols(p['w_ih0']))).astype(bf16)   # (128, 512)
    w_hh0_p = pad_rows(scale_g_cols(pad_gate_cols(p['w_hh0']))).astype(bf16)   # (128, 512)
    b_l0_p = scale_g_cols(pad_gate_cols(p['b_l0']))                            # (1, 512) f32

    w_ih1_p = pad_rows(scale_g_cols(pad_gate_cols(p['w_ih1'])))                # (128, 512)
    w_hh1_p = pad_rows(scale_g_cols(pad_gate_cols(p['w_hh1'])))                # (128, 512)
    w1_stacked = jnp.concatenate([w_ih1_p, w_hh1_p], axis=0).astype(bf16)      # (256, 512)
    b_l1_p = scale_g_cols(pad_gate_cols(p['b_l1']))                            # (1, 512) f32

    q = dict(p)
    q['w_ih0_p'] = w_ih0_p
    q['w_hh0_p'] = w_hh0_p
    q['b_l0_p'] = b_l0_p
    q['w1_stacked'] = w1_stacked
    q['b_l1_p'] = b_l1_p
    # lane-pad LSTM input / single-frame output dims 65 -> 128 (zeros)
    q['w_in2_p'] = pad_cols(p['w_in2'])                                        # (32, 128)
    q['b_in2_p'] = pad_cols(p['b_in2'])                                        # (1, 128)
    q['w_f4_p'] = pad_cols(p['w_f4'])                                          # (32, 128)
    q['b_f4_p'] = pad_cols(p['b_f4'])                                          # (1, 128)
    # fc_out first Linear split across the concat, rows padded to 128 (zeros)
    q['w_o1a_p'] = pad_rows(p['w_o1'][:LSTM_HIDDEN])                           # (128, 17)
    q['w_o1b_p'] = pad_rows(p['w_o1'][LSTM_HIDDEN:])                           # (128, 17)
    return q


def forward_pallas(x5, q):
    b, t = x5.shape[0], x5.shape[1]
    # module semantics: concat of (B,65) lstm_out with (1,65) single-frame pred requires B==1
    assert b == 1, "RegressionNetCNN_LSTM_HEAD_SKIP_cat_V3 concat requires batch size 1"
    n = b * t
    # NOTE: best perf when n % 8 == 0 (sublane-aligned max-pool slabs); pad frames otherwise.
    patches = extract_patches_sn(x5, REDUCTION)                          # (S*N, P)

    args = (patches,
            q['w_bb'], q['b_bb'], q['w_cv'], q['b_cv'],
            q['w_in1'], q['b_in1'], q['w_in2_p'], q['b_in2_p'],
            q['w_ih0_p'], q['b_l0_p'], q['w_hh0_p'], q['w1_stacked'], q['b_l1_p'],
            q['w_f1'], q['b_f1'], q['w_f2'], q['b_f2'],
            q['w_f3'], q['b_f3'], q['w_f4_p'], q['b_f4_p'],
            q['w_o1a_p'], q['w_o1b_p'], q['b_o1'], q['w_o2'], q['b_o2'])

    vmem = pl.BlockSpec(memory_space=pltpu.MemorySpace.VMEM)
    return pl.pallas_call(
        partial(fused_kernel, n),
        out_shape=jax.ShapeDtypeStruct((1, OUT_DIM), jnp.float32),
        in_specs=[vmem] * len(args),
        out_specs=vmem,
    )(*args)


# ---------------------------------------------------------------------------
# Pure-JAX reference (same math, full f32, no Pallas) for a correctness check
# ---------------------------------------------------------------------------
def reference_forward(x5, p):
    patches = extract_patches(x5, REDUCTION)
    feat = jax.nn.relu(jnp.einsum('nsp,pc->nsc', patches, p['w_bb']) + p['b_bb'])
    y = jnp.einsum('nsc,cd->nsd', feat, p['w_cv']) + p['b_cv']
    fea_back = jnp.max(y, axis=1)
    z = jax.nn.relu(fea_back @ p['w_in1'] + p['b_in1'])
    fea = jax.nn.relu(z @ p['w_in2'] + p['b_in2'])

    def lstm_layer(xseq, w_ih, w_hh, b):
        H = LSTM_HIDDEN
        h = jnp.zeros((1, H), jnp.float32)
        c = jnp.zeros((1, H), jnp.float32)
        outs = []
        for t in range(xseq.shape[0]):
            gates = xseq[t:t + 1] @ w_ih + h @ w_hh + b
            i = jax.nn.sigmoid(gates[:, 0:H])
            f = jax.nn.sigmoid(gates[:, H:2 * H])
            g = jnp.tanh(gates[:, 2 * H:3 * H])
            o = jax.nn.sigmoid(gates[:, 3 * H:4 * H])
            c = f * c + i * g
            h = o * jnp.tanh(c)
            outs.append(h)
        return jnp.concatenate(outs, axis=0)

    h1 = lstm_layer(fea, p['w_ih0'], p['w_hh0'], p['b_l0'])
    h2 = lstm_layer(h1, p['w_ih1'], p['w_hh1'], p['b_l1'])
    lstm_last = h2[-1:, :]
    fb_last = fea_back[-1:, :]
    z = jax.nn.relu(fb_last @ p['w_f1'] + p['b_f1'])
    z = jax.nn.relu(z @ p['w_f2'] + p['b_f2'])
    z = jax.nn.relu(z @ p['w_f3'] + p['b_f3'])
    single = z @ p['w_f4'] + p['b_f4']
    cat = jnp.concatenate([lstm_last, single], axis=1)
    z = jax.nn.relu(cat)
    z = jax.nn.relu(z @ p['w_o1'] + p['b_o1'])
    return z @ p['w_o2'] + p['b_o2']


# ---------------------------------------------------------------------------
# Deterministic parameter init (unpadded f32; kernel uses pack_params(p))
# ---------------------------------------------------------------------------
def init_params(key):
    ks = jax.random.split(key, 26)

    def w(k, shape):
        return jax.random.normal(k, shape, jnp.float32) * 0.1

    G4 = 4 * LSTM_HIDDEN
    p = {
        'w_bb': w(ks[0], (P, BACKBONE_OUT)),       'b_bb': w(ks[1], (1, BACKBONE_OUT)),
        'w_cv': w(ks[2], (BACKBONE_OUT, NUM_CHANNELS)), 'b_cv': w(ks[3], (1, NUM_CHANNELS)),
        'w_in1': w(ks[4], (NUM_CHANNELS, NUM_CHANNELS // 2)),
        'b_in1': w(ks[5], (1, NUM_CHANNELS // 2)),
        'w_in2': w(ks[6], (NUM_CHANNELS // 2, LSTM_INPUT)),
        'b_in2': w(ks[7], (1, LSTM_INPUT)),
        # LSTM weights stored pre-transposed: gates = x @ w_ih + h @ w_hh + b (i,f,g,o)
        'w_ih0': w(ks[8], (LSTM_INPUT, G4)),  'w_hh0': w(ks[9], (LSTM_HIDDEN, G4)),
        'b_l0':  w(ks[10], (1, G4)),
        'w_ih1': w(ks[11], (LSTM_HIDDEN, G4)), 'w_hh1': w(ks[12], (LSTM_HIDDEN, G4)),
        'b_l1':  w(ks[13], (1, G4)),
        'w_f1': w(ks[14], (NUM_CHANNELS, FC_H1)), 'b_f1': w(ks[15], (1, FC_H1)),
        'w_f2': w(ks[16], (FC_H1, FC_H2)),        'b_f2': w(ks[17], (1, FC_H2)),
        'w_f3': w(ks[18], (FC_H2, FC_HIDDEN)),    'b_f3': w(ks[19], (1, FC_HIDDEN)),
        'w_f4': w(ks[20], (FC_HIDDEN, LSTM_INPUT)), 'b_f4': w(ks[21], (1, LSTM_INPUT)),
        'w_o1': w(ks[22], (2 * LSTM_HIDDEN, OUT_DIM)), 'b_o1': w(ks[23], (1, OUT_DIM)),
        'w_o2': w(ks[24], (OUT_DIM, OUT_DIM)),         'b_o2': w(ks[25], (1, OUT_DIM)),
    }
    return p


if __name__ == "__main__":
    key = jax.random.PRNGKey(0)
    kx, kp = jax.random.split(key)
    # 5-D input (B, T, C, H, W); B must be 1 for the module's concat to be valid.
    B, T = 1, 8
    x = jax.random.normal(kx, (B, T, IN_C, IN_H, IN_W), jnp.float32)
    params = init_params(kp)
    packed = jax.block_until_ready(pack_params(params))   # one-time packing (not per call)

    reg = forward_pallas(x, packed)
    reg = jax.block_until_ready(reg)

    ref = reference_forward(x, params)
    assert reg.shape == (1, OUT_DIM), reg.shape
    assert bool(jnp.all(jnp.isfinite(reg)))
    # bf16 LSTM matmul operands vs f32 reference -> slightly looser tolerance than pure f32
    assert bool(jnp.allclose(reg, ref, atol=3e-2, rtol=3e-2)), (reg, ref)
    print("KERNEL_OK")
</pallas_src>

<mosaic_0001>
module attributes {stable_mosaic.version = 11 : i64} {
  func.func @fused_kernel(%arg0: memref<32x192xf32, #tpu.memory_space<vmem>>, %arg1: memref<192x32xf32, #tpu.memory_space<vmem>>, %arg2: memref<1x32xf32, #tpu.memory_space<vmem>>, %arg3: memref<32x64xf32, #tpu.memory_space<vmem>>, %arg4: memref<1x64xf32, #tpu.memory_space<vmem>>, %arg5: memref<64x32xf32, #tpu.memory_space<vmem>>, %arg6: memref<1x32xf32, #tpu.memory_space<vmem>>, %arg7: memref<32x128xf32, #tpu.memory_space<vmem>>, %arg8: memref<1x128xf32, #tpu.memory_space<vmem>>, %arg9: memref<128x512xbf16, #tpu.memory_space<vmem>>, %arg10: memref<1x512xf32, #tpu.memory_space<vmem>>, %arg11: memref<128x512xbf16, #tpu.memory_space<vmem>>, %arg12: memref<256x512xbf16, #tpu.memory_space<vmem>>, %arg13: memref<1x512xf32, #tpu.memory_space<vmem>>, %arg14: memref<64x56xf32, #tpu.memory_space<vmem>>, %arg15: memref<1x56xf32, #tpu.memory_space<vmem>>, %arg16: memref<56x40xf32, #tpu.memory_space<vmem>>, %arg17: memref<1x40xf32, #tpu.memory_space<vmem>>, %arg18: memref<40x32xf32, #tpu.memory_space<vmem>>, %arg19: memref<1x32xf32, #tpu.memory_space<vmem>>, %arg20: memref<32x128xf32, #tpu.memory_space<vmem>>, %arg21: memref<1x128xf32, #tpu.memory_space<vmem>>, %arg22: memref<128x17xf32, #tpu.memory_space<vmem>>, %arg23: memref<128x17xf32, #tpu.memory_space<vmem>>, %arg24: memref<1x17xf32, #tpu.memory_space<vmem>>, %arg25: memref<17x17xf32, #tpu.memory_space<vmem>>, %arg26: memref<1x17xf32, #tpu.memory_space<vmem>>, %arg27: memref<1x17xf32, #tpu.memory_space<vmem>>) attributes {dimension_semantics = [], scalar_prefetch = 0 : i64, scratch_operands = 0 : i64, tpu.core_type = #tpu.core_type<tc>} {
    %c0 = arith.constant 0 : index
    %c0_0 = arith.constant 0 : index
    %0 = vector.load %arg0[%c0, %c0_0] : memref<32x192xf32, #tpu.memory_space<vmem>>, vector<32x192xf32>
    %c0_1 = arith.constant 0 : index
    %c0_2 = arith.constant 0 : index
    %1 = vector.load %arg1[%c0_1, %c0_2] : memref<192x32xf32, #tpu.memory_space<vmem>>, vector<192x32xf32>
    %cst = arith.constant dense<0.000000e+00> : vector<32x32xf32>
    %2 = tpu.matmul %0, %1, %cst {dimension_numbers = #tpu.dot_dimension_numbers<[1], [0], [0], [1], [0, 0, 1, 1], [], []>} : vector<32x192xf32>, vector<192x32xf32>, vector<32x32xf32> -> vector<32x32xf32>
    %c0_3 = arith.constant 0 : index
    %c0_4 = arith.constant 0 : index
    %3 = vector.load %arg2[%c0_3, %c0_4] : memref<1x32xf32, #tpu.memory_space<vmem>>, vector<1x32xf32>
    %4 = vector.broadcast %3 : vector<1x32xf32> to vector<32x32xf32>
    %5 = arith.addf %2, %4 : vector<32x32xf32>
    %cst_5 = arith.constant 0.000000e+00 : f32
    %6 = vector.broadcast %cst_5 : f32 to vector<32x32xf32>
    %7 = arith.maximumf %5, %6 : vector<32x32xf32>
    %c0_6 = arith.constant 0 : index
    %c0_7 = arith.constant 0 : index
    %8 = vector.load %arg3[%c0_6, %c0_7] : memref<32x64xf32, #tpu.memory_space<vmem>>, vector<32x64xf32>
    %cst_8 = arith.constant dense<0.000000e+00> : vector<32x64xf32>
    %9 = tpu.matmul %7, %8, %cst_8 {dimension_numbers = #tpu.dot_dimension_numbers<[1], [0], [0], [1], [0, 0, 1, 1], [], []>} : vector<32x32xf32>, vector<32x64xf32>, vector<32x64xf32> -> vector<32x64xf32>
    %c0_9 = arith.constant 0 : index
    %c0_10 = arith.constant 0 : index
    %10 = vector.load %arg4[%c0_9, %c0_10] : memref<1x64xf32, #tpu.memory_space<vmem>>, vector<1x64xf32>
    %11 = vector.broadcast %10 : vector<1x64xf32> to vector<32x64xf32>
    %12 = arith.addf %9, %11 : vector<32x64xf32>
    %13 = vector.extract_strided_slice %12 {offsets = [0, 0], sizes = [8, 64], strides = [1, 1]} : vector<32x64xf32> to vector<8x64xf32>
    %14 = vector.extract_strided_slice %12 {offsets = [8, 0], sizes = [8, 64], strides = [1, 1]} : vector<32x64xf32> to vector<8x64xf32>
    %15 = arith.maximumf %13, %14 : vector<8x64xf32>
    %16 = vector.extract_strided_slice %12 {offsets = [16, 0], sizes = [8, 64], strides = [1, 1]} : vector<32x64xf32> to vector<8x64xf32>
    %17 = arith.maximumf %15, %16 : vector<8x64xf32>
    %18 = vector.extract_strided_slice %12 {offsets = [24, 0], sizes = [8, 64], strides = [1, 1]} : vector<32x64xf32> to vector<8x64xf32>
    %19 = arith.maximumf %17, %18 : vector<8x64xf32>
    %20 = vector.extract_strided_slice %19 {offsets = [7, 0], sizes = [1, 64], strides = [1, 1]} : vector<8x64xf32> to vector<1x64xf32>
    %c0_11 = arith.constant 0 : index
    %c0_12 = arith.constant 0 : index
    %21 = vector.load %arg14[%c0_11, %c0_12] : memref<64x56xf32, #tpu.memory_space<vmem>>, vector<64x56xf32>
    %cst_13 = arith.constant dense<0.000000e+00> : vector<1x56xf32>
    %22 = tpu.matmul %20, %21, %cst_13 {dimension_numbers = #tpu.dot_dimension_numbers<[1], [0], [0], [1], [0, 0, 1, 1], [], []>} : vector<1x64xf32>, vector<64x56xf32>, vector<1x56xf32> -> vector<1x56xf32>
    %c0_14 = arith.constant 0 : index
    %c0_15 = arith.constant 0 : index
    %23 = vector.load %arg15[%c0_14, %c0_15] : memref<1x56xf32, #tpu.memory_space<vmem>>, vector<1x56xf32>
    %24 = arith.addf %22, %23 : vector<1x56xf32>
    %cst_16 = arith.constant 0.000000e+00 : f32
    %25 = vector.broadcast %cst_16 : f32 to vector<1x56xf32>
    %26 = arith.maximumf %24, %25 : vector<1x56xf32>
    %c0_17 = arith.constant 0 : index
    %c0_18 = arith.constant 0 : index
    %27 = vector.load %arg16[%c0_17, %c0_18] : memref<56x40xf32, #tpu.memory_space<vmem>>, vector<56x40xf32>
    %cst_19 = arith.constant dense<0.000000e+00> : vector<1x40xf32>
    %28 = tpu.matmul %26, %27, %cst_19 {dimension_numbers = #tpu.dot_dimension_numbers<[1], [0], [0], [1], [0, 0, 1, 1], [], []>} : vector<1x56xf32>, vector<56x40xf32>, vector<1x40xf32> -> vector<1x40xf32>
    %c0_20 = arith.constant 0 : index
    %c0_21 = arith.constant 0 : index
    %29 = vector.load %arg17[%c0_20, %c0_21] : memref<1x40xf32, #tpu.memory_space<vmem>>, vector<1x40xf32>
    %30 = arith.addf %28, %29 : vector<1x40xf32>
    %cst_22 = arith.constant 0.000000e+00 : f32
    %31 = vector.broadcast %cst_22 : f32 to vector<1x40xf32>
    %32 = arith.maximumf %30, %31 : vector<1x40xf32>
    %c0_23 = arith.constant 0 : index
    %c0_24 = arith.constant 0 : index
    %33 = vector.load %arg18[%c0_23, %c0_24] : memref<40x32xf32, #tpu.memory_space<vmem>>, vector<40x32xf32>
    %cst_25 = arith.constant dense<0.000000e+00> : vector<1x32xf32>
    %34 = tpu.matmul %32, %33, %cst_25 {dimension_numbers = #tpu.dot_dimension_numbers<[1], [0], [0], [1], [0, 0, 1, 1], [], []>} : vector<1x40xf32>, vector<40x32xf32>, vector<1x32xf32> -> vector<1x32xf32>
    %c0_26 = arith.constant 0 : index
    %c0_27 = arith.constant 0 : index
    %35 = vector.load %arg19[%c0_26, %c0_27] : memref<1x32xf32, #tpu.memory_space<vmem>>, vector<1x32xf32>
    %36 = arith.addf %34, %35 : vector<1x32xf32>
    %cst_28 = arith.constant 0.000000e+00 : f32
    %37 = vector.broadcast %cst_28 : f32 to vector<1x32xf32>
    %38 = arith.maximumf %36, %37 : vector<1x32xf32>
    %c0_29 = arith.constant 0 : index
    %c0_30 = arith.constant 0 : index
    %39 = vector.load %arg20[%c0_29, %c0_30] : memref<32x128xf32, #tpu.memory_space<vmem>>, vector<32x128xf32>
    %cst_31 = arith.constant dense<0.000000e+00> : vector<1x128xf32>
    %40 = tpu.matmul %38, %39, %cst_31 {dimension_numbers = #tpu.dot_dimension_numbers<[1], [0], [0], [1], [0, 0, 1, 1], [], []>} : vector<1x32xf32>, vector<32x128xf32>, vector<1x128xf32> -> vector<1x128xf32>
    %c0_32 = arith.constant 0 : index
    %c0_33 = arith.constant 0 : index
    %41 = vector.load %arg21[%c0_32, %c0_33] : memref<1x128xf32, #tpu.memory_space<vmem>>, vector<1x128xf32>
    %42 = arith.addf %40, %41 : vector<1x128xf32>
    %c0_34 = arith.constant 0 : index
    %c0_35 = arith.constant 0 : index
    %43 = vector.load %arg5[%c0_34, %c0_35] : memref<64x32xf32, #tpu.memory_space<vmem>>, vector<64x32xf32>
    %cst_36 = arith.constant dense<0.000000e+00> : vector<8x32xf32>
    %44 = tpu.matmul %19, %43, %cst_36 {dimension_numbers = #tpu.dot_dimension_numbers<[1], [0], [0], [1], [0, 0, 1, 1], [], []>} : vector<8x64xf32>, vector<64x32xf32>, vector<8x32xf32> -> vector<8x32xf32>
    %c0_37 = arith.constant 0 : index
    %c0_38 = arith.constant 0 : index
    %45 = vector.load %arg6[%c0_37, %c0_38] : memref<1x32xf32, #tpu.memory_space<vmem>>, vector<1x32xf32>
    %46 = vector.broadcast %45 : vector<1x32xf32> to vector<8x32xf32>
    %47 = arith.addf %44, %46 : vector<8x32xf32>
    %cst_39 = arith.constant 0.000000e+00 : f32
    %48 = vector.broadcast %cst_39 : f32 to vector<8x32xf32>
    %49 = arith.maximumf %47, %48 : vector<8x32xf32>
    %c0_40 = arith.constant 0 : index
    %c0_41 = arith.constant 0 : index
    %50 = vector.load %arg7[%c0_40, %c0_41] : memref<32x128xf32, #tpu.memory_space<vmem>>, vector<32x128xf32>
    %cst_42 = arith.constant dense<0.000000e+00> : vector<8x128xf32>
    %51 = tpu.matmul %49, %50, %cst_42 {dimension_numbers = #tpu.dot_dimension_numbers<[1], [0], [0], [1], [0, 0, 1, 1], [], []>} : vector<8x32xf32>, vector<32x128xf32>, vector<8x128xf32> -> vector<8x128xf32>
    %c0_43 = arith.constant 0 : index
    %c0_44 = arith.constant 0 : index
    %52 = vector.load %arg8[%c0_43, %c0_44] : memref<1x128xf32, #tpu.memory_space<vmem>>, vector<1x128xf32>
    %53 = vector.broadcast %52 : vector<1x128xf32> to vector<8x128xf32>
    %54 = arith.addf %51, %53 : vector<8x128xf32>
    %cst_45 = arith.constant 0.000000e+00 : f32
    %55 = vector.broadcast %cst_45 : f32 to vector<8x128xf32>
    %56 = arith.maximumf %54, %55 : vector<8x128xf32>
    %57 = arith.truncf %56 : vector<8x128xf32> to vector<8x128xbf16>
    %c0_46 = arith.constant 0 : index
    %c0_47 = arith.constant 0 : index
    %58 = vector.load %arg9[%c0_46, %c0_47] : memref<128x512xbf16, #tpu.memory_space<vmem>>, vector<128x512xbf16>
    %cst_48 = arith.constant dense<0.000000e+00> : vector<8x512xf32>
    %59 = tpu.matmul %57, %58, %cst_48 {dimension_numbers = #tpu.dot_dimension_numbers<[1], [0], [0], [1], [0, 0, 1, 1], [], []>} : vector<8x128xbf16>, vector<128x512xbf16>, vector<8x512xf32> -> vector<8x512xf32>
    %c0_49 = arith.constant 0 : index
    %c0_50 = arith.constant 0 : index
    %60 = vector.load %arg10[%c0_49, %c0_50] : memref<1x512xf32, #tpu.memory_space<vmem>>, vector<1x512xf32>
    %61 = vector.broadcast %60 : vector<1x512xf32> to vector<8x512xf32>
    %62 = arith.addf %59, %61 : vector<8x512xf32>
    %cst_51 = arith.constant 0.000000e+00 : f32
    %63 = vector.broadcast %cst_51 : f32 to vector<1x128xf32>
    %64 = vector.extract_strided_slice %62 {offsets = [0, 0], sizes = [1, 512], strides = [1, 1]} : vector<8x512xf32> to vector<1x512xf32>
    %65 = arith.truncf %63 : vector<1x128xf32> to vector<1x128xbf16>
    %c0_52 = arith.constant 0 : index
    %c0_53 = arith.constant 0 : index
    %66 = vector.load %arg11[%c0_52, %c0_53] : memref<128x512xbf16, #tpu.memory_space<vmem>>, vector<128x512xbf16>
    %cst_54 = arith.constant dense<0.000000e+00> : vector<1x512xf32>
    %67 = tpu.matmul %65, %66, %cst_54 {dimension_numbers = #tpu.dot_dimension_numbers<[1], [0], [0], [1], [0, 0, 1, 1], [], []>} : vector<1x128xbf16>, vector<128x512xbf16>, vector<1x512xf32> -> vector<1x512xf32>
    %68 = arith.addf %64, %67 : vector<1x512xf32>
    %69 = arith.negf %68 : vector<1x512xf32>
    %70 = math.exp %69 : vector<1x512xf32>
    %cst_55 = arith.constant 1.000000e+00 : f32
    %71 = vector.broadcast %cst_55 : f32 to vector<1x512xf32>
    %72 = arith.addf %71, %70 : vector<1x512xf32>
    %73 = arith.divf %71, %72 : vector<1x512xf32>
    %74 = vector.extract_strided_slice %73 {offsets = [0, 0], sizes = [1, 128], strides = [1, 1]} : vector<1x512xf32> to vector<1x128xf32>
    %75 = vector.extract_strided_slice %73 {offsets = [0, 128], sizes = [1, 128], strides = [1, 1]} : vector<1x512xf32> to vector<1x128xf32>
    %76 = vector.extract_strided_slice %73 {offsets = [0, 256], sizes = [1, 128], strides = [1, 1]} : vector<1x512xf32> to vector<1x128xf32>
    %cst_56 = arith.constant 2.000000e+00 : f32
    %77 = vector.broadcast %cst_56 : f32 to vector<1x128xf32>
    %78 = arith.mulf %77, %76 : vector<1x128xf32>
    %cst_57 = arith.constant 1.000000e+00 : f32
    %79 = vector.broadcast %cst_57 : f32 to vector<1x128xf32>
    %80 = arith.subf %78, %79 : vector<1x128xf32>
    %81 = vector.extract_strided_slice %73 {offsets = [0, 384], sizes = [1, 128], strides = [1, 1]} : vector<1x512xf32> to vector<1x128xf32>
    %82 = arith.mulf %75, %63 : vector<1x128xf32>
    %83 = arith.mulf %74, %80 : vector<1x128xf32>
    %84 = arith.addf %82, %83 : vector<1x128xf32>
    %85 = math.tanh %84 : vector<1x128xf32>
    %86 = arith.mulf %81, %85 : vector<1x128xf32>
    %87 = tpu.concatenate %86, %63 in 1 : vector<1x128xf32>, vector<1x128xf32> -> vector<1x256xf32>
    %88 = arith.truncf %87 : vector<1x256xf32> to vector<1x256xbf16>
    %c0_58 = arith.constant 0 : index
    %c0_59 = arith.constant 0 : index
    %89 = vector.load %arg12[%c0_58, %c0_59] : memref<256x512xbf16, #tpu.memory_space<vmem>>, vector<256x512xbf16>
    %cst_60 = arith.constant dense<0.000000e+00> : vector<1x512xf32>
    %90 = tpu.matmul %88, %89, %cst_60 {dimension_numbers = #tpu.dot_dimension_numbers<[1], [0], [0], [1], [0, 0, 1, 1], [], []>} : vector<1x256xbf16>, vector<256x512xbf16>, vector<1x512xf32> -> vector<1x512xf32>
    %c0_61 = arith.constant 0 : index
    %c0_62 = arith.constant 0 : index
    %91 = vector.load %arg13[%c0_61, %c0_62] : memref<1x512xf32, #tpu.memory_space<vmem>>, vector<1x512xf32>
    %92 = arith.addf %90, %91 : vector<1x512xf32>
    %93 = arith.negf %92 : vector<1x512xf32>
    %94 = math.exp %93 : vector<1x512xf32>
    %cst_63 = arith.constant 1.000000e+00 : f32
    %95 = vector.broadcast %cst_63 : f32 to vector<1x512xf32>
    %96 = arith.addf %95, %94 : vector<1x512xf32>
    %97 = arith.divf %95, %96 : vector<1x512xf32>
    %98 = vector.extract_strided_slice %97 {offsets = [0, 0], sizes = [1, 128], strides = [1, 1]} : vector<1x512xf32> to vector<1x128xf32>
    %99 = vector.extract_strided_slice %97 {offsets = [0, 128], sizes = [1, 128], strides = [1, 1]} : vector<1x512xf32> to vector<1x128xf32>
    %100 = vector.extract_strided_slice %97 {offsets = [0, 256], sizes = [1, 128], strides = [1, 1]} : vector<1x512xf32> to vector<1x128xf32>
    %cst_64 = arith.constant 2.000000e+00 : f32
    %101 = vector.broadcast %cst_64 : f32 to vector<1x128xf32>
    %102 = arith.mulf %101, %100 : vector<1x128xf32>
    %cst_65 = arith.constant 1.000000e+00 : f32
    %103 = vector.broadcast %cst_65 : f32 to vector<1x128xf32>
    %104 = arith.subf %102, %103 : vector<1x128xf32>
    %105 = vector.extract_strided_slice %97 {offsets = [0, 384], sizes = [1, 128], strides = [1, 1]} : vector<1x512xf32> to vector<1x128xf32>
    %106 = arith.mulf %99, %63 : vector<1x128xf32>
    %107 = arith.mulf %98, %104 : vector<1x128xf32>
    %108 = arith.addf %106, %107 : vector<1x128xf32>
    %109 = math.tanh %108 : vector<1x128xf32>
    %110 = arith.mulf %105, %109 : vector<1x128xf32>
    %111 = vector.extract_strided_slice %62 {offsets = [1, 0], sizes = [1, 512], strides = [1, 1]} : vector<8x512xf32> to vector<1x512xf32>
    %112 = arith.truncf %86 : vector<1x128xf32> to vector<1x128xbf16>
    %c0_66 = arith.constant 0 : index
    %c0_67 = arith.constant 0 : index
    %113 = vector.load %arg11[%c0_66, %c0_67] : memref<128x512xbf16, #tpu.memory_space<vmem>>, vector<128x512xbf16>
    %cst_68 = arith.constant dense<0.000000e+00> : vector<1x512xf32>
    %114 = tpu.matmul %112, %113, %cst_68 {dimension_numbers = #tpu.dot_dimension_numbers<[1], [0], [0], [1], [0, 0, 1, 1], [], []>} : vector<1x128xbf16>, vector<128x512xbf16>, vector<1x512xf32> -> vector<1x512xf32>
    %115 = arith.addf %111, %114 : vector<1x512xf32>
    %116 = arith.negf %115 : vector<1x512xf32>
    %117 = math.exp %116 : vector<1x512xf32>
    %cst_69 = arith.constant 1.000000e+00 : f32
    %118 = vector.broadcast %cst_69 : f32 to vector<1x512xf32>
    %119 = arith.addf %118, %117 : vector<1x512xf32>
    %120 = arith.divf %118, %119 : vector<1x512xf32>
    %121 = vector.extract_strided_slice %120 {offsets = [0, 0], sizes = [1, 128], strides = [1, 1]} : vector<1x512xf32> to vector<1x128xf32>
    %122 = vector.extract_strided_slice %120 {offsets = [0, 128], sizes = [1, 128], strides = [1, 1]} : vector<1x512xf32> to vector<1x128xf32>
    %123 = vector.extract_strided_slice %120 {offsets = [0, 256], sizes = [1, 128], strides = [1, 1]} : vector<1x512xf32> to vector<1x128xf32>
    %cst_70 = arith.constant 2.000000e+00 : f32
    %124 = vector.broadcast %cst_70 : f32 to vector<1x128xf32>
    %125 = arith.mulf %124, %123 : vector<1x128xf32>
    %cst_71 = arith.constant 1.000000e+00 : f32
    %126 = vector.broadcast %cst_71 : f32 to vector<1x128xf32>
    %127 = arith.subf %125, %126 : vector<1x128xf32>
    %128 = vector.extract_strided_slice %120 {offsets = [0, 384], sizes = [1, 128], strides = [1, 1]} : vector<1x512xf32> to vector<1x128xf32>
    %129 = arith.mulf %122, %84 : vector<1x128xf32>
    %130 = arith.mulf %121, %127 : vector<1x128xf32>
    %131 = arith.addf %129, %130 : vector<1x128xf32>
    %132 = math.tanh %131 : vector<1x128xf32>
    %133 = arith.mulf %128, %132 : vector<1x128xf32>
    %134 = tpu.concatenate %133, %110 in 1 : vector<1x128xf32>, vector<1x128xf32> -> vector<1x256xf32>
    %135 = arith.truncf %134 : vector<1x256xf32> to vector<1x256xbf16>
    %c0_72 = arith.constant 0 : index
    %c0_73 = arith.constant 0 : index
    %136 = vector.load %arg12[%c0_72, %c0_73] : memref<256x512xbf16, #tpu.memory_space<vmem>>, vector<256x512xbf16>
    %cst_74 = arith.constant dense<0.000000e+00> : vector<1x512xf32>
    %137 = tpu.matmul %135, %136, %cst_74 {dimension_numbers = #tpu.dot_dimension_numbers<[1], [0], [0], [1], [0, 0, 1, 1], [], []>} : vector<1x256xbf16>, vector<256x512xbf16>, vector<1x512xf32> -> vector<1x512xf32>
    %c0_75 = arith.constant 0 : index
    %c0_76 = arith.constant 0 : index
    %138 = vector.load %arg13[%c0_75, %c0_76] : memref<1x512xf32, #tpu.memory_space<vmem>>, vector<1x512xf32>
    %139 = arith.addf %137, %138 : vector<1x512xf32>
    %140 = arith.negf %139 : vector<1x512xf32>
    %141 = math.exp %140 : vector<1x512xf32>
    %cst_77 = arith.constant 1.000000e+00 : f32
    %142 = vector.broadcast %cst_77 : f32 to vector<1x512xf32>
    %143 = arith.addf %142, %141 : vector<1x512xf32>
    %144 = arith.divf %142, %143 : vector<1x512xf32>
    %145 = vector.extract_strided_slice %144 {offsets = [0, 0], sizes = [1, 128], strides = [1, 1]} : vector<1x512xf32> to vector<1x128xf32>
    %146 = vector.extract_strided_slice %144 {offsets = [0, 128], sizes = [1, 128], strides = [1, 1]} : vector<1x512xf32> to vector<1x128xf32>
    %147 = vector.extract_strided_slice %144 {offsets = [0, 256], sizes = [1, 128], strides = [1, 1]} : vector<1x512xf32> to vector<1x128xf32>
    %cst_78 = arith.constant 2.000000e+00 : f32
    %148 = vector.broadcast %cst_78 : f32 to vector<1x128xf32>
    %149 = arith.mulf %148, %147 : vector<1x128xf32>
    %cst_79 = arith.constant 1.000000e+00 : f32
    %150 = vector.broadcast %cst_79 : f32 to vector<1x128xf32>
    %151 = arith.subf %149, %150 : vector<1x128xf32>
    %152 = vector.extract_strided_slice %144 {offsets = [0, 384], sizes = [1, 128], strides = [1, 1]} : vector<1x512xf32> to vector<1x128xf32>
    %153 = arith.mulf %146, %108 : vector<1x128xf32>
    %154 = arith.mulf %145, %151 : vector<1x128xf32>
    %155 = arith.addf %153, %154 : vector<1x128xf32>
    %156 = math.tanh %155 : vector<1x128xf32>
    %157 = arith.mulf %152, %156 : vector<1x128xf32>
    %158 = vector.extract_strided_slice %62 {offsets = [2, 0], sizes = [1, 512], strides = [1, 1]} : vector<8x512xf32> to vector<1x512xf32>
    %159 = arith.truncf %133 : vector<1x128xf32> to vector<1x128xbf16>
    %c0_80 = arith.constant 0 : index
    %c0_81 = arith.constant 0 : index
    %160 = vector.load %arg11[%c0_80, %c0_81] : memref<128x512xbf16, #tpu.memory_space<vmem>>, vector<128x512xbf16>
    %cst_82 = arith.constant dense<0.000000e+00> : vector<1x512xf32>
    %161 = tpu.matmul %159, %160, %cst_82 {dimension_numbers = #tpu.dot_dimension_numbers<[1], [0], [0], [1], [0, 0, 1, 1], [], []>} : vector<1x128xbf16>, vector<128x512xbf16>, vector<1x512xf32> -> vector<1x512xf32>
    %162 = arith.addf %158, %161 : vector<1x512xf32>
    %163 = arith.negf %162 : vector<1x512xf32>
    %164 = math.exp %163 : vector<1x512xf32>
    %cst_83 = arith.constant 1.000000e+00 : f32
    %165 = vector.broadcast %cst_83 : f32 to vector<1x512xf32>
    %166 = arith.addf %165, %164 : vector<1x512xf32>
    %167 = arith.divf %165, %166 : vector<1x512xf32>
    %168 = vector.extract_strided_slice %167 {offsets = [0, 0], sizes = [1, 128], strides = [1, 1]} : vector<1x512xf32> to vector<1x128xf32>
    %169 = vector.extract_strided_slice %167 {offsets = [0, 128], sizes = [1, 128], strides = [1, 1]} : vector<1x512xf32> to vector<1x128xf32>
    %170 = vector.extract_strided_slice %167 {offsets = [0, 256], sizes = [1, 128], strides = [1, 1]} : vector<1x512xf32> to vector<1x128xf32>
    %cst_84 = arith.constant 2.000000e+00 : f32
    %171 = vector.broadcast %cst_84 : f32 to vector<1x128xf32>
    %172 = arith.mulf %171, %170 : vector<1x128xf32>
    %cst_85 = arith.constant 1.000000e+00 : f32
    %173 = vector.broadcast %cst_85 : f32 to vector<1x128xf32>
    %174 = arith.subf %172, %173 : vector<1x128xf32>
    %175 = vector.extract_strided_slice %167 {offsets = [0, 384], sizes = [1, 128], strides = [1, 1]} : vector<1x512xf32> to vector<1x128xf32>
    %176 = arith.mulf %169, %131 : vector<1x128xf32>
    %177 = arith.mulf %168, %174 : vector<1x128xf32>
    %178 = arith.addf %176, %177 : vector<1x128xf32>
    %179 = math.tanh %178 : vector<1x128xf32>
    %180 = arith.mulf %175, %179 : vector<1x128xf32>
    %181 = tpu.concatenate %180, %157 in 1 : vector<1x128xf32>, vector<1x128xf32> -> vector<1x256xf32>
    %182 = arith.truncf %181 : vector<1x256xf32> to vector<1x256xbf16>
    %c0_86 = arith.constant 0 : index
    %c0_87 = arith.constant 0 : index
    %183 = vector.load %arg12[%c0_86, %c0_87] : memref<256x512xbf16, #tpu.memory_space<vmem>>, vector<256x512xbf16>
    %cst_88 = arith.constant dense<0.000000e+00> : vector<1x512xf32>
    %184 = tpu.matmul %182, %183, %cst_88 {dimension_numbers = #tpu.dot_dimension_numbers<[1], [0], [0], [1], [0, 0, 1, 1], [], []>} : vector<1x256xbf16>, vector<256x512xbf16>, vector<1x512xf32> -> vector<1x512xf32>
    %c0_89 = arith.constant 0 : index
    %c0_90 = arith.constant 0 : index
    %185 = vector.load %arg13[%c0_89, %c0_90] : memref<1x512xf32, #tpu.memory_space<vmem>>, vector<1x512xf32>
    %186 = arith.addf %184, %185 : vector<1x512xf32>
    %187 = arith.negf %186 : vector<1x512xf32>
    %188 = math.exp %187 : vector<1x512xf32>
    %cst_91 = arith.constant 1.000000e+00 : f32
    %189 = vector.broadcast %cst_91 : f32 to vector<1x512xf32>
    %190 = arith.addf %189, %188 : vector<1x512xf32>
    %191 = arith.divf %189, %190 : vector<1x512xf32>
    %192 = vector.extract_strided_slice %191 {offsets = [0, 0], sizes = [1, 128], strides = [1, 1]} : vector<1x512xf32> to vector<1x128xf32>
    %193 = vector.extract_strided_slice %191 {offsets = [0, 128], sizes = [1, 128], strides = [1, 1]} : vector<1x512xf32> to vector<1x128xf32>
    %194 = vector.extract_strided_slice %191 {offsets = [0, 256], sizes = [1, 128], strides = [1, 1]} : vector<1x512xf32> to vector<1x128xf32>
    %cst_92 = arith.constant 2.000000e+00 : f32
    %195 = vector.broadcast %cst_92 : f32 to vector<1x128xf32>
    %196 = arith.mulf %195, %194 : vector<1x128xf32>
    %cst_93 = arith.constant 1.000000e+00 : f32
    %197 = vector.broadcast %cst_93 : f32 to vector<1x128xf32>
    %198 = arith.subf %196, %197 : vector<1x128xf32>
    %199 = vector.extract_strided_slice %191 {offsets = [0, 384], sizes = [1, 128], strides = [1, 1]} : vector<1x512xf32> to vector<1x128xf32>
    %200 = arith.mulf %193, %155 : vector<1x128xf32>
    %201 = arith.mulf %192, %198 : vector<1x128xf32>
    %202 = arith.addf %200, %201 : vector<1x128xf32>
    %203 = math.tanh %202 : vector<1x128xf32>
    %204 = arith.mulf %199, %203 : vector<1x128xf32>
    %205 = vector.extract_strided_slice %62 {offsets = [3, 0], sizes = [1, 512], strides = [1, 1]} : vector<8x512xf32> to vector<1x512xf32>
    %206 = arith.truncf %180 : vector<1x128xf32> to vector<1x128xbf16>
    %c0_94 = arith.constant 0 : index
    %c0_95 = arith.constant 0 : index
    %207 = vector.load %arg11[%c0_94, %c0_95] : memref<128x512xbf16, #tpu.memory_space<vmem>>, vector<128x512xbf16>
    %cst_96 = arith.constant dense<0.000000e+00> : vector<1x512xf32>
    %208 = tpu.matmul %206, %207, %cst_96 {dimension_numbers = #tpu.dot_dimension_numbers<[1], [0], [0], [1], [0, 0, 1, 1], [], []>} : vector<1x128xbf16>, vector<128x512xbf16>, vector<1x512xf32> -> vector<1x512xf32>
    %209 = arith.addf %205, %208 : vector<1x512xf32>
    %210 = arith.negf %209 : vector<1x512xf32>
    %211 = math.exp %210 : vector<1x512xf32>
    %cst_97 = arith.constant 1.000000e+00 : f32
    %212 = vector.broadcast %cst_97 : f32 to vector<1x512xf32>
    %213 = arith.addf %212, %211 : vector<1x512xf32>
    %214 = arith.divf %212, %213 : vector<1x512xf32>
    %215 = vector.extract_strided_slice %214 {offsets = [0, 0], sizes = [1, 128], strides = [1, 1]} : vector<1x512xf32> to vector<1x128xf32>
    %216 = vector.extract_strided_slice %214 {offsets = [0, 128], sizes = [1, 128], strides = [1, 1]} : vector<1x512xf32> to vector<1x128xf32>
    %217 = vector.extract_strided_slice %214 {offsets = [0, 256], sizes = [1, 128], strides = [1, 1]} : vector<1x512xf32> to vector<1x128xf32>
    %cst_98 = arith.constant 2.000000e+00 : f32
    %218 = vector.broadcast %cst_98 : f32 to vector<1x128xf32>
    %219 = arith.mulf %218, %217 : vector<1x128xf32>
    %cst_99 = arith.constant 1.000000e+00 : f32
    %220 = vector.broadcast %cst_99 : f32 to vector<1x128xf32>
    %221 = arith.subf %219, %220 : vector<1x128xf32>
    %222 = vector.extract_strided_slice %214 {offsets = [0, 384], sizes = [1, 128], strides = [1, 1]} : vector<1x512xf32> to vector<1x128xf32>
    %223 = arith.mulf %216, %178 : vector<1x128xf32>
    %224 = arith.mulf %215, %221 : vector<1x128xf32>
    %225 = arith.addf %223, %224 : vector<1x128xf32>
    %226 = math.tanh %225 : vector<1x128xf32>
    %227 = arith.mulf %222, %226 : vector<1x128xf32>
    %228 = tpu.concatenate %227, %204 in 1 : vector<1x128xf32>, vector<1x128xf32> -> vector<1x256xf32>
    %229 = arith.truncf %228 : vector<1x256xf32> to vector<1x256xbf16>
    %c0_100 = arith.constant 0 : index
    %c0_101 = arith.constant 0 : index
    %230 = vector.load %arg12[%c0_100, %c0_101] : memref<256x512xbf16, #tpu.memory_space<vmem>>, vector<256x512xbf16>
    %cst_102 = arith.constant dense<0.000000e+00> : vector<1x512xf32>
    %231 = tpu.matmul %229, %230, %cst_102 {dimension_numbers = #tpu.dot_dimension_numbers<[1], [0], [0], [1], [0, 0, 1, 1], [], []>} : vector<1x256xbf16>, vector<256x512xbf16>, vector<1x512xf32> -> vector<1x512xf32>
    %c0_103 = arith.constant 0 : index
    %c0_104 = arith.constant 0 : index
    %232 = vector.load %arg13[%c0_103, %c0_104] : memref<1x512xf32, #tpu.memory_space<vmem>>, vector<1x512xf32>
    %233 = arith.addf %231, %232 : vector<1x512xf32>
    %234 = arith.negf %233 : vector<1x512xf32>
    %235 = math.exp %234 : vector<1x512xf32>
    %cst_105 = arith.constant 1.000000e+00 : f32
    %236 = vector.broadcast %cst_105 : f32 to vector<1x512xf32>
    %237 = arith.addf %236, %235 : vector<1x512xf32>
    %238 = arith.divf %236, %237 : vector<1x512xf32>
    %239 = vector.extract_strided_slice %238 {offsets = [0, 0], sizes = [1, 128], strides = [1, 1]} : vector<1x512xf32> to vector<1x128xf32>
    %240 = vector.extract_strided_slice %238 {offsets = [0, 128], sizes = [1, 128], strides = [1, 1]} : vector<1x512xf32> to vector<1x128xf32>
    %241 = vector.extract_strided_slice %238 {offsets = [0, 256], sizes = [1, 128], strides = [1, 1]} : vector<1x512xf32> to vector<1x128xf32>
    %cst_106 = arith.constant 2.000000e+00 : f32
    %242 = vector.broadcast %cst_106 : f32 to vector<1x128xf32>
    %243 = arith.mulf %242, %241 : vector<1x128xf32>
    %cst_107 = arith.constant 1.000000e+00 : f32
    %244 = vector.broadcast %cst_107 : f32 to vector<1x128xf32>
    %245 = arith.subf %243, %244 : vector<1x128xf32>
    %246 = vector.extract_strided_slice %238 {offsets = [0, 384], sizes = [1, 128], strides = [1, 1]} : vector<1x512xf32> to vector<1x128xf32>
    %247 = arith.mulf %240, %202 : vector<1x128xf32>
    %248 = arith.mulf %239, %245 : vector<1x128xf32>
    %249 = arith.addf %247, %248 : vector<1x128xf32>
    %250 = math.tanh %249 : vector<1x128xf32>
    %251 = arith.mulf %246, %250 : vector<1x128xf32>
    %252 = vector.extract_strided_slice %62 {offsets = [4, 0], sizes = [1, 512], strides = [1, 1]} : vector<8x512xf32> to vector<1x512xf32>
    %253 = arith.truncf %227 : vector<1x128xf32> to vector<1x128xbf16>
    %c0_108 = arith.constant 0 : index
    %c0_109 = arith.constant 0 : index
    %254 = vector.load %arg11[%c0_108, %c0_109] : memref<128x512xbf16, #tpu.memory_space<vmem>>, vector<128x512xbf16>
    %cst_110 = arith.constant dense<0.000000e+00> : vector<1x512xf32>
    %255 = tpu.matmul %253, %254, %cst_110 {dimension_numbers = #tpu.dot_dimension_numbers<[1], [0], [0], [1], [0, 0, 1, 1], [], []>} : vector<1x128xbf16>, vector<128x512xbf16>, vector<1x512xf32> -> vector<1x512xf32>
    %256 = arith.addf %252, %255 : vector<1x512xf32>
    %257 = arith.negf %256 : vector<1x512xf32>
    %258 = math.exp %257 : vector<1x512xf32>
    %cst_111 = arith.constant 1.000000e+00 : f32
    %259 = vector.broadcast %cst_111 : f32 to vector<1x512xf32>
    %260 = arith.addf %259, %258 : vector<1x512xf32>
    %261 = arith.divf %259, %260 : vector<1x512xf32>
    %262 = vector.extract_strided_slice %261 {offsets = [0, 0], sizes = [1, 128], strides = [1, 1]} : vector<1x512xf32> to vector<1x128xf32>
    %263 = vector.extract_strided_slice %261 {offsets = [0, 128], sizes = [1, 128], strides = [1, 1]} : vector<1x512xf32> to vector<1x128xf32>
    %264 = vector.extract_strided_slice %261 {offsets = [0, 256], sizes = [1, 128], strides = [1, 1]} : vector<1x512xf32> to vector<1x128xf32>
    %cst_112 = arith.constant 2.000000e+00 : f32
    %265 = vector.broadcast %cst_112 : f32 to vector<1x128xf32>
    %266 = arith.mulf %265, %264 : vector<1x128xf32>
    %cst_113 = arith.constant 1.000000e+00 : f32
    %267 = vector.broadcast %cst_113 : f32 to vector<1x128xf32>
    %268 = arith.subf %266, %267 : vector<1x128xf32>
    %269 = vector.extract_strided_slice %261 {offsets = [0, 384], sizes = [1, 128], strides = [1, 1]} : vector<1x512xf32> to vector<1x128xf32>
    %270 = arith.mulf %263, %225 : vector<1x128xf32>
    %271 = arith.mulf %262, %268 : vector<1x128xf32>
    %272 = arith.addf %270, %271 : vector<1x128xf32>
    %273 = math.tanh %272 : vector<1x128xf32>
    %274 = arith.mulf %269, %273 : vector<1x128xf32>
    %275 = tpu.concatenate %274, %251 in 1 : vector<1x128xf32>, vector<1x128xf32> -> vector<1x256xf32>
    %276 = arith.truncf %275 : vector<1x256xf32> to vector<1x256xbf16>
    %c0_114 = arith.constant 0 : index
    %c0_115 = arith.constant 0 : index
    %277 = vector.load %arg12[%c0_114, %c0_115] : memref<256x512xbf16, #tpu.memory_space<vmem>>, vector<256x512xbf16>
    %cst_116 = arith.constant dense<0.000000e+00> : vector<1x512xf32>
    %278 = tpu.matmul %276, %277, %cst_116 {dimension_numbers = #tpu.dot_dimension_numbers<[1], [0], [0], [1], [0, 0, 1, 1], [], []>} : vector<1x256xbf16>, vector<256x512xbf16>, vector<1x512xf32> -> vector<1x512xf32>
    %c0_117 = arith.constant 0 : index
    %c0_118 = arith.constant 0 : index
    %279 = vector.load %arg13[%c0_117, %c0_118] : memref<1x512xf32, #tpu.memory_space<vmem>>, vector<1x512xf32>
    %280 = arith.addf %278, %279 : vector<1x512xf32>
    %281 = arith.negf %280 : vector<1x512xf32>
    %282 = math.exp %281 : vector<1x512xf32>
    %cst_119 = arith.constant 1.000000e+00 : f32
    %283 = vector.broadcast %cst_119 : f32 to vector<1x512xf32>
    %284 = arith.addf %283, %282 : vector<1x512xf32>
    %285 = arith.divf %283, %284 : vector<1x512xf32>
    %286 = vector.extract_strided_slice %285 {offsets = [0, 0], sizes = [1, 128], strides = [1, 1]} : vector<1x512xf32> to vector<1x128xf32>
    %287 = vector.extract_strided_slice %285 {offsets = [0, 128], sizes = [1, 128], strides = [1, 1]} : vector<1x512xf32> to vector<1x128xf32>
    %288 = vector.extract_strided_slice %285 {offsets = [0, 256], sizes = [1, 128], strides = [1, 1]} : vector<1x512xf32> to vector<1x128xf32>
    %cst_120 = arith.constant 2.000000e+00 : f32
    %289 = vector.broadcast %cst_120 : f32 to vector<1x128xf32>
    %290 = arith.mulf %289, %288 : vector<1x128xf32>
    %cst_121 = arith.constant 1.000000e+00 : f32
    %291 = vector.broadcast %cst_121 : f32 to vector<1x128xf32>
    %292 = arith.subf %290, %291 : vector<1x128xf32>
    %293 = vector.extract_strided_slice %285 {offsets = [0, 384], sizes = [1, 128], strides = [1, 1]} : vector<1x512xf32> to vector<1x128xf32>
    %294 = arith.mulf %287, %249 : vector<1x128xf32>
    %295 = arith.mulf %286, %292 : vector<1x128xf32>
    %296 = arith.addf %294, %295 : vector<1x128xf32>
    %297 = math.tanh %296 : vector<1x128xf32>
    %298 = arith.mulf %293, %297 : vector<1x128xf32>
    %299 = vector.extract_strided_slice %62 {offsets = [5, 0], sizes = [1, 512], strides = [1, 1]} : vector<8x512xf32> to vector<1x512xf32>
    %300 = arith.truncf %274 : vector<1x128xf32> to vector<1x128xbf16>
    %c0_122 = arith.constant 0 : index
    %c0_123 = arith.constant 0 : index
    %301 = vector.load %arg11[%c0_122, %c0_123] : memref<128x512xbf16, #tpu.memory_space<vmem>>, vector<128x512xbf16>
    %cst_124 = arith.constant dense<0.000000e+00> : vector<1x512xf32>
    %302 = tpu.matmul %300, %301, %cst_124 {dimension_numbers = #tpu.dot_dimension_numbers<[1], [0], [0], [1], [0, 0, 1, 1], [], []>} : vector<1x128xbf16>, vector<128x512xbf16>, vector<1x512xf32> -> vector<1x512xf32>
    %303 = arith.addf %299, %302 : vector<1x512xf32>
    %304 = arith.negf %303 : vector<1x512xf32>
    %305 = math.exp %304 : vector<1x512xf32>
    %cst_125 = arith.constant 1.000000e+00 : f32
    %306 = vector.broadcast %cst_125 : f32 to vector<1x512xf32>
    %307 = arith.addf %306, %305 : vector<1x512xf32>
    %308 = arith.divf %306, %307 : vector<1x512xf32>
    %309 = vector.extract_strided_slice %308 {offsets = [0, 0], sizes = [1, 128], strides = [1, 1]} : vector<1x512xf32> to vector<1x128xf32>
    %310 = vector.extract_strided_slice %308 {offsets = [0, 128], sizes = [1, 128], strides = [1, 1]} : vector<1x512xf32> to vector<1x128xf32>
    %311 = vector.extract_strided_slice %308 {offsets = [0, 256], sizes = [1, 128], strides = [1, 1]} : vector<1x512xf32> to vector<1x128xf32>
    %cst_126 = arith.constant 2.000000e+00 : f32
    %312 = vector.broadcast %cst_126 : f32 to vector<1x128xf32>
    %313 = arith.mulf %312, %311 : vector<1x128xf32>
    %cst_127 = arith.constant 1.000000e+00 : f32
    %314 = vector.broadcast %cst_127 : f32 to vector<1x128xf32>
    %315 = arith.subf %313, %314 : vector<1x128xf32>
    %316 = vector.extract_strided_slice %308 {offsets = [0, 384], sizes = [1, 128], strides = [1, 1]} : vector<1x512xf32> to vector<1x128xf32>
    %317 = arith.mulf %310, %272 : vector<1x128xf32>
    %318 = arith.mulf %309, %315 : vector<1x128xf32>
    %319 = arith.addf %317, %318 : vector<1x128xf32>
    %320 = math.tanh %319 : vector<1x128xf32>
    %321 = arith.mulf %316, %320 : vector<1x128xf32>
    %322 = tpu.concatenate %321, %298 in 1 : vector<1x128xf32>, vector<1x128xf32> -> vector<1x256xf32>
    %323 = arith.truncf %322 : vector<1x256xf32> to vector<1x256xbf16>
    %c0_128 = arith.constant 0 : index
    %c0_129 = arith.constant 0 : index
    %324 = vector.load %arg12[%c0_128, %c0_129] : memref<256x512xbf16, #tpu.memory_space<vmem>>, vector<256x512xbf16>
    %cst_130 = arith.constant dense<0.000000e+00> : vector<1x512xf32>
    %325 = tpu.matmul %323, %324, %cst_130 {dimension_numbers = #tpu.dot_dimension_numbers<[1], [0], [0], [1], [0, 0, 1, 1], [], []>} : vector<1x256xbf16>, vector<256x512xbf16>, vector<1x512xf32> -> vector<1x512xf32>
    %c0_131 = arith.constant 0 : index
    %c0_132 = arith.constant 0 : index
    %326 = vector.load %arg13[%c0_131, %c0_132] : memref<1x512xf32, #tpu.memory_space<vmem>>, vector<1x512xf32>
    %327 = arith.addf %325, %326 : vector<1x512xf32>
    %328 = arith.negf %327 : vector<1x512xf32>
    %329 = math.exp %328 : vector<1x512xf32>
    %cst_133 = arith.constant 1.000000e+00 : f32
    %330 = vector.broadcast %cst_133 : f32 to vector<1x512xf32>
    %331 = arith.addf %330, %329 : vector<1x512xf32>
    %332 = arith.divf %330, %331 : vector<1x512xf32>
    %333 = vector.extract_strided_slice %332 {offsets = [0, 0], sizes = [1, 128], strides = [1, 1]} : vector<1x512xf32> to vector<1x128xf32>
    %334 = vector.extract_strided_slice %332 {offsets = [0, 128], sizes = [1, 128], strides = [1, 1]} : vector<1x512xf32> to vector<1x128xf32>
    %335 = vector.extract_strided_slice %332 {offsets = [0, 256], sizes = [1, 128], strides = [1, 1]} : vector<1x512xf32> to vector<1x128xf32>
    %cst_134 = arith.constant 2.000000e+00 : f32
    %336 = vector.broadcast %cst_134 : f32 to vector<1x128xf32>
    %337 = arith.mulf %336, %335 : vector<1x128xf32>
    %cst_135 = arith.constant 1.000000e+00 : f32
    %338 = vector.broadcast %cst_135 : f32 to vector<1x128xf32>
    %339 = arith.subf %337, %338 : vector<1x128xf32>
    %340 = vector.extract_strided_slice %332 {offsets = [0, 384], sizes = [1, 128], strides = [1, 1]} : vector<1x512xf32> to vector<1x128xf32>
    %341 = arith.mulf %334, %296 : vector<1x128xf32>
    %342 = arith.mulf %333, %339 : vector<1x128xf32>
    %343 = arith.addf %341, %342 : vector<1x128xf32>
    %344 = math.tanh %343 : vector<1x128xf32>
    %345 = arith.mulf %340, %344 : vector<1x128xf32>
    %346 = vector.extract_strided_slice %62 {offsets = [6, 0], sizes = [1, 512], strides = [1, 1]} : vector<8x512xf32> to vector<1x512xf32>
    %347 = arith.truncf %321 : vector<1x128xf32> to vector<1x128xbf16>
    %c0_136 = arith.constant 0 : index
    %c0_137 = arith.constant 0 : index
    %348 = vector.load %arg11[%c0_136, %c0_137] : memref<128x512xbf16, #tpu.memory_space<vmem>>, vector<128x512xbf16>
    %cst_138 = arith.constant dense<0.000000e+00> : vector<1x512xf32>
    %349 = tpu.matmul %347, %348, %cst_138 {dimension_numbers = #tpu.dot_dimension_numbers<[1], [0], [0], [1], [0, 0, 1, 1], [], []>} : vector<1x128xbf16>, vector<128x512xbf16>, vector<1x512xf32> -> vector<1x512xf32>
    %350 = arith.addf %346, %349 : vector<1x512xf32>
    %351 = arith.negf %350 : vector<1x512xf32>
    %352 = math.exp %351 : vector<1x512xf32>
    %cst_139 = arith.constant 1.000000e+00 : f32
    %353 = vector.broadcast %cst_139 : f32 to vector<1x512xf32>
    %354 = arith.addf %353, %352 : vector<1x512xf32>
    %355 = arith.divf %353, %354 : vector<1x512xf32>
    %356 = vector.extract_strided_slice %355 {offsets = [0, 0], sizes = [1, 128], strides = [1, 1]} : vector<1x512xf32> to vector<1x128xf32>
    %357 = vector.extract_strided_slice %355 {offsets = [0, 128], sizes = [1, 128], strides = [1, 1]} : vector<1x512xf32> to vector<1x128xf32>
    %358 = vector.extract_strided_slice %355 {offsets = [0, 256], sizes = [1, 128], strides = [1, 1]} : vector<1x512xf32> to vector<1x128xf32>
    %cst_140 = arith.constant 2.000000e+00 : f32
    %359 = vector.broadcast %cst_140 : f32 to vector<1x128xf32>
    %360 = arith.mulf %359, %358 : vector<1x128xf32>
    %cst_141 = arith.constant 1.000000e+00 : f32
    %361 = vector.broadcast %cst_141 : f32 to vector<1x128xf32>
    %362 = arith.subf %360, %361 : vector<1x128xf32>
    %363 = vector.extract_strided_slice %355 {offsets = [0, 384], sizes = [1, 128], strides = [1, 1]} : vector<1x512xf32> to vector<1x128xf32>
    %364 = arith.mulf %357, %319 : vector<1x128xf32>
    %365 = arith.mulf %356, %362 : vector<1x128xf32>
    %366 = arith.addf %364, %365 : vector<1x128xf32>
    %367 = math.tanh %366 : vector<1x128xf32>
    %368 = arith.mulf %363, %367 : vector<1x128xf32>
    %369 = tpu.concatenate %368, %345 in 1 : vector<1x128xf32>, vector<1x128xf32> -> vector<1x256xf32>
    %370 = arith.truncf %369 : vector<1x256xf32> to vector<1x256xbf16>
    %c0_142 = arith.constant 0 : index
    %c0_143 = arith.constant 0 : index
    %371 = vector.load %arg12[%c0_142, %c0_143] : memref<256x512xbf16, #tpu.memory_space<vmem>>, vector<256x512xbf16>
    %cst_144 = arith.constant dense<0.000000e+00> : vector<1x512xf32>
    %372 = tpu.matmul %370, %371, %cst_144 {dimension_numbers = #tpu.dot_dimension_numbers<[1], [0], [0], [1], [0, 0, 1, 1], [], []>} : vector<1x256xbf16>, vector<256x512xbf16>, vector<1x512xf32> -> vector<1x512xf32>
    %c0_145 = arith.constant 0 : index
    %c0_146 = arith.constant 0 : index
    %373 = vector.load %arg13[%c0_145, %c0_146] : memref<1x512xf32, #tpu.memory_space<vmem>>, vector<1x512xf32>
    %374 = arith.addf %372, %373 : vector<1x512xf32>
    %375 = arith.negf %374 : vector<1x512xf32>
    %376 = math.exp %375 : vector<1x512xf32>
    %cst_147 = arith.constant 1.000000e+00 : f32
    %377 = vector.broadcast %cst_147 : f32 to vector<1x512xf32>
    %378 = arith.addf %377, %376 : vector<1x512xf32>
    %379 = arith.divf %377, %378 : vector<1x512xf32>
    %380 = vector.extract_strided_slice %379 {offsets = [0, 0], sizes = [1, 128], strides = [1, 1]} : vector<1x512xf32> to vector<1x128xf32>
    %381 = vector.extract_strided_slice %379 {offsets = [0, 128], sizes = [1, 128], strides = [1, 1]} : vector<1x512xf32> to vector<1x128xf32>
    %382 = vector.extract_strided_slice %379 {offsets = [0, 256], sizes = [1, 128], strides = [1, 1]} : vector<1x512xf32> to vector<1x128xf32>
    %cst_148 = arith.constant 2.000000e+00 : f32
    %383 = vector.broadcast %cst_148 : f32 to vector<1x128xf32>
    %384 = arith.mulf %383, %382 : vector<1x128xf32>
    %cst_149 = arith.constant 1.000000e+00 : f32
    %385 = vector.broadcast %cst_149 : f32 to vector<1x128xf32>
    %386 = arith.subf %384, %385 : vector<1x128xf32>
    %387 = vector.extract_strided_slice %379 {offsets = [0, 384], sizes = [1, 128], strides = [1, 1]} : vector<1x512xf32> to vector<1x128xf32>
    %388 = arith.mulf %381, %343 : vector<1x128xf32>
    %389 = arith.mulf %380, %386 : vector<1x128xf32>
    %390 = arith.addf %388, %389 : vector<1x128xf32>
    %391 = math.tanh %390 : vector<1x128xf32>
    %392 = arith.mulf %387, %391 : vector<1x128xf32>
    %393 = vector.extract_strided_slice %62 {offsets = [7, 0], sizes = [1, 512], strides = [1, 1]} : vector<8x512xf32> to vector<1x512xf32>
    %394 = arith.truncf %368 : vector<1x128xf32> to vector<1x128xbf16>
    %c0_150 = arith.constant 0 : index
    %c0_151 = arith.constant 0 : index
    %395 = vector.load %arg11[%c0_150, %c0_151] : memref<128x512xbf16, #tpu.memory_space<vmem>>, vector<128x512xbf16>
    %cst_152 = arith.constant dense<0.000000e+00> : vector<1x512xf32>
    %396 = tpu.matmul %394, %395, %cst_152 {dimension_numbers = #tpu.dot_dimension_numbers<[1], [0], [0], [1], [0, 0, 1, 1], [], []>} : vector<1x128xbf16>, vector<128x512xbf16>, vector<1x512xf32> -> vector<1x512xf32>
    %397 = arith.addf %393, %396 : vector<1x512xf32>
    %398 = arith.negf %397 : vector<1x512xf32>
    %399 = math.exp %398 : vector<1x512xf32>
    %cst_153 = arith.constant 1.000000e+00 : f32
    %400 = vector.broadcast %cst_153 : f32 to vector<1x512xf32>
    %401 = arith.addf %400, %399 : vector<1x512xf32>
    %402 = arith.divf %400, %401 : vector<1x512xf32>
    %403 = vector.extract_strided_slice %402 {offsets = [0, 0], sizes = [1, 128], strides = [1, 1]} : vector<1x512xf32> to vector<1x128xf32>
    %404 = vector.extract_strided_slice %402 {offsets = [0, 128], sizes = [1, 128], strides = [1, 1]} : vector<1x512xf32> to vector<1x128xf32>
    %405 = vector.extract_strided_slice %402 {offsets = [0, 256], sizes = [1, 128], strides = [1, 1]} : vector<1x512xf32> to vector<1x128xf32>
    %cst_154 = arith.constant 2.000000e+00 : f32
    %406 = vector.broadcast %cst_154 : f32 to vector<1x128xf32>
    %407 = arith.mulf %406, %405 : vector<1x128xf32>
    %cst_155 = arith.constant 1.000000e+00 : f32
    %408 = vector.broadcast %cst_155 : f32 to vector<1x128xf32>
    %409 = arith.subf %407, %408 : vector<1x128xf32>
    %410 = vector.extract_strided_slice %402 {offsets = [0, 384], sizes = [1, 128], strides = [1, 1]} : vector<1x512xf32> to vector<1x128xf32>
    %411 = arith.mulf %404, %366 : vector<1x128xf32>
    %412 = arith.mulf %403, %409 : vector<1x128xf32>
    %413 = arith.addf %411, %412 : vector<1x128xf32>
    %414 = math.tanh %413 : vector<1x128xf32>
    %415 = arith.mulf %410, %414 : vector<1x128xf32>
    %416 = tpu.concatenate %415, %392 in 1 : vector<1x128xf32>, vector<1x128xf32> -> vector<1x256xf32>
    %417 = arith.truncf %416 : vector<1x256xf32> to vector<1x256xbf16>
    %c0_156 = arith.constant 0 : index
    %c0_157 = arith.constant 0 : index
    %418 = vector.load %arg12[%c0_156, %c0_157] : memref<256x512xbf16, #tpu.memory_space<vmem>>, vector<256x512xbf16>
    %cst_158 = arith.constant dense<0.000000e+00> : vector<1x512xf32>
    %419 = tpu.matmul %417, %418, %cst_158 {dimension_numbers = #tpu.dot_dimension_numbers<[1], [0], [0], [1], [0, 0, 1, 1], [], []>} : vector<1x256xbf16>, vector<256x512xbf16>, vector<1x512xf32> -> vector<1x512xf32>
    %c0_159 = arith.constant 0 : index
    %c0_160 = arith.constant 0 : index
    %420 = vector.load %arg13[%c0_159, %c0_160] : memref<1x512xf32, #tpu.memory_space<vmem>>, vector<1x512xf32>
    %421 = arith.addf %419, %420 : vector<1x512xf32>
    %422 = arith.negf %421 : vector<1x512xf32>
    %423 = math.exp %422 : vector<1x512xf32>
    %cst_161 = arith.constant 1.000000e+00 : f32
    %424 = vector.broadcast %cst_161 : f32 to vector<1x512xf32>
    %425 = arith.addf %424, %423 : vector<1x512xf32>
    %426 = arith.divf %424, %425 : vector<1x512xf32>
    %427 = vector.extract_strided_slice %426 {offsets = [0, 0], sizes = [1, 128], strides = [1, 1]} : vector<1x512xf32> to vector<1x128xf32>
    %428 = vector.extract_strided_slice %426 {offsets = [0, 128], sizes = [1, 128], strides = [1, 1]} : vector<1x512xf32> to vector<1x128xf32>
    %429 = vector.extract_strided_slice %426 {offsets = [0, 256], sizes = [1, 128], strides = [1, 1]} : vector<1x512xf32> to vector<1x128xf32>
    %cst_162 = arith.constant 2.000000e+00 : f32
    %430 = vector.broadcast %cst_162 : f32 to vector<1x128xf32>
    %431 = arith.mulf %430, %429 : vector<1x128xf32>
    %cst_163 = arith.constant 1.000000e+00 : f32
    %432 = vector.broadcast %cst_163 : f32 to vector<1x128xf32>
    %433 = arith.subf %431, %432 : vector<1x128xf32>
    %434 = vector.extract_strided_slice %426 {offsets = [0, 384], sizes = [1, 128], strides = [1, 1]} : vector<1x512xf32> to vector<1x128xf32>
    %435 = arith.mulf %428, %390 : vector<1x128xf32>
    %436 = arith.mulf %427, %433 : vector<1x128xf32>
    %437 = arith.addf %435, %436 : vector<1x128xf32>
    %438 = math.tanh %437 : vector<1x128xf32>
    %439 = arith.mulf %434, %438 : vector<1x128xf32>
    %cst_164 = arith.constant 0.000000e+00 : f32
    %440 = vector.broadcast %cst_164 : f32 to vector<1x128xf32>
    %441 = arith.maximumf %439, %440 : vector<1x128xf32>
    %cst_165 = arith.constant 0.000000e+00 : f32
    %442 = vector.broadcast %cst_165 : f32 to vector<1x128xf32>
    %443 = arith.maximumf %42, %442 : vector<1x128xf32>
    %c0_166 = arith.constant 0 : index
    %c0_167 = arith.constant 0 : index
    %444 = vector.load %arg22[%c0_166, %c0_167] : memref<128x17xf32, #tpu.memory_space<vmem>>, vector<128x17xf32>
    %cst_168 = arith.constant dense<0.000000e+00> : vector<1x17xf32>
    %445 = tpu.matmul %441, %444, %cst_168 {dimension_numbers = #tpu.dot_dimension_numbers<[1], [0], [0], [1], [0, 0, 1, 1], [], []>} : vector<1x128xf32>, vector<128x17xf32>, vector<1x17xf32> -> vector<1x17xf32>
    %c0_169 = arith.constant 0 : index
    %c0_170 = arith.constant 0 : index
    %446 = vector.load %arg23[%c0_169, %c0_170] : memref<128x17xf32, #tpu.memory_space<vmem>>, vector<128x17xf32>
    %cst_171 = arith.constant dense<0.000000e+00> : vector<1x17xf32>
    %447 = tpu.matmul %443, %446, %cst_171 {dimension_numbers = #tpu.dot_dimension_numbers<[1], [0], [0], [1], [0, 0, 1, 1], [], []>} : vector<1x128xf32>, vector<128x17xf32>, vector<1x17xf32> -> vector<1x17xf32>
    %448 = arith.addf %445, %447 : vector<1x17xf32>
    %c0_172 = arith.constant 0 : index
    %c0_173 = arith.constant 0 : index
    %449 = vector.load %arg24[%c0_172, %c0_173] : memref<1x17xf32, #tpu.memory_space<vmem>>, vector<1x17xf32>
    %450 = arith.addf %448, %449 : vector<1x17xf32>
    %cst_174 = arith.constant 0.000000e+00 : f32
    %451 = vector.broadcast %cst_174 : f32 to vector<1x17xf32>
    %452 = arith.maximumf %450, %451 : vector<1x17xf32>
    %c0_175 = arith.constant 0 : index
    %c0_176 = arith.constant 0 : index
    %453 = vector.load %arg25[%c0_175, %c0_176] : memref<17x17xf32, #tpu.memory_space<vmem>>, vector<17x17xf32>
    %cst_177 = arith.constant dense<0.000000e+00> : vector<1x17xf32>
    %454 = tpu.matmul %452, %453, %cst_177 {dimension_numbers = #tpu.dot_dimension_numbers<[1], [0], [0], [1], [0, 0, 1, 1], [], []>} : vector<1x17xf32>, vector<17x17xf32>, vector<1x17xf32> -> vector<1x17xf32>
    %c0_178 = arith.constant 0 : index
    %c0_179 = arith.constant 0 : index
    %455 = vector.load %arg26[%c0_178, %c0_179] : memref<1x17xf32, #tpu.memory_space<vmem>>, vector<1x17xf32>
    %456 = arith.addf %454, %455 : vector<1x17xf32>
    %c0_180 = arith.constant 0 : index
    %c0_181 = arith.constant 0 : index
    %457 = vector.load %arg27[%c0_180, %c0_181] : memref<1x17xf32, #tpu.memory_space<vmem>>, vector<1x17xf32>
    tpu.vector_store %arg27[%c0_180, %c0_181], %456 {strides = array<i32>} : memref<1x17xf32, #tpu.memory_space<vmem>>, vector<1x17xf32>,
    return
  }
}

</mosaic_0001>

<llo_original>
// kernel: tpu_custom_call.1
$region0: #{tpu_custom_call.1}
  #allocation0 [shape = 'u32[]', space=smem, size = 0x4, offset = 0x4, fixed_abs, tag = 'smem constant byte address 0x4 - core index']
  #allocation1 [shape = 'u32[144,128]{1,0:T(1,128)}', space=vmem, size = 0x12000, scoped, tag = 'internal scratch']
  %s0 = inlined_call_operand.vmem [shape: f32[32,192], index: 0, kind: input, shape index: {}]
  %s1 = inlined_call_operand.vmem [shape: f32[192,32], index: 1, kind: input, shape index: {}]
  %s2 = inlined_call_operand.hbm [shape: f32[1,32], index: 2, kind: input, shape index: {}]
  %s3 = inlined_call_operand.hbm [shape: f32[32,64], index: 3, kind: input, shape index: {}]
  %s4 = inlined_call_operand.hbm [shape: f32[1,64], index: 4, kind: input, shape index: {}]
  %s5 = inlined_call_operand.vmem [shape: f32[64,32], index: 5, kind: input, shape index: {}]
  %s6 = inlined_call_operand.hbm [shape: f32[1,32], index: 6, kind: input, shape index: {}]
  %s7 = inlined_call_operand.hbm [shape: f32[32,128], index: 7, kind: input, shape index: {}]
  %s8 = inlined_call_operand.hbm [shape: f32[1,128], index: 8, kind: input, shape index: {}]
  %s9 = inlined_call_operand.vmem [shape: bf16[128,512], index: 9, kind: input, shape index: {}]
  %s10 = inlined_call_operand.hbm [shape: f32[1,512], index: 10, kind: input, shape index: {}]
  %s11 = inlined_call_operand.hbm [shape: bf16[128,512], index: 11, kind: input, shape index: {}]
  %s12 = inlined_call_operand.vmem [shape: bf16[256,512], index: 12, kind: input, shape index: {}]
  %s13 = inlined_call_operand.hbm [shape: f32[1,512], index: 13, kind: input, shape index: {}]
  %s14 = inlined_call_operand.vmem [shape: f32[64,56], index: 14, kind: input, shape index: {}]
  %s15 = inlined_call_operand.hbm [shape: f32[1,56], index: 15, kind: input, shape index: {}]
  %s16 = inlined_call_operand.vmem [shape: f32[56,40], index: 16, kind: input, shape index: {}]
  %s17 = inlined_call_operand.hbm [shape: f32[1,40], index: 17, kind: input, shape index: {}]
  %s18 = inlined_call_operand.vmem [shape: f32[40,32], index: 18, kind: input, shape index: {}]
  %s19 = inlined_call_operand.hbm [shape: f32[1,32], index: 19, kind: input, shape index: {}]
  %s20 = inlined_call_operand.hbm [shape: f32[32,128], index: 20, kind: input, shape index: {}]
  %s21 = inlined_call_operand.hbm [shape: f32[1,128], index: 21, kind: input, shape index: {}]
  %s22 = inlined_call_operand.vmem [shape: f32[128,17], index: 22, kind: input, shape index: {}]
  %s23 = inlined_call_operand.vmem [shape: f32[128,17], index: 23, kind: input, shape index: {}]
  %s24 = inlined_call_operand.vmem [shape: f32[1,17], index: 24, kind: input, shape index: {}]
  %s25 = inlined_call_operand.hbm [shape: f32[17,17], index: 25, kind: input, shape index: {}]
  %s26 = inlined_call_operand.vmem [shape: f32[1,17], index: 26, kind: input, shape index: {}]
  %s27 = inlined_call_operand.hbm [shape: f32[1,17], index: 27, kind: output, shape index: {}]
  %s28 = sld [smem:[#allocation0]]
  $region178: #{tpu_custom_call.1} parent=0
    _
  %s30 = ssub.s32 1, %s28
  %s31 = scalar_select 0, %s30, %s28
  $region1: #{tpu_custom_call.1} parent=0
    #allocation2 [shape = 'u8[512]{0}', space=vmem, size = 0x400, scoped, tag = 'input window, operand 2, single buffered']
    #allocation3 [shape = 's32[1]{0}', space=sflag, size = 0x4, scoped, tag = 'scoped memory for tpu_custom_call.1']
    #allocation4 [shape = 's32[1]{0}', space=sflag, size = 0x4, scoped, tag = 'scoped memory for tpu_custom_call.1']
    #allocation5 [shape = 'u8[16384]{0}', space=vmem, size = 0x4000, scoped, tag = 'input window, operand 3, single buffered']
    #allocation6 [shape = 's32[1]{0}', space=sflag, size = 0x4, scoped, tag = 'scoped memory for tpu_custom_call.1']
    #allocation7 [shape = 'u8[512]{0}', space=vmem, size = 0x400, scoped, tag = 'input window, operand 4, single buffered']
    #allocation8 [shape = 'u8[512]{0}', space=vmem, size = 0x400, scoped, tag = 'input window, operand 6, single buffered']
    #allocation9 [shape = 's32[1]{0}', space=sflag, size = 0x4, scoped, tag = 'scoped memory for tpu_custom_call.1']
    #allocation10 [shape = 'u8[16384]{0}', space=vmem, size = 0x4000, scoped, tag = 'input window, operand 7, single buffered']
    #allocation11 [shape = 'u8[512]{0}', space=vmem, size = 0x400, scoped, tag = 'input window, operand 8, single buffered']
    #allocation12 [shape = 's32[1]{0}', space=sflag, size = 0x4, scoped, tag = 'scoped memory for tpu_custom_call.1']
    #allocation13 [shape = 'u8[2048]{0}', space=vmem, size = 0x800, scoped, tag = 'input window, operand 10, single buffered']
    #allocation14 [shape = 'u8[131072]{0}', space=vmem, size = 0x20000, scoped, tag = 'input window, operand 11, single buffered']
    #allocation15 [shape = 's32[1]{0}', space=sflag, size = 0x4, scoped, tag = 'scoped memory for tpu_custom_call.1']
    #allocation16 [shape = 'u8[2048]{0}', space=vmem, size = 0x800, scoped, tag = 'input window, operand 13, single buffered']
    #allocation17 [shape = 'u8[512]{0}', space=vmem, size = 0x400, scoped, tag = 'input window, operand 15, single buffered']
    #allocation18 [shape = 's32[1]{0}', space=sflag, size = 0x4, scoped, tag = 'scoped memory for tpu_custom_call.1']
    #allocation19 [shape = 'u8[512]{0}', space=vmem, size = 0x400, scoped, tag = 'input window, operand 17, single buffered']
    #allocation20 [shape = 'u8[512]{0}', space=vmem, size = 0x400, scoped, tag = 'input window, operand 19, single buffered']
    #allocation21 [shape = 's32[1]{0}', space=sflag, size = 0x4, scoped, tag = 'scoped memory for tpu_custom_call.1']
    #allocation22 [shape = 'u8[16384]{0}', space=vmem, size = 0x4000, scoped, tag = 'input window, operand 20, single buffered']
    #allocation23 [shape = 'u8[512]{0}', space=vmem, size = 0x400, scoped, tag = 'input window, operand 21, single buffered']
    #allocation24 [shape = 's32[1]{0}', space=sflag, size = 0x4, scoped, tag = 'scoped memory for tpu_custom_call.1']
    #allocation25 [shape = 'u8[12288]{0}', space=vmem, size = 0x3000, scoped, tag = 'input window, operand 25, single buffered']
    #allocation26 [shape = 'u8[512]{0}', space=vmem, size = 0x400, scoped, tag = 'output window, operand 0, single buffered']
    %32 = vsyncpa [#allocation3], 0
    %33 = vsyncpa [#allocation6], 0
    %34 = vsyncpa [#allocation9], 0
    %35 = vsyncpa [#allocation12], 0
    %36 = vsyncpa [#allocation15], 0
    %37 = vsyncpa [#allocation18], 0
    %38 = vsyncpa [#allocation21], 0
    %39 = vsyncpa [#allocation24], 0
    %40 = vsyncpa [#allocation4], 0
    // Predicated region
    $region2: #{tpu_custom_call.1} parent=1 // pred_check
      _
    $region3: #{tpu_custom_call.1} parent=1 // pred_check_branch
      %42 = sbr.rel (0) target = $region5
    $region4: #{tpu_custom_call.1} parent=1 // pred_region
      _
    $region5: #{tpu_custom_call.1} parent=1 // pred_fallthru
      _
    // Predicated region
    $region6: #{tpu_custom_call.1} parent=1 // pred_check
      _
    $region7: #{tpu_custom_call.1} parent=1 // pred_check_branch
      %44 = sbr.rel (0) target = $region9
    $region8: #{tpu_custom_call.1} parent=1 // pred_region
      _
    $region9: #{tpu_custom_call.1} parent=1 // pred_fallthru
      _
    // Predicated region
    $region10: #{tpu_custom_call.1} parent=1 // pred_check
      _
    $region11: #{tpu_custom_call.1} parent=1 // pred_check_branch
      %46 = sbr.rel (0) target = $region13
    $region12: #{tpu_custom_call.1} parent=1 // pred_region
      %s48 = ssub.s32 16, 16
      %49 = vsyncadd [#allocation3], %s48
      %s51 = sshll.u32 [#allocation2], 4
      %s52 = int_to_ptr.vmem [resolvable:$true] %s51
      %54 = dma.hbm_to_vmem [thread:$0]  %s2, 16, %s52, [#allocation3]
    $region13: #{tpu_custom_call.1} parent=1 // pred_fallthru
      _
    // Predicated region
    $region14: #{tpu_custom_call.1} parent=1 // pred_check
      _
    $region15: #{tpu_custom_call.1} parent=1 // pred_check_branch
      %56 = sbr.rel (0) target = $region17
    $region16: #{tpu_custom_call.1} parent=1 // pred_region
      %s58 = ssub.s32 512, 512
      %59 = vsyncadd [#allocation6], %s58
      %s60 = sshll.u32 [#allocation5], 4
      %s61 = int_to_ptr.vmem [resolvable:$true] %s60
      %66 = dma.hbm_to_vmem [thread:$0]  %s3, 512, %s61, [#allocation6], 128, 128, 8
    $region17: #{tpu_custom_call.1} parent=1 // pred_fallthru
      _
    // Predicated region
    $region18: #{tpu_custom_call.1} parent=1 // pred_check
      _
    $region19: #{tpu_custom_call.1} parent=1 // pred_check_branch
      %68 = sbr.rel (0) target = $region21
    $region20: #{tpu_custom_call.1} parent=1 // pred_region
      %s70 = ssub.s32 16, 16
      %71 = vsyncadd [#allocation6], %s70
      %s73 = sshll.u32 [#allocation7], 4
      %s74 = int_to_ptr.vmem [resolvable:$true] %s73
      %76 = dma.hbm_to_vmem [thread:$0]  %s4, 16, %s74, [#allocation6]
    $region21: #{tpu_custom_call.1} parent=1 // pred_fallthru
      _
    // Predicated region
    $region22: #{tpu_custom_call.1} parent=1 // pred_check
      _
    $region23: #{tpu_custom_call.1} parent=1 // pred_check_branch
      %78 = sbr.rel (0) target = $region25
    $region24: #{tpu_custom_call.1} parent=1 // pred_region
      _
    $region25: #{tpu_custom_call.1} parent=1 // pred_fallthru
      _
    // Predicated region
    $region26: #{tpu_custom_call.1} parent=1 // pred_check
      _
    $region27: #{tpu_custom_call.1} parent=1 // pred_check_branch
      %80 = sbr.rel (0) target = $region29
    $region28: #{tpu_custom_call.1} parent=1 // pred_region
      %s82 = ssub.s32 16, 16
      %83 = vsyncadd [#allocation9], %s82
      %s85 = sshll.u32 [#allocation8], 4
      %s86 = int_to_ptr.vmem [resolvable:$true] %s85
      %88 = dma.hbm_to_vmem [thread:$0]  %s6, 16, %s86, [#allocation9]
    $region29: #{tpu_custom_call.1} parent=1 // pred_fallthru
      _
    // Predicated region
    $region30: #{tpu_custom_call.1} parent=1 // pred_check
      _
    $region31: #{tpu_custom_call.1} parent=1 // pred_check_branch
      %90 = sbr.rel (0) target = $region33
    $region32: #{tpu_custom_call.1} parent=1 // pred_region
      %s92 = ssub.s32 512, 512
      %93 = vsyncadd [#allocation9], %s92
      %s94 = sshll.u32 [#allocation10], 4
      %s95 = int_to_ptr.vmem [resolvable:$true] %s94
      %100 = dma.hbm_to_vmem [thread:$0]  %s7, 512, %s95, [#allocation9], 128, 128, 8
    $region33: #{tpu_custom_call.1} parent=1 // pred_fallthru
      _
    // Predicated region
    $region34: #{tpu_custom_call.1} parent=1 // pred_check
      _
    $region35: #{tpu_custom_call.1} parent=1 // pred_check_branch
      %102 = sbr.rel (0) target = $region37
    $region36: #{tpu_custom_call.1} parent=1 // pred_region
      %s104 = ssub.s32 16, 16
      %105 = vsyncadd [#allocation12], %s104
      %s107 = sshll.u32 [#allocation11], 4
      %s108 = int_to_ptr.vmem [resolvable:$true] %s107
      %110 = dma.hbm_to_vmem [thread:$0]  %s8, 16, %s108, [#allocation12]
    $region37: #{tpu_custom_call.1} parent=1 // pred_fallthru
      _
    // Predicated region
    $region38: #{tpu_custom_call.1} parent=1 // pred_check
      _
    $region39: #{tpu_custom_call.1} parent=1 // pred_check_branch
      %112 = sbr.rel (0) target = $region41
    $region40: #{tpu_custom_call.1} parent=1 // pred_region
      _
    $region41: #{tpu_custom_call.1} parent=1 // pred_fallthru
      _
    // Predicated region
    $region42: #{tpu_custom_call.1} parent=1 // pred_check
      _
    $region43: #{tpu_custom_call.1} parent=1 // pred_check_branch
      %114 = sbr.rel (0) target = $region45
    $region44: #{tpu_custom_call.1} parent=1 // pred_region
      %s116 = ssub.s32 64, 64
      %117 = vsyncadd [#allocation12], %s116
      %s119 = sshll.u32 [#allocation13], 4
      %s120 = int_to_ptr.vmem [resolvable:$true] %s119
      %122 = dma.hbm_to_vmem [thread:$0]  %s10, 64, %s120, [#allocation12]
    $region45: #{tpu_custom_call.1} parent=1 // pred_fallthru
      _
    // Predicated region
    $region46: #{tpu_custom_call.1} parent=1 // pred_check
      _
    $region47: #{tpu_custom_call.1} parent=1 // pred_check_branch
      %124 = sbr.rel (0) target = $region49
    $region48: #{tpu_custom_call.1} parent=1 // pred_region
      %s126 = ssub.s32 4096, 4096
      %127 = vsyncadd [#allocation15], %s126
      %s128 = sshll.u32 [#allocation14], 4
      %s129 = int_to_ptr.vmem [resolvable:$true] %s128
      %134 = dma.hbm_to_vmem [thread:$0]  %s11, 4096, %s129, [#allocation15], 256, 256, 16
    $region49: #{tpu_custom_call.1} parent=1 // pred_fallthru
      _
    // Predicated region
    $region50: #{tpu_custom_call.1} parent=1 // pred_check
      _
    $region51: #{tpu_custom_call.1} parent=1 // pred_check_branch
      %136 = sbr.rel (0) target = $region53
    $region52: #{tpu_custom_call.1} parent=1 // pred_region
      _
    $region53: #{tpu_custom_call.1} parent=1 // pred_fallthru
      _
    // Predicated region
    $region54: #{tpu_custom_call.1} parent=1 // pred_check
      _
    $region55: #{tpu_custom_call.1} parent=1 // pred_check_branch
      %138 = sbr.rel (0) target = $region57
    $region56: #{tpu_custom_call.1} parent=1 // pred_region
      %s140 = ssub.s32 64, 64
      %141 = vsyncadd [#allocation15], %s140
      %s143 = sshll.u32 [#allocation16], 4
      %s144 = int_to_ptr.vmem [resolvable:$true] %s143
      %146 = dma.hbm_to_vmem [thread:$0]  %s13, 64, %s144, [#allocation15]
    $region57: #{tpu_custom_call.1} parent=1 // pred_fallthru
      _
    // Predicated region
    $region58: #{tpu_custom_call.1} parent=1 // pred_check
      _
    $region59: #{tpu_custom_call.1} parent=1 // pred_check_branch
      %148 = sbr.rel (0) target = $region61
    $region60: #{tpu_custom_call.1} parent=1 // pred_region
      _
    $region61: #{tpu_custom_call.1} parent=1 // pred_fallthru
      _
    // Predicated region
    $region62: #{tpu_custom_call.1} parent=1 // pred_check
      _
    $region63: #{tpu_custom_call.1} parent=1 // pred_check_branch
      %150 = sbr.rel (0) target = $region65
    $region64: #{tpu_custom_call.1} parent=1 // pred_region
      %s152 = ssub.s32 16, 16
      %153 = vsyncadd [#allocation18], %s152
      %s155 = sshll.u32 [#allocation17], 4
      %s156 = int_to_ptr.vmem [resolvable:$true] %s155
      %158 = dma.hbm_to_vmem [thread:$0]  %s15, 16, %s156, [#allocation18]
    $region65: #{tpu_custom_call.1} parent=1 // pred_fallthru
      _
    // Predicated region
    $region66: #{tpu_custom_call.1} parent=1 // pred_check
      _
    $region67: #{tpu_custom_call.1} parent=1 // pred_check_branch
      %160 = sbr.rel (0) target = $region69
    $region68: #{tpu_custom_call.1} parent=1 // pred_region
      _
    $region69: #{tpu_custom_call.1} parent=1 // pred_fallthru
      _
    // Predicated region
    $region70: #{tpu_custom_call.1} parent=1 // pred_check
      _
    $region71: #{tpu_custom_call.1} parent=1 // pred_check_branch
      %162 = sbr.rel (0) target = $region73
    $region72: #{tpu_custom_call.1} parent=1 // pred_region
      %s164 = ssub.s32 16, 16
      %165 = vsyncadd [#allocation18], %s164
      %s167 = sshll.u32 [#allocation19], 4
      %s168 = int_to_ptr.vmem [resolvable:$true] %s167
      %170 = dma.hbm_to_vmem [thread:$0]  %s17, 16, %s168, [#allocation18]
    $region73: #{tpu_custom_call.1} parent=1 // pred_fallthru
      _
    // Predicated region
    $region74: #{tpu_custom_call.1} parent=1 // pred_check
      _
    $region75: #{tpu_custom_call.1} parent=1 // pred_check_branch
      %172 = sbr.rel (0) target = $region77
    $region76: #{tpu_custom_call.1} parent=1 // pred_region
      _
    $region77: #{tpu_custom_call.1} parent=1 // pred_fallthru
      _
    // Predicated region
    $region78: #{tpu_custom_call.1} parent=1 // pred_check
      _
    $region79: #{tpu_custom_call.1} parent=1 // pred_check_branch
      %174 = sbr.rel (0) target = $region81
    $region80: #{tpu_custom_call.1} parent=1 // pred_region
      %s176 = ssub.s32 16, 16
      %177 = vsyncadd [#allocation21], %s176
      %s179 = sshll.u32 [#allocation20], 4
      %s180 = int_to_ptr.vmem [resolvable:$true] %s179
      %182 = dma.hbm_to_vmem [thread:$0]  %s19, 16, %s180, [#allocation21]
    $region81: #{tpu_custom_call.1} parent=1 // pred_fallthru
      _
    // Predicated region
    $region82: #{tpu_custom_call.1} parent=1 // pred_check
      _
    $region83: #{tpu_custom_call.1} parent=1 // pred_check_branch
      %184 = sbr.rel (0) target = $region85
    $region84: #{tpu_custom_call.1} parent=1 // pred_region
      %s186 = ssub.s32 512, 512
      %187 = vsyncadd [#allocation21], %s186
      %s188 = sshll.u32 [#allocation22], 4
      %s189 = int_to_ptr.vmem [resolvable:$true] %s188
      %194 = dma.hbm_to_vmem [thread:$0]  %s20, 512, %s189, [#allocation21], 128, 128, 8
    $region85: #{tpu_custom_call.1} parent=1 // pred_fallthru
      _
    // Predicated region
    $region86: #{tpu_custom_call.1} parent=1 // pred_check
      _
    $region87: #{tpu_custom_call.1} parent=1 // pred_check_branch
      %196 = sbr.rel (0) target = $region89
    $region88: #{tpu_custom_call.1} parent=1 // pred_region
      %s198 = ssub.s32 16, 16
      %199 = vsyncadd [#allocation24], %s198
      %s201 = sshll.u32 [#allocation23], 4
      %s202 = int_to_ptr.vmem [resolvable:$true] %s201
      %204 = dma.hbm_to_vmem [thread:$0]  %s21, 16, %s202, [#allocation24]
    $region89: #{tpu_custom_call.1} parent=1 // pred_fallthru
      _
    // Predicated region
    $region90: #{tpu_custom_call.1} parent=1 // pred_check
      _
    $region91: #{tpu_custom_call.1} parent=1 // pred_check_branch
      %206 = sbr.rel (0) target = $region93
    $region92: #{tpu_custom_call.1} parent=1 // pred_region
      _
    $region93: #{tpu_custom_call.1} parent=1 // pred_fallthru
      _
    // Predicated region
    $region94: #{tpu_custom_call.1} parent=1 // pred_check
      _
    $region95: #{tpu_custom_call.1} parent=1 // pred_check_branch
      %208 = sbr.rel (0) target = $region97
    $region96: #{tpu_custom_call.1} parent=1 // pred_region
      _
    $region97: #{tpu_custom_call.1} parent=1 // pred_fallthru
      _
    // Predicated region
    $region98: #{tpu_custom_call.1} parent=1 // pred_check
      _
    $region99: #{tpu_custom_call.1} parent=1 // pred_check_branch
      %210 = sbr.rel (0) target = $region101
    $region100: #{tpu_custom_call.1} parent=1 // pred_region
      _
    $region101: #{tpu_custom_call.1} parent=1 // pred_fallthru
      _
    // Predicated region
    $region102: #{tpu_custom_call.1} parent=1 // pred_check
      _
    $region103: #{tpu_custom_call.1} parent=1 // pred_check_branch
      %212 = sbr.rel (0) target = $region105
    $region104: #{tpu_custom_call.1} parent=1 // pred_region
      %s214 = ssub.s32 384, 384
      %215 = vsyncadd [#allocation24], %s214
      %s216 = sshll.u32 [#allocation25], 4
      %s217 = int_to_ptr.vmem [resolvable:$true] %s216
      %222 = dma.hbm_to_vmem [thread:$0]  %s25, 384, %s217, [#allocation24], 128, 128, 8
    $region105: #{tpu_custom_call.1} parent=1 // pred_fallthru
      _
    // Predicated region
    $region106: #{tpu_custom_call.1} parent=1 // pred_check
      _
    $region107: #{tpu_custom_call.1} parent=1 // pred_check_branch
      %224 = sbr.rel (0) target = $region109
    $region108: #{tpu_custom_call.1} parent=1 // pred_region
      _
    $region109: #{tpu_custom_call.1} parent=1 // pred_fallthru
      _
    // Predicated region
    $region110: #{tpu_custom_call.1} parent=1 // pred_check
      _
    $region111: #{tpu_custom_call.1} parent=1 // pred_check_branch
      %226 = sbr.rel (0) target = $region113
    $region112: #{tpu_custom_call.1} parent=1 // pred_region
      %227 = dma.done [#allocation3], 16
    $region113: #{tpu_custom_call.1} parent=1 // pred_fallthru
      _
    // Predicated region
    $region114: #{tpu_custom_call.1} parent=1 // pred_check
      _
    $region115: #{tpu_custom_call.1} parent=1 // pred_check_branch
      %229 = sbr.rel (0) target = $region117
    $region116: #{tpu_custom_call.1} parent=1 // pred_region
      %230 = dma.done [#allocation6], 512
    $region117: #{tpu_custom_call.1} parent=1 // pred_fallthru
      _
    // Predicated region
    $region118: #{tpu_custom_call.1} parent=1 // pred_check
      _
    $region119: #{tpu_custom_call.1} parent=1 // pred_check_branch
      %232 = sbr.rel (0) target = $region121
    $region120: #{tpu_custom_call.1} parent=1 // pred_region
      %233 = dma.done [#allocation6], 16
    $region121: #{tpu_custom_call.1} parent=1 // pred_fallthru
      _
    // Predicated region
    $region122: #{tpu_custom_call.1} parent=1 // pred_check
      _
    $region123: #{tpu_custom_call.1} parent=1 // pred_check_branch
      %235 = sbr.rel (0) target = $region125
    $region124: #{tpu_custom_call.1} parent=1 // pred_region
      %236 = dma.done [#allocation9], 16
    $region125: #{tpu_custom_call.1} parent=1 // pred_fallthru
      _
    // Predicated region
    $region126: #{tpu_custom_call.1} parent=1 // pred_check
      _
    $region127: #{tpu_custom_call.1} parent=1 // pred_check_branch
      %238 = sbr.rel (0) target = $region129
    $region128: #{tpu_custom_call.1} parent=1 // pred_region
      %239 = dma.done [#allocation9], 512
    $region129: #{tpu_custom_call.1} parent=1 // pred_fallthru
      _
    // Predicated region
    $region130: #{tpu_custom_call.1} parent=1 // pred_check
      _
    $region131: #{tpu_custom_call.1} parent=1 // pred_check_branch
      %241 = sbr.rel (0) target = $region133
    $region132: #{tpu_custom_call.1} parent=1 // pred_region
      %242 = dma.done [#allocation12], 16
    $region133: #{tpu_custom_call.1} parent=1 // pred_fallthru
      _
    // Predicated region
    $region134: #{tpu_custom_call.1} parent=1 // pred_check
      _
    $region135: #{tpu_custom_call.1} parent=1 // pred_check_branch
      %244 = sbr.rel (0) target = $region137
    $region136: #{tpu_custom_call.1} parent=1 // pred_region
      %245 = dma.done [#allocation12], 64
    $region137: #{tpu_custom_call.1} parent=1 // pred_fallthru
      _
    // Predicated region
    $region138: #{tpu_custom_call.1} parent=1 // pred_check
      _
    $region139: #{tpu_custom_call.1} parent=1 // pred_check_branch
      %247 = sbr.rel (0) target = $region141
    $region140: #{tpu_custom_call.1} parent=1 // pred_region
      %248 = dma.done [#allocation15], 4096
    $region141: #{tpu_custom_call.1} parent=1 // pred_fallthru
      _
    // Predicated region
    $region142: #{tpu_custom_call.1} parent=1 // pred_check
      _
    $region143: #{tpu_custom_call.1} parent=1 // pred_check_branch
      %250 = sbr.rel (0) target = $region145
    $region144: #{tpu_custom_call.1} parent=1 // pred_region
      %251 = dma.done [#allocation15], 64
    $region145: #{tpu_custom_call.1} parent=1 // pred_fallthru
      _
    // Predicated region
    $region146: #{tpu_custom_call.1} parent=1 // pred_check
      _
    $region147: #{tpu_custom_call.1} parent=1 // pred_check_branch
      %253 = sbr.rel (0) target = $region149
    $region148: #{tpu_custom_call.1} parent=1 // pred_region
      %254 = dma.done [#allocation18], 16
    $region149: #{tpu_custom_call.1} parent=1 // pred_fallthru
      _
    // Predicated region
    $region150: #{tpu_custom_call.1} parent=1 // pred_check
      _
    $region151: #{tpu_custom_call.1} parent=1 // pred_check_branch
      %256 = sbr.rel (0) target = $region153
    $region152: #{tpu_custom_call.1} parent=1 // pred_region
      %257 = dma.done [#allocation18], 16
    $region153: #{tpu_custom_call.1} parent=1 // pred_fallthru
      _
    // Predicated region
    $region154: #{tpu_custom_call.1} parent=1 // pred_check
      _
    $region155: #{tpu_custom_call.1} parent=1 // pred_check_branch
      %259 = sbr.rel (0) target = $region157
    $region156: #{tpu_custom_call.1} parent=1 // pred_region
      %260 = dma.done [#allocation21], 16
    $region157: #{tpu_custom_call.1} parent=1 // pred_fallthru
      _
    // Predicated region
    $region158: #{tpu_custom_call.1} parent=1 // pred_check
      _
    $region159: #{tpu_custom_call.1} parent=1 // pred_check_branch
      %262 = sbr.rel (0) target = $region161
    $region160: #{tpu_custom_call.1} parent=1 // pred_region
      %263 = dma.done [#allocation21], 512
    $region161: #{tpu_custom_call.1} parent=1 // pred_fallthru
      _
    // Predicated region
    $region162: #{tpu_custom_call.1} parent=1 // pred_check
      _
    $region163: #{tpu_custom_call.1} parent=1 // pred_check_branch
      %265 = sbr.rel (0) target = $region165
    $region164: #{tpu_custom_call.1} parent=1 // pred_region
      %266 = dma.done [#allocation24], 16
    $region165: #{tpu_custom_call.1} parent=1 // pred_fallthru
      _
    // Predicated region
    $region166: #{tpu_custom_call.1} parent=1 // pred_check
      _
    $region167: #{tpu_custom_call.1} parent=1 // pred_check_branch
      %268 = sbr.rel (0) target = $region169
    $region168: #{tpu_custom_call.1} parent=1 // pred_region
      %269 = dma.done [#allocation24], 384
    $region169: #{tpu_custom_call.1} parent=1 // pred_fallthru
      _
    %v271 = vld [vmem:[%s0] sm:$0xff]
    %v272 = vld [vmem:[%s0 + $0x8] sm:$0xff]
    %v273 = vld [vmem:[%s0 + $0x10] sm:$0xff]
    %v274 = vld [vmem:[%s0 + $0x18] sm:$0xff]
    %v275 = vld [vmem:[%s0 + $0x20] sm:$0xff]
    %v276 = vld [vmem:[%s0 + $0x28] sm:$0xff]
    %v277 = vld [vmem:[%s0 + $0x30] sm:$0xff]
    %v278 = vld [vmem:[%s0 + $0x38] sm:$0xff]
    %v279 = vld [vmem:[%s1] sm:$0xff]
    %v280 = vld [vmem:[%s1 + $0x8] sm:$0xff]
    %v281 = vld [vmem:[%s1 + $0x10] sm:$0xff]
    %v282 = vld [vmem:[%s1 + $0x18] sm:$0xff]
    %v283 = vld [vmem:[%s1 + $0x20] sm:$0xff]
    %v284 = vld [vmem:[%s1 + $0x28] sm:$0xff]
    %v285 = vld [vmem:[%s1 + $0x30] sm:$0xff]
    %v286 = vld [vmem:[%s1 + $0x38] sm:$0xff]
    %v287 = vld [vmem:[%s1 + $0x40] sm:$0xff]
    %v288 = vld [vmem:[%s1 + $0x48] sm:$0xff]
    %v289 = vld [vmem:[%s1 + $0x50] sm:$0xff]
    %v290 = vld [vmem:[%s1 + $0x58] sm:$0xff]
    %v291 = vld [vmem:[%s1 + $0x60] sm:$0xff]
    %v292 = vld [vmem:[%s1 + $0x68] sm:$0xff]
    %v293 = vld [vmem:[%s1 + $0x70] sm:$0xff]
    %v294 = vld [vmem:[%s1 + $0x78] sm:$0xff]
    %v295 = vld [vmem:[%s1 + $0x80] sm:$0xff]
    %v296 = vld [vmem:[%s1 + $0x88] sm:$0xff]
    %v297 = vld [vmem:[%s1 + $0x90] sm:$0xff]
    %v298 = vld [vmem:[%s1 + $0x98] sm:$0xff]
    %v299 = vld [vmem:[%s1 + $0xa0] sm:$0xff]
    %v300 = vld [vmem:[%s1 + $0xa8] sm:$0xff]
    %v301 = vld [vmem:[%s1 + $0xb0] sm:$0xff]
    %v302 = vld [vmem:[%s1 + $0xb8] sm:$0xff]
    %v303 = vld [vmem:[#allocation2] sm:$0x1]
    %v305 = vlaneseq
    %v306 = vshrl.u32 %v305, 7
    %v307 = vsub.s32 0, %v306
    %v308 = vrot.slane %v303, %v307
    %vm310 = vcmask 523264
    %v312 = vsel %vm310, %v272, 0
    %v315 = vsel %vm310, %v274, 0
    %v318 = vsel %vm310, %v276, 0
    %v321 = vsel %vm310, %v278, 0
    %323 = vmatprep.subr.mxu0 0.0
    %324 = vmatpush1.msra.mxu0 %v294
    %325 = vmatprep.subr.mxu0 0.0
    %326 = vmatpush1.msra.mxu0 %v293
    %327 = vmatprep.subr.mxu0 0.0
    %328 = vmatpush1.msra.mxu0 %v292
    %329 = vmatprep.subr.mxu0 0.0
    %330 = vmatpush1.msra.mxu0 %v291
    %331 = vmatprep.subr.mxu0 0.0
    %332 = vmatpush1.msra.mxu0 %v290
    %333 = vmatprep.subr.mxu0 0.0
    %334 = vmatpush1.msra.mxu0 %v289
    %335 = vmatprep.subr.mxu0 0.0
    %336 = vmatpush1.msra.mxu0 %v288
    %337 = vmatprep.subr.mxu0 0.0
    %338 = vmatpush1.msra.mxu0 %v287
    %339 = vmatprep.subr.mxu0 0.0
    %340 = vmatpush1.msra.mxu0 %v286
    %341 = vmatprep.subr.mxu0 0.0
    %342 = vmatpush1.msra.mxu0 %v285
    %343 = vmatprep.subr.mxu0 0.0
    %344 = vmatpush1.msra.mxu0 %v284
    %345 = vmatprep.subr.mxu0 0.0
    %346 = vmatpush1.msra.mxu0 %v283
    %347 = vmatprep.subr.mxu0 0.0
    %348 = vmatpush1.msra.mxu0 %v282
    %349 = vmatprep.subr.mxu0 0.0
    %350 = vmatpush1.msra.mxu0 %v281
    %351 = vmatprep.subr.mxu0 0.0
    %352 = vmatpush1.msra.mxu0 %v280
    %353 = vmatprep.subr.mxu0 0.0
    %354 = vmatpush1.msra.mxu0 %v279
    %355 = vmatprep.subr.mxu0 0.0
    %356 = vmatpush2.msra.mxu0 0.0
    %357 = vmatprep.subr.mxu0 0.0
    %358 = vmatpush2.msra.mxu0 0.0
    %359 = vmatprep.subr.mxu0 0.0
    %360 = vmatpush2.msra.mxu0 0.0
    %361 = vmatprep.subr.mxu0 0.0
    %362 = vmatpush2.msra.mxu0 0.0
    %363 = vmatprep.subr.mxu0 0.0
    %364 = vmatpush2.msra.mxu0 0.0
    %365 = vmatprep.subr.mxu0 0.0
    %366 = vmatpush2.msra.mxu0 0.0
    %367 = vmatprep.subr.mxu0 0.0
    %368 = vmatpush2.msra.mxu0 0.0
    %369 = vmatprep.subr.mxu0 0.0
    %370 = vmatpush2.msra.mxu0 0.0
    %371 = vmatprep.subr.mxu0 0.0
    %372 = vmatpush2.msra.mxu0 %v302
    %373 = vmatprep.subr.mxu0 0.0
    %374 = vmatpush2.msra.mxu0 %v301
    %375 = vmatprep.subr.mxu0 0.0
    %376 = vmatpush2.msra.mxu0 %v300
    %377 = vmatprep.subr.mxu0 0.0
    %378 = vmatpush2.msra.mxu0 %v299
    %379 = vmatprep.subr.mxu0 0.0
    %380 = vmatpush2.msra.mxu0 %v298
    %381 = vmatprep.subr.mxu0 0.0
    %382 = vmatpush2.msra.mxu0 %v297
    %383 = vmatprep.subr.mxu0 0.0
    %384 = vmatpush2.msra.mxu0 %v296
    %385 = vmatprep.subr.mxu0 0.0
    %386 = vmatpush2.msra.mxu0 %v295
    %387 = vmatprep.mubr.f32.mxu0 %v312
    %388 = vmatmul.mubr.f32.gmra.mxu0 %v271
    %v389 = vpop.f32.mrf.mxu0
    %v390 = vadd.f32 %v308, %v389
    %v391 = vpop.f32.mrf.mxu0
    %392 = vmatprep.mubr.f32.mxu0 %v315
    %393 = vmatmul.mubr.f32.gmra.mxu0 %v273
    %v394 = vpop.f32.mrf.mxu0
    %v395 = vadd.f32 %v308, %v394
    %v396 = vpop.f32.mrf.mxu0
    %397 = vmatprep.mubr.f32.mxu0 %v318
    %398 = vmatmul.mubr.f32.gmra.mxu0 %v275
    %v399 = vpop.f32.mrf.mxu0
    %v400 = vadd.f32 %v308, %v399
    %v401 = vpop.f32.mrf.mxu0
    %402 = vmatprep.mubr.f32.mxu0 %v321
    %403 = vmatmul.mubr.f32.gmra.mxu0 %v277
    %v404 = vpop.f32.mrf.mxu0
    %v405 = vadd.f32 %v308, %v404
    %v406 = vpop.f32.mrf.mxu0
    %407 = vdwg.mxu0
    %v408 = vmax.f32 %v390, 0.0
    %v409 = vmax.f32 %v395, 0.0
    %v410 = vmax.f32 %v400, 0.0
    %v411 = vmax.f32 %v405, 0.0
    %v412 = vld [vmem:[#allocation5] sm:$0xff]
    %v413 = vld [vmem:[#allocation5 + $0x8] sm:$0xff]
    %v414 = vld [vmem:[#allocation5 + $0x10] sm:$0xff]
    %v415 = vld [vmem:[#allocation5 + $0x18] sm:$0xff]
    %v416 = vld [vmem:[#allocation7] sm:$0x1]
    %v418 = vlaneseq
    %v419 = vshrl.u32 %v418, 7
    %v420 = vsub.s32 0, %v419
    %v421 = vrot.slane %v416, %v420
    %vm423 = vcmask 261120
    %v425 = vsel %vm423, %v408, 0
    %v428 = vsel %vm423, %v409, 0
    %v431 = vsel %vm423, %v410, 0
    %v434 = vsel %vm423, %v411, 0
    %436 = vmatprep.subr.mxu0 0.0
    %437 = vmatpush1.msra.mxu0 0.0
    %438 = vmatprep.subr.mxu0 0.0
    %439 = vmatpush1.msra.mxu0 0.0
    %440 = vmatprep.subr.mxu0 0.0
    %441 = vmatpush1.msra.mxu0 0.0
    %442 = vmatprep.subr.mxu0 0.0
    %443 = vmatpush1.msra.mxu0 0.0
    %444 = vmatprep.subr.mxu0 0.0
    %445 = vmatpush1.msra.mxu0 0.0
    %446 = vmatprep.subr.mxu0 0.0
    %447 = vmatpush1.msra.mxu0 0.0
    %448 = vmatprep.subr.mxu0 0.0
    %449 = vmatpush1.msra.mxu0 0.0
    %450 = vmatprep.subr.mxu0 0.0
    %451 = vmatpush1.msra.mxu0 0.0
    %452 = vmatprep.subr.mxu0 0.0
    %453 = vmatpush1.msra.mxu0 0.0
    %454 = vmatprep.subr.mxu0 0.0
    %455 = vmatpush1.msra.mxu0 0.0
    %456 = vmatprep.subr.mxu0 0.0
    %457 = vmatpush1.msra.mxu0 0.0
    %458 = vmatprep.subr.mxu0 0.0
    %459 = vmatpush1.msra.mxu0 0.0
    %460 = vmatprep.subr.mxu0 0.0
    %461 = vmatpush1.msra.mxu0 %v415
    %462 = vmatprep.subr.mxu0 0.0
    %463 = vmatpush1.msra.mxu0 %v414
    %464 = vmatprep.subr.mxu0 0.0
    %465 = vmatpush1.msra.mxu0 %v413
    %466 = vmatprep.subr.mxu0 0.0
    %467 = vmatpush1.msra.mxu0 %v412
    %468 = vmatprep.subr.mxu0 0.0
    %469 = vmatpush2.msra.mxu0 0.0
    %470 = vmatprep.subr.mxu0 0.0
    %471 = vmatpush2.msra.mxu0 0.0
    %472 = vmatprep.subr.mxu0 0.0
    %473 = vmatpush2.msra.mxu0 0.0
    %474 = vmatprep.subr.mxu0 0.0
    %475 = vmatpush2.msra.mxu0 0.0
    %476 = vmatprep.subr.mxu0 0.0
    %477 = vmatpush2.msra.mxu0 0.0
    %478 = vmatprep.subr.mxu0 0.0
    %479 = vmatpush2.msra.mxu0 0.0
    %480 = vmatprep.subr.mxu0 0.0
    %481 = vmatpush2.msra.mxu0 0.0
    %482 = vmatprep.subr.mxu0 0.0
    %483 = vmatpush2.msra.mxu0 0.0
    %484 = vmatprep.subr.mxu0 0.0
    %485 = vmatpush2.msra.mxu0 0.0
    %486 = vmatprep.subr.mxu0 0.0
    %487 = vmatpush2.msra.mxu0 0.0
    %488 = vmatprep.subr.mxu0 0.0
    %489 = vmatpush2.msra.mxu0 0.0
    %490 = vmatprep.subr.mxu0 0.0
    %491 = vmatpush2.msra.mxu0 0.0
    %492 = vmatprep.subr.mxu0 0.0
    %493 = vmatpush2.msra.mxu0 0.0
    %494 = vmatprep.subr.mxu0 0.0
    %495 = vmatpush2.msra.mxu0 0.0
    %496 = vmatprep.subr.mxu0 0.0
    %497 = vmatpush2.msra.mxu0 0.0
    %498 = vmatprep.subr.mxu0 0.0
    %499 = vmatpush2.msra.mxu0 0.0
    %500 = vmatprep.mubr.f32.mxu0 0.0
    %501 = vmatmul.mubr.f32.gmra.mxu0 %v425
    %v502 = vpop.f32.mrf.mxu0
    %v503 = vadd.f32 %v421, %v502
    %v504 = vpop.f32.mrf.mxu0
    %505 = vmatprep.mubr.f32.mxu0 0.0
    %506 = vmatmul.mubr.f32.gmra.mxu0 %v428
    %v507 = vpop.f32.mrf.mxu0
    %v508 = vadd.f32 %v421, %v507
    %v509 = vpop.f32.mrf.mxu0
    %510 = vmatprep.mubr.f32.mxu0 0.0
    %511 = vmatmul.mubr.f32.gmra.mxu0 %v431
    %v512 = vpop.f32.mrf.mxu0
    %v513 = vadd.f32 %v421, %v512
    %v514 = vpop.f32.mrf.mxu0
    %515 = vmatprep.mubr.f32.mxu0 0.0
    %516 = vmatmul.mubr.f32.gmra.mxu0 %v434
    %v517 = vpop.f32.mrf.mxu0
    %v518 = vadd.f32 %v421, %v517
    %v519 = vpop.f32.mrf.mxu0
    %520 = vdwg.mxu0
    %v521 = vmax.f32 %v503, %v508
    %v522 = vmax.f32 %v521, %v513
    %v523 = vmax.f32 %v522, %v518
    %v524 = vld [vmem:[%s14] sm:$0xff]
    %v525 = vld [vmem:[%s14 + $0x8] sm:$0xff]
    %v526 = vld [vmem:[%s14 + $0x10] sm:$0xff]
    %v527 = vld [vmem:[%s14 + $0x18] sm:$0xff]
    %v528 = vld [vmem:[%s14 + $0x20] sm:$0xff]
    %v529 = vld [vmem:[%s14 + $0x28] sm:$0xff]
    %v530 = vld [vmem:[%s14 + $0x30] sm:$0xff]
    %v531 = vld [vmem:[%s14 + $0x38] sm:$0xff]
    %v532 = vld [vmem:[#allocation17] sm:$0x1]
    %v534 = vrot.slane %v523, 7
    %v535 = vsel %vm310, %v534, 0
    %537 = vmatprep.subr.mxu0 0.0
    %538 = vmatpush1.msra.mxu0 0.0
    %539 = vmatprep.subr.mxu0 0.0
    %540 = vmatpush1.msra.mxu0 0.0
    %541 = vmatprep.subr.mxu0 0.0
    %542 = vmatpush1.msra.mxu0 0.0
    %543 = vmatprep.subr.mxu0 0.0
    %544 = vmatpush1.msra.mxu0 0.0
    %545 = vmatprep.subr.mxu0 0.0
    %546 = vmatpush1.msra.mxu0 0.0
    %547 = vmatprep.subr.mxu0 0.0
    %548 = vmatpush1.msra.mxu0 0.0
    %549 = vmatprep.subr.mxu0 0.0
    %550 = vmatpush1.msra.mxu0 0.0
    %551 = vmatprep.subr.mxu0 0.0
    %552 = vmatpush1.msra.mxu0 0.0
    %553 = vmatprep.subr.mxu0 0.0
    %554 = vmatpush1.msra.mxu0 %v531
    %555 = vmatprep.subr.mxu0 0.0
    %556 = vmatpush1.msra.mxu0 %v530
    %557 = vmatprep.subr.mxu0 0.0
    %558 = vmatpush1.msra.mxu0 %v529
    %559 = vmatprep.subr.mxu0 0.0
    %560 = vmatpush1.msra.mxu0 %v528
    %561 = vmatprep.subr.mxu0 0.0
    %562 = vmatpush1.msra.mxu0 %v527
    %563 = vmatprep.subr.mxu0 0.0
    %564 = vmatpush1.msra.mxu0 %v526
    %565 = vmatprep.subr.mxu0 0.0
    %566 = vmatpush1.msra.mxu0 %v525
    %567 = vmatprep.subr.mxu0 0.0
    %568 = vmatpush1.msra.mxu0 %v524
    %569 = vmatprep.subr.mxu0 0.0
    %570 = vmatpush2.msra.mxu0 0.0
    %571 = vmatprep.subr.mxu0 0.0
    %572 = vmatpush2.msra.mxu0 0.0
    %573 = vmatprep.subr.mxu0 0.0
    %574 = vmatpush2.msra.mxu0 0.0
    %575 = vmatprep.subr.mxu0 0.0
    %576 = vmatpush2.msra.mxu0 0.0
    %577 = vmatprep.subr.mxu0 0.0
    %578 = vmatpush2.msra.mxu0 0.0
    %579 = vmatprep.subr.mxu0 0.0
    %580 = vmatpush2.msra.mxu0 0.0
    %581 = vmatprep.subr.mxu0 0.0
    %582 = vmatpush2.msra.mxu0 0.0
    %583 = vmatprep.subr.mxu0 0.0
    %584 = vmatpush2.msra.mxu0 0.0
    %585 = vmatprep.subr.mxu0 0.0
    %586 = vmatpush2.msra.mxu0 0.0
    %587 = vmatprep.subr.mxu0 0.0
    %588 = vmatpush2.msra.mxu0 0.0
    %589 = vmatprep.subr.mxu0 0.0
    %590 = vmatpush2.msra.mxu0 0.0
    %591 = vmatprep.subr.mxu0 0.0
    %592 = vmatpush2.msra.mxu0 0.0
    %593 = vmatprep.subr.mxu0 0.0
    %594 = vmatpush2.msra.mxu0 0.0
    %595 = vmatprep.subr.mxu0 0.0
    %596 = vmatpush2.msra.mxu0 0.0
    %597 = vmatprep.subr.mxu0 0.0
    %598 = vmatpush2.msra.mxu0 0.0
    %599 = vmatprep.subr.mxu0 0.0
    %600 = vmatpush2.msra.mxu0 0.0
    %601 = vmatprep.mubr.f32.mxu0 0.0
    %602 = vmatmul.mubr.f32.gmra.mxu0 %v535
    %v603 = vpop.f32.mrf.mxu0
    %v604 = vadd.f32 %v532, %v603
    %v605 = vpop.f32.mrf.mxu0
    %606 = vdwg.mxu0
    %v607 = vmax.f32 %v604, 0.0
    %v608 = vld [vmem:[%s16] sm:$0xff]
    %v609 = vld [vmem:[%s16 + $0x8] sm:$0xff]
    %v610 = vld [vmem:[%s16 + $0x10] sm:$0xff]
    %v611 = vld [vmem:[%s16 + $0x18] sm:$0xff]
    %v612 = vld [vmem:[%s16 + $0x20] sm:$0xff]
    %v613 = vld [vmem:[%s16 + $0x28] sm:$0xff]
    %v614 = vld [vmem:[%s16 + $0x30] sm:$0xff]
    %v615 = vld [vmem:[#allocation19] sm:$0x1]
    %vm616 = vcmask 457728
    %v618 = vsel %vm616, %v607, 0
    %620 = vmatprep.subr.mxu0 0.0
    %621 = vmatpush1.msra.mxu0 0.0
    %622 = vmatprep.subr.mxu0 0.0
    %623 = vmatpush1.msra.mxu0 0.0
    %624 = vmatprep.subr.mxu0 0.0
    %625 = vmatpush1.msra.mxu0 0.0
    %626 = vmatprep.subr.mxu0 0.0
    %627 = vmatpush1.msra.mxu0 0.0
    %628 = vmatprep.subr.mxu0 0.0
    %629 = vmatpush1.msra.mxu0 0.0
    %630 = vmatprep.subr.mxu0 0.0
    %631 = vmatpush1.msra.mxu0 0.0
    %632 = vmatprep.subr.mxu0 0.0
    %633 = vmatpush1.msra.mxu0 0.0
    %634 = vmatprep.subr.mxu0 0.0
    %635 = vmatpush1.msra.mxu0 0.0
    %636 = vmatprep.subr.mxu0 0.0
    %637 = vmatpush1.msra.mxu0 0.0
    %638 = vmatprep.subr.mxu0 0.0
    %639 = vmatpush1.msra.mxu0 %v614
    %640 = vmatprep.subr.mxu0 0.0
    %641 = vmatpush1.msra.mxu0 %v613
    %642 = vmatprep.subr.mxu0 0.0
    %643 = vmatpush1.msra.mxu0 %v612
    %644 = vmatprep.subr.mxu0 0.0
    %645 = vmatpush1.msra.mxu0 %v611
    %646 = vmatprep.subr.mxu0 0.0
    %647 = vmatpush1.msra.mxu0 %v610
    %648 = vmatprep.subr.mxu0 0.0
    %649 = vmatpush1.msra.mxu0 %v609
    %650 = vmatprep.subr.mxu0 0.0
    %651 = vmatpush1.msra.mxu0 %v608
    %652 = vmatprep.subr.mxu0 0.0
    %653 = vmatpush2.msra.mxu0 0.0
    %654 = vmatprep.subr.mxu0 0.0
    %655 = vmatpush2.msra.mxu0 0.0
    %656 = vmatprep.subr.mxu0 0.0
    %657 = vmatpush2.msra.mxu0 0.0
    %658 = vmatprep.subr.mxu0 0.0
    %659 = vmatpush2.msra.mxu0 0.0
    %660 = vmatprep.subr.mxu0 0.0
    %661 = vmatpush2.msra.mxu0 0.0
    %662 = vmatprep.subr.mxu0 0.0
    %663 = vmatpush2.msra.mxu0 0.0
    %664 = vmatprep.subr.mxu0 0.0
    %665 = vmatpush2.msra.mxu0 0.0
    %666 = vmatprep.subr.mxu0 0.0
    %667 = vmatpush2.msra.mxu0 0.0
    %668 = vmatprep.subr.mxu0 0.0
    %669 = vmatpush2.msra.mxu0 0.0
    %670 = vmatprep.subr.mxu0 0.0
    %671 = vmatpush2.msra.mxu0 0.0
    %672 = vmatprep.subr.mxu0 0.0
    %673 = vmatpush2.msra.mxu0 0.0
    %674 = vmatprep.subr.mxu0 0.0
    %675 = vmatpush2.msra.mxu0 0.0
    %676 = vmatprep.subr.mxu0 0.0
    %677 = vmatpush2.msra.mxu0 0.0
    %678 = vmatprep.subr.mxu0 0.0
    %679 = vmatpush2.msra.mxu0 0.0
    %680 = vmatprep.subr.mxu0 0.0
    %681 = vmatpush2.msra.mxu0 0.0
    %682 = vmatprep.subr.mxu0 0.0
    %683 = vmatpush2.msra.mxu0 0.0
    %684 = vmatprep.mubr.f32.mxu0 0.0
    %685 = vmatmul.mubr.f32.gmra.mxu0 %v618
    %v686 = vpop.f32.mrf.mxu0
    %v687 = vadd.f32 %v615, %v686
    %v688 = vpop.f32.mrf.mxu0
    %689 = vdwg.mxu0
    %v690 = vmax.f32 %v687, 0.0
    %v691 = vld [vmem:[%s18] sm:$0xff]
    %v692 = vld [vmem:[%s18 + $0x8] sm:$0xff]
    %v693 = vld [vmem:[%s18 + $0x10] sm:$0xff]
    %v694 = vld [vmem:[%s18 + $0x18] sm:$0xff]
    %v695 = vld [vmem:[%s18 + $0x20] sm:$0xff]
    %v696 = vld [vmem:[#allocation20] sm:$0x1]
    %vm697 = vcmask 326656
    %v699 = vsel %vm697, %v690, 0
    %701 = vmatprep.subr.mxu0 0.0
    %702 = vmatpush1.msra.mxu0 0.0
    %703 = vmatprep.subr.mxu0 0.0
    %704 = vmatpush1.msra.mxu0 0.0
    %705 = vmatprep.subr.mxu0 0.0
    %706 = vmatpush1.msra.mxu0 0.0
    %707 = vmatprep.subr.mxu0 0.0
    %708 = vmatpush1.msra.mxu0 0.0
    %709 = vmatprep.subr.mxu0 0.0
    %710 = vmatpush1.msra.mxu0 0.0
    %711 = vmatprep.subr.mxu0 0.0
    %712 = vmatpush1.msra.mxu0 0.0
    %713 = vmatprep.subr.mxu0 0.0
    %714 = vmatpush1.msra.mxu0 0.0
    %715 = vmatprep.subr.mxu0 0.0
    %716 = vmatpush1.msra.mxu0 0.0
    %717 = vmatprep.subr.mxu0 0.0
    %718 = vmatpush1.msra.mxu0 0.0
    %719 = vmatprep.subr.mxu0 0.0
    %720 = vmatpush1.msra.mxu0 0.0
    %721 = vmatprep.subr.mxu0 0.0
    %722 = vmatpush1.msra.mxu0 0.0
    %723 = vmatprep.subr.mxu0 0.0
    %724 = vmatpush1.msra.mxu0 %v695
    %725 = vmatprep.subr.mxu0 0.0
    %726 = vmatpush1.msra.mxu0 %v694
    %727 = vmatprep.subr.mxu0 0.0
    %728 = vmatpush1.msra.mxu0 %v693
    %729 = vmatprep.subr.mxu0 0.0
    %730 = vmatpush1.msra.mxu0 %v692
    %731 = vmatprep.subr.mxu0 0.0
    %732 = vmatpush1.msra.mxu0 %v691
    %733 = vmatprep.subr.mxu0 0.0
    %734 = vmatpush2.msra.mxu0 0.0
    %735 = vmatprep.subr.mxu0 0.0
    %736 = vmatpush2.msra.mxu0 0.0
    %737 = vmatprep.subr.mxu0 0.0
    %738 = vmatpush2.msra.mxu0 0.0
    %739 = vmatprep.subr.mxu0 0.0
    %740 = vmatpush2.msra.mxu0 0.0
    %741 = vmatprep.subr.mxu0 0.0
    %742 = vmatpush2.msra.mxu0 0.0
    %743 = vmatprep.subr.mxu0 0.0
    %744 = vmatpush2.msra.mxu0 0.0
    %745 = vmatprep.subr.mxu0 0.0
    %746 = vmatpush2.msra.mxu0 0.0
    %747 = vmatprep.subr.mxu0 0.0
    %748 = vmatpush2.msra.mxu0 0.0
    %749 = vmatprep.subr.mxu0 0.0
    %750 = vmatpush2.msra.mxu0 0.0
    %751 = vmatprep.subr.mxu0 0.0
    %752 = vmatpush2.msra.mxu0 0.0
    %753 = vmatprep.subr.mxu0 0.0
    %754 = vmatpush2.msra.mxu0 0.0
    %755 = vmatprep.subr.mxu0 0.0
    %756 = vmatpush2.msra.mxu0 0.0
    %757 = vmatprep.subr.mxu0 0.0
    %758 = vmatpush2.msra.mxu0 0.0
    %759 = vmatprep.subr.mxu0 0.0
    %760 = vmatpush2.msra.mxu0 0.0
    %761 = vmatprep.subr.mxu0 0.0
    %762 = vmatpush2.msra.mxu0 0.0
    %763 = vmatprep.subr.mxu0 0.0
    %764 = vmatpush2.msra.mxu0 0.0
    %765 = vmatprep.mubr.f32.mxu0 0.0
    %766 = vmatmul.mubr.f32.gmra.mxu0 %v699
    %v767 = vpop.f32.mrf.mxu0
    %v768 = vadd.f32 %v696, %v767
    %v769 = vpop.f32.mrf.mxu0
    %770 = vdwg.mxu0
    %v771 = vmax.f32 %v768, 0.0
    %v772 = vld [vmem:[#allocation22] sm:$0xff]
    %v773 = vld [vmem:[#allocation22 + $0x8] sm:$0xff]
    %v774 = vld [vmem:[#allocation22 + $0x10] sm:$0xff]
    %v775 = vld [vmem:[#allocation22 + $0x18] sm:$0xff]
    %v776 = vld [vmem:[#allocation23] sm:$0x1]
    %v778 = vsel %vm423, %v771, 0
    %780 = vmatprep.subr.mxu0 0.0
    %781 = vmatpush1.msra.mxu0 0.0
    %782 = vmatprep.subr.mxu0 0.0
    %783 = vmatpush1.msra.mxu0 0.0
    %784 = vmatprep.subr.mxu0 0.0
    %785 = vmatpush1.msra.mxu0 0.0
    %786 = vmatprep.subr.mxu0 0.0
    %787 = vmatpush1.msra.mxu0 0.0
    %788 = vmatprep.subr.mxu0 0.0
    %789 = vmatpush1.msra.mxu0 0.0
    %790 = vmatprep.subr.mxu0 0.0
    %791 = vmatpush1.msra.mxu0 0.0
    %792 = vmatprep.subr.mxu0 0.0
    %793 = vmatpush1.msra.mxu0 0.0
    %794 = vmatprep.subr.mxu0 0.0
    %795 = vmatpush1.msra.mxu0 0.0
    %796 = vmatprep.subr.mxu0 0.0
    %797 = vmatpush1.msra.mxu0 0.0
    %798 = vmatprep.subr.mxu0 0.0
    %799 = vmatpush1.msra.mxu0 0.0
    %800 = vmatprep.subr.mxu0 0.0
    %801 = vmatpush1.msra.mxu0 0.0
    %802 = vmatprep.subr.mxu0 0.0
    %803 = vmatpush1.msra.mxu0 0.0
    %804 = vmatprep.subr.mxu0 0.0
    %805 = vmatpush1.msra.mxu0 %v775
    %806 = vmatprep.subr.mxu0 0.0
    %807 = vmatpush1.msra.mxu0 %v774
    %808 = vmatprep.subr.mxu0 0.0
    %809 = vmatpush1.msra.mxu0 %v773
    %810 = vmatprep.subr.mxu0 0.0
    %811 = vmatpush1.msra.mxu0 %v772
    %812 = vmatprep.subr.mxu0 0.0
    %813 = vmatpush2.msra.mxu0 0.0
    %814 = vmatprep.subr.mxu0 0.0
    %815 = vmatpush2.msra.mxu0 0.0
    %816 = vmatprep.subr.mxu0 0.0
    %817 = vmatpush2.msra.mxu0 0.0
    %818 = vmatprep.subr.mxu0 0.0
    %819 = vmatpush2.msra.mxu0 0.0
    %820 = vmatprep.subr.mxu0 0.0
    %821 = vmatpush2.msra.mxu0 0.0
    %822 = vmatprep.subr.mxu0 0.0
    %823 = vmatpush2.msra.mxu0 0.0
    %824 = vmatprep.subr.mxu0 0.0
    %825 = vmatpush2.msra.mxu0 0.0
    %826 = vmatprep.subr.mxu0 0.0
    %827 = vmatpush2.msra.mxu0 0.0
    %828 = vmatprep.subr.mxu0 0.0
    %829 = vmatpush2.msra.mxu0 0.0
    %830 = vmatprep.subr.mxu0 0.0
    %831 = vmatpush2.msra.mxu0 0.0
    %832 = vmatprep.subr.mxu0 0.0
    %833 = vmatpush2.msra.mxu0 0.0
    %834 = vmatprep.subr.mxu0 0.0
    %835 = vmatpush2.msra.mxu0 0.0
    %836 = vmatprep.subr.mxu0 0.0
    %837 = vmatpush2.msra.mxu0 0.0
    %838 = vmatprep.subr.mxu0 0.0
    %839 = vmatpush2.msra.mxu0 0.0
    %840 = vmatprep.subr.mxu0 0.0
    %841 = vmatpush2.msra.mxu0 0.0
    %842 = vmatprep.subr.mxu0 0.0
    %843 = vmatpush2.msra.mxu0 0.0
    %844 = vmatprep.mubr.f32.mxu0 0.0
    %845 = vmatmul.mubr.f32.gmra.mxu0 %v778
    %v846 = vpop.f32.mrf.mxu0
    %v847 = vadd.f32 %v776, %v846
    %v848 = vpop.f32.mrf.mxu0
    %849 = vdwg.mxu0
    %v850 = vld [vmem:[%s5] sm:$0xff]
    %v851 = vld [vmem:[%s5 + $0x8] sm:$0xff]
    %v852 = vld [vmem:[%s5 + $0x10] sm:$0xff]
    %v853 = vld [vmem:[%s5 + $0x18] sm:$0xff]
    %v854 = vld [vmem:[%s5 + $0x20] sm:$0xff]
    %v855 = vld [vmem:[%s5 + $0x28] sm:$0xff]
    %v856 = vld [vmem:[%s5 + $0x30] sm:$0xff]
    %v857 = vld [vmem:[%s5 + $0x38] sm:$0xff]
    %v858 = vld [vmem:[#allocation8] sm:$0x1]
    %v860 = vlaneseq
    %v861 = vshrl.u32 %v860, 7
    %v862 = vsub.s32 0, %v861
    %v863 = vrot.slane %v858, %v862
    %v865 = vsel %vm310, %v523, 0
    %867 = vmatprep.subr.mxu0 0.0
    %868 = vmatpush1.msra.mxu0 0.0
    %869 = vmatprep.subr.mxu0 0.0
    %870 = vmatpush1.msra.mxu0 0.0
    %871 = vmatprep.subr.mxu0 0.0
    %872 = vmatpush1.msra.mxu0 0.0
    %873 = vmatprep.subr.mxu0 0.0
    %874 = vmatpush1.msra.mxu0 0.0
    %875 = vmatprep.subr.mxu0 0.0
    %876 = vmatpush1.msra.mxu0 0.0
    %877 = vmatprep.subr.mxu0 0.0
    %878 = vmatpush1.msra.mxu0 0.0
    %879 = vmatprep.subr.mxu0 0.0
    %880 = vmatpush1.msra.mxu0 0.0
    %881 = vmatprep.subr.mxu0 0.0
    %882 = vmatpush1.msra.mxu0 0.0
    %883 = vmatprep.subr.mxu0 0.0
    %884 = vmatpush1.msra.mxu0 %v857
    %885 = vmatprep.subr.mxu0 0.0
    %886 = vmatpush1.msra.mxu0 %v856
    %887 = vmatprep.subr.mxu0 0.0
    %888 = vmatpush1.msra.mxu0 %v855
    %889 = vmatprep.subr.mxu0 0.0
    %890 = vmatpush1.msra.mxu0 %v854
    %891 = vmatprep.subr.mxu0 0.0
    %892 = vmatpush1.msra.mxu0 %v853
    %893 = vmatprep.subr.mxu0 0.0
    %894 = vmatpush1.msra.mxu0 %v852
    %895 = vmatprep.subr.mxu0 0.0
    %896 = vmatpush1.msra.mxu0 %v851
    %897 = vmatprep.subr.mxu0 0.0
    %898 = vmatpush1.msra.mxu0 %v850
    %899 = vmatprep.subr.mxu0 0.0
    %900 = vmatpush2.msra.mxu0 0.0
    %901 = vmatprep.subr.mxu0 0.0
    %902 = vmatpush2.msra.mxu0 0.0
    %903 = vmatprep.subr.mxu0 0.0
    %904 = vmatpush2.msra.mxu0 0.0
    %905 = vmatprep.subr.mxu0 0.0
    %906 = vmatpush2.msra.mxu0 0.0
    %907 = vmatprep.subr.mxu0 0.0
    %908 = vmatpush2.msra.mxu0 0.0
    %909 = vmatprep.subr.mxu0 0.0
    %910 = vmatpush2.msra.mxu0 0.0
    %911 = vmatprep.subr.mxu0 0.0
    %912 = vmatpush2.msra.mxu0 0.0
    %913 = vmatprep.subr.mxu0 0.0
    %914 = vmatpush2.msra.mxu0 0.0
    %915 = vmatprep.subr.mxu0 0.0
    %916 = vmatpush2.msra.mxu0 0.0
    %917 = vmatprep.subr.mxu0 0.0
    %918 = vmatpush2.msra.mxu0 0.0
    %919 = vmatprep.subr.mxu0 0.0
    %920 = vmatpush2.msra.mxu0 0.0
    %921 = vmatprep.subr.mxu0 0.0
    %922 = vmatpush2.msra.mxu0 0.0
    %923 = vmatprep.subr.mxu0 0.0
    %924 = vmatpush2.msra.mxu0 0.0
    %925 = vmatprep.subr.mxu0 0.0
    %926 = vmatpush2.msra.mxu0 0.0
    %927 = vmatprep.subr.mxu0 0.0
    %928 = vmatpush2.msra.mxu0 0.0
    %929 = vmatprep.subr.mxu0 0.0
    %930 = vmatpush2.msra.mxu0 0.0
    %931 = vmatprep.mubr.f32.mxu0 0.0
    %932 = vmatmul.mubr.f32.gmra.mxu0 %v865
    %v933 = vpop.f32.mrf.mxu0
    %v934 = vadd.f32 %v863, %v933
    %v935 = vpop.f32.mrf.mxu0
    %936 = vdwg.mxu0
    %v937 = vmax.f32 %v934, 0.0
    %v938 = vld [vmem:[#allocation10] sm:$0xff]
    %v939 = vld [vmem:[#allocation10 + $0x8] sm:$0xff]
    %v940 = vld [vmem:[#allocation10 + $0x10] sm:$0xff]
    %v941 = vld [vmem:[#allocation10 + $0x18] sm:$0xff]
    %v942 = vld [vmem:[#allocation11] sm:$0x1]
    %v944 = vlaneseq
    %v945 = vshrl.u32 %v944, 7
    %v946 = vsub.s32 0, %v945
    %v947 = vrot.slane %v942, %v946
    %v950 = vsel %vm423, %v937, 0
    %952 = vmatprep.subr.mxu0 0.0
    %953 = vmatpush1.msra.mxu0 0.0
    %954 = vmatprep.subr.mxu0 0.0
    %955 = vmatpush1.msra.mxu0 0.0
    %956 = vmatprep.subr.mxu0 0.0
    %957 = vmatpush1.msra.mxu0 0.0
    %958 = vmatprep.subr.mxu0 0.0
    %959 = vmatpush1.msra.mxu0 0.0
    %960 = vmatprep.subr.mxu0 0.0
    %961 = vmatpush1.msra.mxu0 0.0
    %962 = vmatprep.subr.mxu0 0.0
    %963 = vmatpush1.msra.mxu0 0.0
    %964 = vmatprep.subr.mxu0 0.0
    %965 = vmatpush1.msra.mxu0 0.0
    %966 = vmatprep.subr.mxu0 0.0
    %967 = vmatpush1.msra.mxu0 0.0
    %968 = vmatprep.subr.mxu0 0.0
    %969 = vmatpush1.msra.mxu0 0.0
    %970 = vmatprep.subr.mxu0 0.0
    %971 = vmatpush1.msra.mxu0 0.0
    %972 = vmatprep.subr.mxu0 0.0
    %973 = vmatpush1.msra.mxu0 0.0
    %974 = vmatprep.subr.mxu0 0.0
    %975 = vmatpush1.msra.mxu0 0.0
    %976 = vmatprep.subr.mxu0 0.0
    %977 = vmatpush1.msra.mxu0 %v941
    %978 = vmatprep.subr.mxu0 0.0
    %979 = vmatpush1.msra.mxu0 %v940
    %980 = vmatprep.subr.mxu0 0.0
    %981 = vmatpush1.msra.mxu0 %v939
    %982 = vmatprep.subr.mxu0 0.0
    %983 = vmatpush1.msra.mxu0 %v938
    %984 = vmatprep.subr.mxu0 0.0
    %985 = vmatpush2.msra.mxu0 0.0
    %986 = vmatprep.subr.mxu0 0.0
    %987 = vmatpush2.msra.mxu0 0.0
    %988 = vmatprep.subr.mxu0 0.0
    %989 = vmatpush2.msra.mxu0 0.0
    %990 = vmatprep.subr.mxu0 0.0
    %991 = vmatpush2.msra.mxu0 0.0
    %992 = vmatprep.subr.mxu0 0.0
    %993 = vmatpush2.msra.mxu0 0.0
    %994 = vmatprep.subr.mxu0 0.0
    %995 = vmatpush2.msra.mxu0 0.0
    %996 = vmatprep.subr.mxu0 0.0
    %997 = vmatpush2.msra.mxu0 0.0
    %998 = vmatprep.subr.mxu0 0.0
    %999 = vmatpush2.msra.mxu0 0.0
    %1000 = vmatprep.subr.mxu0 0.0
    %1001 = vmatpush2.msra.mxu0 0.0
    %1002 = vmatprep.subr.mxu0 0.0
    %1003 = vmatpush2.msra.mxu0 0.0
    %1004 = vmatprep.subr.mxu0 0.0
    %1005 = vmatpush2.msra.mxu0 0.0
    %1006 = vmatprep.subr.mxu0 0.0
    %1007 = vmatpush2.msra.mxu0 0.0
    %1008 = vmatprep.subr.mxu0 0.0
    %1009 = vmatpush2.msra.mxu0 0.0
    %1010 = vmatprep.subr.mxu0 0.0
    %1011 = vmatpush2.msra.mxu0 0.0
    %1012 = vmatprep.subr.mxu0 0.0
    %1013 = vmatpush2.msra.mxu0 0.0
    %1014 = vmatprep.subr.mxu0 0.0
    %1015 = vmatpush2.msra.mxu0 0.0
    %1016 = vmatprep.mubr.f32.mxu0 0.0
    %1017 = vmatmul.mubr.f32.gmra.mxu0 %v950
    %v1018 = vpop.f32.mrf.mxu0
    %v1019 = vadd.f32 %v947, %v1018
    %v1020 = vpop.f32.mrf.mxu0
    %1021 = vdwg.mxu0
    %v1022 = vmax.f32 %v1019, 0.0
    %v1023 = vpack.c.bf16 %v1022, %v1022
    %v1024 = vld [vmem:[%s9] sm:$0xff]
    %v1025 = vld [vmem:[%s9 + $0x8] sm:$0xff]
    %v1026 = vld [vmem:[%s9 + $0x10] sm:$0xff]
    %v1027 = vld [vmem:[%s9 + $0x18] sm:$0xff]
    %v1028 = vld [vmem:[%s9 + $0x20] sm:$0xff]
    %v1029 = vld [vmem:[%s9 + $0x28] sm:$0xff]
    %v1030 = vld [vmem:[%s9 + $0x30] sm:$0xff]
    %v1031 = vld [vmem:[%s9 + $0x38] sm:$0xff]
    %v1032 = vld [vmem:[%s9 + $0x40] sm:$0xff]
    %v1033 = vld [vmem:[%s9 + $0x48] sm:$0xff]
    %v1034 = vld [vmem:[%s9 + $0x50] sm:$0xff]
    %v1035 = vld [vmem:[%s9 + $0x58] sm:$0xff]
    %v1036 = vld [vmem:[%s9 + $0x60] sm:$0xff]
    %v1037 = vld [vmem:[%s9 + $0x68] sm:$0xff]
    %v1038 = vld [vmem:[%s9 + $0x70] sm:$0xff]
    %v1039 = vld [vmem:[%s9 + $0x78] sm:$0xff]
    %v1040 = vld [vmem:[%s9 + $0x80] sm:$0xff]
    %v1041 = vld [vmem:[%s9 + $0x88] sm:$0xff]
    %v1042 = vld [vmem:[%s9 + $0x90] sm:$0xff]
    %v1043 = vld [vmem:[%s9 + $0x98] sm:$0xff]
    %v1044 = vld [vmem:[%s9 + $0xa0] sm:$0xff]
    %v1045 = vld [vmem:[%s9 + $0xa8] sm:$0xff]
    %v1046 = vld [vmem:[%s9 + $0xb0] sm:$0xff]
    %v1047 = vld [vmem:[%s9 + $0xb8] sm:$0xff]
    %v1048 = vld [vmem:[%s9 + $0xc0] sm:$0xff]
    %v1049 = vld [vmem:[%s9 + $0xc8] sm:$0xff]
    %v1050 = vld [vmem:[%s9 + $0xd0] sm:$0xff]
    %v1051 = vld [vmem:[%s9 + $0xd8] sm:$0xff]
    %v1052 = vld [vmem:[%s9 + $0xe0] sm:$0xff]
    %v1053 = vld [vmem:[%s9 + $0xe8] sm:$0xff]
    %v1054 = vld [vmem:[%s9 + $0xf0] sm:$0xff]
    %v1055 = vld [vmem:[%s9 + $0xf8] sm:$0xff]
    %v1056 = vld [vmem:[#allocation13] sm:$0xf]
    %v1058 = vlaneseq
    %v1059 = vshrl.u32 %v1058, 7
    %v1060 = vsub.s32 0, %v1059
    %v1061 = vrot.slane %v1056, %v1060
    %v1062 = vlaneseq
    %v1063 = vshrl.u32 %v1062, 7
    %v1064 = vsub.s32 1, %v1063
    %v1065 = vrot.slane %v1056, %v1064
    %v1066 = vlaneseq
    %v1067 = vshrl.u32 %v1066, 7
    %v1068 = vsub.s32 2, %v1067
    %v1069 = vrot.slane %v1056, %v1068
    %v1070 = vlaneseq
    %v1071 = vshrl.u32 %v1070, 7
    %v1072 = vsub.s32 3, %v1071
    %v1073 = vrot.slane %v1056, %v1072
    %v1110 = vunpack.c.l.b16 %v1024
    %v1111 = vunpack.c.h.b16 %v1024
    %v1112 = vunpack.c.l.b16 %v1025
    %v1113 = vunpack.c.h.b16 %v1025
    %v1114 = vunpack.c.l.b16 %v1026
    %v1115 = vunpack.c.h.b16 %v1026
    %v1116 = vunpack.c.l.b16 %v1027
    %v1117 = vunpack.c.h.b16 %v1027
    %v1118 = vunpack.c.l.b16 %v1028
    %v1119 = vunpack.c.h.b16 %v1028
    %v1120 = vunpack.c.l.b16 %v1029
    %v1121 = vunpack.c.h.b16 %v1029
    %v1122 = vunpack.c.l.b16 %v1030
    %v1123 = vunpack.c.h.b16 %v1030
    %v1124 = vunpack.c.l.b16 %v1031
    %v1125 = vunpack.c.h.b16 %v1031
    %v1126 = vunpack.c.l.b16 %v1032
    %v1127 = vunpack.c.h.b16 %v1032
    %v1128 = vunpack.c.l.b16 %v1033
    %v1129 = vunpack.c.h.b16 %v1033
    %v1130 = vunpack.c.l.b16 %v1034
    %v1131 = vunpack.c.h.b16 %v1034
    %v1132 = vunpack.c.l.b16 %v1035
    %v1133 = vunpack.c.h.b16 %v1035
    %v1134 = vunpack.c.l.b16 %v1036
    %v1135 = vunpack.c.h.b16 %v1036
    %v1136 = vunpack.c.l.b16 %v1037
    %v1137 = vunpack.c.h.b16 %v1037
    %v1138 = vunpack.c.l.b16 %v1038
    %v1139 = vunpack.c.h.b16 %v1038
    %v1140 = vunpack.c.l.b16 %v1039
    %v1141 = vunpack.c.h.b16 %v1039
    %v1142 = vunpack.c.l.b16 %v1040
    %v1143 = vunpack.c.h.b16 %v1040
    %v1144 = vunpack.c.l.b16 %v1041
    %v1145 = vunpack.c.h.b16 %v1041
    %v1146 = vunpack.c.l.b16 %v1042
    %v1147 = vunpack.c.h.b16 %v1042
    %v1148 = vunpack.c.l.b16 %v1043
    %v1149 = vunpack.c.h.b16 %v1043
    %v1150 = vunpack.c.l.b16 %v1044
    %v1151 = vunpack.c.h.b16 %v1044
    %v1152 = vunpack.c.l.b16 %v1045
    %v1153 = vunpack.c.h.b16 %v1045
    %v1154 = vunpack.c.l.b16 %v1046
    %v1155 = vunpack.c.h.b16 %v1046
    %v1156 = vunpack.c.l.b16 %v1047
    %v1157 = vunpack.c.h.b16 %v1047
    %v1158 = vunpack.c.l.b16 %v1048
    %v1159 = vunpack.c.h.b16 %v1048
    %v1160 = vunpack.c.l.b16 %v1049
    %v1161 = vunpack.c.h.b16 %v1049
    %v1162 = vunpack.c.l.b16 %v1050
    %v1163 = vunpack.c.h.b16 %v1050
    %v1164 = vunpack.c.l.b16 %v1051
    %v1165 = vunpack.c.h.b16 %v1051
    %v1166 = vunpack.c.l.b16 %v1052
    %v1167 = vunpack.c.h.b16 %v1052
    %v1168 = vunpack.c.l.b16 %v1053
    %v1169 = vunpack.c.h.b16 %v1053
    %v1170 = vunpack.c.l.b16 %v1054
    %v1171 = vunpack.c.h.b16 %v1054
    %v1172 = vunpack.c.l.b16 %v1055
    %v1173 = vunpack.c.h.b16 %v1055
    %v1174 = vpack.c.b16 %v1114, %v1110
    %v1175 = vpack.c.b16 %v1115, %v1111
    %v1176 = vpack.c.b16 %v1116, %v1112
    %v1177 = vpack.c.b16 %v1117, %v1113
    %v1178 = vpack.c.b16 %v1122, %v1118
    %v1179 = vpack.c.b16 %v1123, %v1119
    %v1180 = vpack.c.b16 %v1124, %v1120
    %v1181 = vpack.c.b16 %v1125, %v1121
    %v1182 = vpack.c.b16 %v1130, %v1126
    %v1183 = vpack.c.b16 %v1131, %v1127
    %v1184 = vpack.c.b16 %v1132, %v1128
    %v1185 = vpack.c.b16 %v1133, %v1129
    %v1186 = vpack.c.b16 %v1138, %v1134
    %v1187 = vpack.c.b16 %v1139, %v1135
    %v1188 = vpack.c.b16 %v1140, %v1136
    %v1189 = vpack.c.b16 %v1141, %v1137
    %v1190 = vpack.c.b16 %v1146, %v1142
    %v1191 = vpack.c.b16 %v1147, %v1143
    %v1192 = vpack.c.b16 %v1148, %v1144
    %v1193 = vpack.c.b16 %v1149, %v1145
    %v1194 = vpack.c.b16 %v1154, %v1150
    %v1195 = vpack.c.b16 %v1155, %v1151
    %v1196 = vpack.c.b16 %v1156, %v1152
    %v1197 = vpack.c.b16 %v1157, %v1153
    %v1198 = vpack.c.b16 %v1162, %v1158
    %v1199 = vpack.c.b16 %v1163, %v1159
    %v1200 = vpack.c.b16 %v1164, %v1160
    %v1201 = vpack.c.b16 %v1165, %v1161
    %v1202 = vpack.c.b16 %v1170, %v1166
    %v1203 = vpack.c.b16 %v1171, %v1167
    %v1204 = vpack.c.b16 %v1172, %v1168
    %v1205 = vpack.c.b16 %v1173, %v1169
    %1238 = vmatprep.subr.bf16.mxu0 %v1203
    %1239 = vmatpush1.bf16.msra.mxu0 %v1202
    %1240 = vmatprep.subr.bf16.mxu0 %v1199
    %1241 = vmatpush1.bf16.msra.mxu0 %v1198
    %1242 = vmatprep.subr.bf16.mxu0 %v1195
    %1243 = vmatpush1.bf16.msra.mxu0 %v1194
    %1244 = vmatprep.subr.bf16.mxu0 %v1191
    %1245 = vmatpush1.bf16.msra.mxu0 %v1190
    %1246 = vmatprep.subr.bf16.mxu0 %v1187
    %1247 = vmatpush1.bf16.msra.mxu0 %v1186
    %1248 = vmatprep.subr.bf16.mxu0 %v1183
    %1249 = vmatpush1.bf16.msra.mxu0 %v1182
    %1250 = vmatprep.subr.bf16.mxu0 %v1179
    %1251 = vmatpush1.bf16.msra.mxu0 %v1178
    %1252 = vmatprep.subr.bf16.mxu0 %v1175
    %1253 = vmatpush1.bf16.msra.mxu0 %v1174
    %1254 = vmatprep.subr.bf16.mxu0 0
    %1255 = vmatpush2.bf16.msra.mxu0 0
    %1256 = vmatprep.subr.bf16.mxu0 0
    %1257 = vmatpush2.bf16.msra.mxu0 0
    %1258 = vmatprep.subr.bf16.mxu0 0
    %1259 = vmatpush2.bf16.msra.mxu0 0
    %1260 = vmatprep.subr.bf16.mxu0 0
    %1261 = vmatpush2.bf16.msra.mxu0 0
    %1262 = vmatprep.subr.bf16.mxu0 0
    %1263 = vmatpush2.bf16.msra.mxu0 0
    %1264 = vmatprep.subr.bf16.mxu0 0
    %1265 = vmatpush2.bf16.msra.mxu0 0
    %1266 = vmatprep.subr.bf16.mxu0 0
    %1267 = vmatpush2.bf16.msra.mxu0 0
    %1268 = vmatprep.subr.bf16.mxu0 0
    %1269 = vmatpush2.bf16.msra.mxu0 0
    %1270 = vmatprep.mubr.bf16.mxu0 0
    %1271 = vmatmul.mubr.bf16.gmra.mxu0 %v1023
    %v1272 = vpop.f32.mrf.mxu0
    %v1273 = vadd.f32 %v1061, %v1272
    %v1274 = vpop.f32.mrf.mxu0
    %v1275 = vadd.f32 %v1065, %v1274
    %v1276 = vpop.f32.mrf.mxu0
    %v1277 = vpop.f32.mrf.mxu0
    %1278 = vdwg.mxu0
    %1279 = vmatprep.subr.bf16.mxu0 %v1205
    %1280 = vmatpush1.bf16.msra.mxu0 %v1204
    %1281 = vmatprep.subr.bf16.mxu0 %v1201
    %1282 = vmatpush1.bf16.msra.mxu0 %v1200
    %1283 = vmatprep.subr.bf16.mxu0 %v1197
    %1284 = vmatpush1.bf16.msra.mxu0 %v1196
    %1285 = vmatprep.subr.bf16.mxu0 %v1193
    %1286 = vmatpush1.bf16.msra.mxu0 %v1192
    %1287 = vmatprep.subr.bf16.mxu0 %v1189
    %1288 = vmatpush1.bf16.msra.mxu0 %v1188
    %1289 = vmatprep.subr.bf16.mxu0 %v1185
    %1290 = vmatpush1.bf16.msra.mxu0 %v1184
    %1291 = vmatprep.subr.bf16.mxu0 %v1181
    %1292 = vmatpush1.bf16.msra.mxu0 %v1180
    %1293 = vmatprep.subr.bf16.mxu0 %v1177
    %1294 = vmatpush1.bf16.msra.mxu0 %v1176
    %1295 = vmatprep.subr.bf16.mxu0 0
    %1296 = vmatpush2.bf16.msra.mxu0 0
    %1297 = vmatprep.subr.bf16.mxu0 0
    %1298 = vmatpush2.bf16.msra.mxu0 0
    %1299 = vmatprep.subr.bf16.mxu0 0
    %1300 = vmatpush2.bf16.msra.mxu0 0
    %1301 = vmatprep.subr.bf16.mxu0 0
    %1302 = vmatpush2.bf16.msra.mxu0 0
    %1303 = vmatprep.subr.bf16.mxu0 0
    %1304 = vmatpush2.bf16.msra.mxu0 0
    %1305 = vmatprep.subr.bf16.mxu0 0
    %1306 = vmatpush2.bf16.msra.mxu0 0
    %1307 = vmatprep.subr.bf16.mxu0 0
    %1308 = vmatpush2.bf16.msra.mxu0 0
    %1309 = vmatprep.subr.bf16.mxu0 0
    %1310 = vmatpush2.bf16.msra.mxu0 0
    %1311 = vmatprep.mubr.bf16.mxu0 0
    %1312 = vmatmul.mubr.bf16.gmra.mxu0 %v1023
    %v1313 = vpop.f32.mrf.mxu0
    %v1314 = vadd.f32 %v1069, %v1313
    %v1315 = vpop.f32.mrf.mxu0
    %v1316 = vadd.f32 %v1073, %v1315
    %v1317 = vpop.f32.mrf.mxu0
    %v1318 = vpop.f32.mrf.mxu0
    %1319 = vdwg.mxu0
    %v1320 = vld [vmem:[#allocation14] sm:$0xff]
    %v1321 = vld [vmem:[#allocation14 + $0x8] sm:$0xff]
    %v1322 = vld [vmem:[#allocation14 + $0x10] sm:$0xff]
    %v1323 = vld [vmem:[#allocation14 + $0x18] sm:$0xff]
    %v1324 = vld [vmem:[#allocation14 + $0x20] sm:$0xff]
    %v1325 = vld [vmem:[#allocation14 + $0x28] sm:$0xff]
    %v1326 = vld [vmem:[#allocation14 + $0x30] sm:$0xff]
    %v1327 = vld [vmem:[#allocation14 + $0x38] sm:$0xff]
    %v1328 = vld [vmem:[#allocation14 + $0x40] sm:$0xff]
    %v1329 = vld [vmem:[#allocation14 + $0x48] sm:$0xff]
    %v1330 = vld [vmem:[#allocation14 + $0x50] sm:$0xff]
    %v1331 = vld [vmem:[#allocation14 + $0x58] sm:$0xff]
    %v1332 = vld [vmem:[#allocation14 + $0x60] sm:$0xff]
    %v1333 = vld [vmem:[#allocation14 + $0x68] sm:$0xff]
    %v1334 = vld [vmem:[#allocation14 + $0x70] sm:$0xff]
    %v1335 = vld [vmem:[#allocation14 + $0x78] sm:$0xff]
    %v1336 = vld [vmem:[#allocation14 + $0x80] sm:$0xff]
    %v1337 = vld [vmem:[#allocation14 + $0x88] sm:$0xff]
    %v1338 = vld [vmem:[#allocation14 + $0x90] sm:$0xff]
    %v1339 = vld [vmem:[#allocation14 + $0x98] sm:$0xff]
    %v1340 = vld [vmem:[#allocation14 + $0xa0] sm:$0xff]
    %v1341 = vld [vmem:[#allocation14 + $0xa8] sm:$0xff]
    %v1342 = vld [vmem:[#allocation14 + $0xb0] sm:$0xff]
    %v1343 = vld [vmem:[#allocation14 + $0xb8] sm:$0xff]
    %v1344 = vld [vmem:[#allocation14 + $0xc0] sm:$0xff]
    %v1345 = vld [vmem:[#allocation14 + $0xc8] sm:$0xff]
    %v1346 = vld [vmem:[#allocation14 + $0xd0] sm:$0xff]
    %v1347 = vld [vmem:[#allocation14 + $0xd8] sm:$0xff]
    %v1348 = vld [vmem:[#allocation14 + $0xe0] sm:$0xff]
    %v1349 = vld [vmem:[#allocation14 + $0xe8] sm:$0xff]
    %v1350 = vld [vmem:[#allocation14 + $0xf0] sm:$0xff]
    %v1351 = vld [vmem:[#allocation14 + $0xf8] sm:$0xff]
    %v1384 = vunpack.c.l.b16 %v1320
    %v1385 = vunpack.c.h.b16 %v1320
    %v1386 = vunpack.c.l.b16 %v1321
    %v1387 = vunpack.c.h.b16 %v1321
    %v1388 = vunpack.c.l.b16 %v1322
    %v1389 = vunpack.c.h.b16 %v1322
    %v1390 = vunpack.c.l.b16 %v1323
    %v1391 = vunpack.c.h.b16 %v1323
    %v1392 = vunpack.c.l.b16 %v1324
    %v1393 = vunpack.c.h.b16 %v1324
    %v1394 = vunpack.c.l.b16 %v1325
    %v1395 = vunpack.c.h.b16 %v1325
    %v1396 = vunpack.c.l.b16 %v1326
    %v1397 = vunpack.c.h.b16 %v1326
    %v1398 = vunpack.c.l.b16 %v1327
    %v1399 = vunpack.c.h.b16 %v1327
    %v1400 = vunpack.c.l.b16 %v1328
    %v1401 = vunpack.c.h.b16 %v1328
    %v1402 = vunpack.c.l.b16 %v1329
    %v1403 = vunpack.c.h.b16 %v1329
    %v1404 = vunpack.c.l.b16 %v1330
    %v1405 = vunpack.c.h.b16 %v1330
    %v1406 = vunpack.c.l.b16 %v1331
    %v1407 = vunpack.c.h.b16 %v1331
    %v1408 = vunpack.c.l.b16 %v1332
    %v1409 = vunpack.c.h.b16 %v1332
    %v1410 = vunpack.c.l.b16 %v1333
    %v1411 = vunpack.c.h.b16 %v1333
    %v1412 = vunpack.c.l.b16 %v1334
    %v1413 = vunpack.c.h.b16 %v1334
    %v1414 = vunpack.c.l.b16 %v1335
    %v1415 = vunpack.c.h.b16 %v1335
    %v1416 = vunpack.c.l.b16 %v1336
    %v1417 = vunpack.c.h.b16 %v1336
    %v1418 = vunpack.c.l.b16 %v1337
    %v1419 = vunpack.c.h.b16 %v1337
    %v1420 = vunpack.c.l.b16 %v1338
    %v1421 = vunpack.c.h.b16 %v1338
    %v1422 = vunpack.c.l.b16 %v1339
    %v1423 = vunpack.c.h.b16 %v1339
    %v1424 = vunpack.c.l.b16 %v1340
    %v1425 = vunpack.c.h.b16 %v1340
    %v1426 = vunpack.c.l.b16 %v1341
    %v1427 = vunpack.c.h.b16 %v1341
    %v1428 = vunpack.c.l.b16 %v1342
    %v1429 = vunpack.c.h.b16 %v1342
    %v1430 = vunpack.c.l.b16 %v1343
    %v1431 = vunpack.c.h.b16 %v1343
    %v1432 = vunpack.c.l.b16 %v1344
    %v1433 = vunpack.c.h.b16 %v1344
    %v1434 = vunpack.c.l.b16 %v1345
    %v1435 = vunpack.c.h.b16 %v1345
    %v1436 = vunpack.c.l.b16 %v1346
    %v1437 = vunpack.c.h.b16 %v1346
    %v1438 = vunpack.c.l.b16 %v1347
    %v1439 = vunpack.c.h.b16 %v1347
    %v1440 = vunpack.c.l.b16 %v1348
    %v1441 = vunpack.c.h.b16 %v1348
    %v1442 = vunpack.c.l.b16 %v1349
    %v1443 = vunpack.c.h.b16 %v1349
    %v1444 = vunpack.c.l.b16 %v1350
    %v1445 = vunpack.c.h.b16 %v1350
    %v1446 = vunpack.c.l.b16 %v1351
    %v1447 = vunpack.c.h.b16 %v1351
    %v1448 = vpack.c.b16 %v1388, %v1384
    %v1449 = vpack.c.b16 %v1389, %v1385
    %v1450 = vpack.c.b16 %v1390, %v1386
    %v1451 = vpack.c.b16 %v1391, %v1387
    %v1452 = vpack.c.b16 %v1396, %v1392
    %v1453 = vpack.c.b16 %v1397, %v1393
    %v1454 = vpack.c.b16 %v1398, %v1394
    %v1455 = vpack.c.b16 %v1399, %v1395
    %v1456 = vpack.c.b16 %v1404, %v1400
    %v1457 = vpack.c.b16 %v1405, %v1401
    %v1458 = vpack.c.b16 %v1406, %v1402
    %v1459 = vpack.c.b16 %v1407, %v1403
    %v1460 = vpack.c.b16 %v1412, %v1408
    %v1461 = vpack.c.b16 %v1413, %v1409
    %v1462 = vpack.c.b16 %v1414, %v1410
    %v1463 = vpack.c.b16 %v1415, %v1411
    %v1464 = vpack.c.b16 %v1420, %v1416
    %v1465 = vpack.c.b16 %v1421, %v1417
    %v1466 = vpack.c.b16 %v1422, %v1418
    %v1467 = vpack.c.b16 %v1423, %v1419
    %v1468 = vpack.c.b16 %v1428, %v1424
    %v1469 = vpack.c.b16 %v1429, %v1425
    %v1470 = vpack.c.b16 %v1430, %v1426
    %v1471 = vpack.c.b16 %v1431, %v1427
    %v1472 = vpack.c.b16 %v1436, %v1432
    %v1473 = vpack.c.b16 %v1437, %v1433
    %v1474 = vpack.c.b16 %v1438, %v1434
    %v1475 = vpack.c.b16 %v1439, %v1435
    %v1476 = vpack.c.b16 %v1444, %v1440
    %v1477 = vpack.c.b16 %v1445, %v1441
    %v1478 = vpack.c.b16 %v1446, %v1442
    %v1479 = vpack.c.b16 %v1447, %v1443
    %1512 = vmatprep.subr.bf16.mxu0 %v1477
    %1513 = vmatpush1.bf16.msra.mxu0 %v1476
    %1514 = vmatprep.subr.bf16.mxu0 %v1473
    %1515 = vmatpush1.bf16.msra.mxu0 %v1472
    %1516 = vmatprep.subr.bf16.mxu0 %v1469
    %1517 = vmatpush1.bf16.msra.mxu0 %v1468
    %1518 = vmatprep.subr.bf16.mxu0 %v1465
    %1519 = vmatpush1.bf16.msra.mxu0 %v1464
    %1520 = vmatprep.subr.bf16.mxu0 %v1461
    %1521 = vmatpush1.bf16.msra.mxu0 %v1460
    %1522 = vmatprep.subr.bf16.mxu0 %v1457
    %1523 = vmatpush1.bf16.msra.mxu0 %v1456
    %1524 = vmatprep.subr.bf16.mxu0 %v1453
    %1525 = vmatpush1.bf16.msra.mxu0 %v1452
    %1526 = vmatprep.subr.bf16.mxu0 %v1449
    %1527 = vmatpush1.bf16.msra.mxu0 %v1448
    %1528 = vmatprep.subr.bf16.mxu0 0
    %1529 = vmatpush2.bf16.msra.mxu0 0
    %1530 = vmatprep.subr.bf16.mxu0 0
    %1531 = vmatpush2.bf16.msra.mxu0 0
    %1532 = vmatprep.subr.bf16.mxu0 0
    %1533 = vmatpush2.bf16.msra.mxu0 0
    %1534 = vmatprep.subr.bf16.mxu0 0
    %1535 = vmatpush2.bf16.msra.mxu0 0
    %1536 = vmatprep.subr.bf16.mxu0 0
    %1537 = vmatpush2.bf16.msra.mxu0 0
    %1538 = vmatprep.subr.bf16.mxu0 0
    %1539 = vmatpush2.bf16.msra.mxu0 0
    %1540 = vmatprep.subr.bf16.mxu0 0
    %1541 = vmatpush2.bf16.msra.mxu0 0
    %1542 = vmatprep.subr.bf16.mxu0 0
    %1543 = vmatpush2.bf16.msra.mxu0 0
    %1544 = vmatprep.mubr.bf16.mxu0 0
    %1545 = vmatmul.mubr.bf16.gmra.mxu0 0
    %v1546 = vpop.f32.mrf.mxu0
    %v1547 = vadd.f32 0.0, %v1546
    %v1548 = vpop.f32.mrf.mxu0
    %v1549 = vadd.f32 0.0, %v1548
    %v1550 = vpop.f32.mrf.mxu0
    %v1551 = vpop.f32.mrf.mxu0
    %1552 = vdwg.mxu0
    %1553 = vmatprep.subr.bf16.mxu0 %v1479
    %1554 = vmatpush1.bf16.msra.mxu0 %v1478
    %1555 = vmatprep.subr.bf16.mxu0 %v1475
    %1556 = vmatpush1.bf16.msra.mxu0 %v1474
    %1557 = vmatprep.subr.bf16.mxu0 %v1471
    %1558 = vmatpush1.bf16.msra.mxu0 %v1470
    %1559 = vmatprep.subr.bf16.mxu0 %v1467
    %1560 = vmatpush1.bf16.msra.mxu0 %v1466
    %1561 = vmatprep.subr.bf16.mxu0 %v1463
    %1562 = vmatpush1.bf16.msra.mxu0 %v1462
    %1563 = vmatprep.subr.bf16.mxu0 %v1459
    %1564 = vmatpush1.bf16.msra.mxu0 %v1458
    %1565 = vmatprep.subr.bf16.mxu0 %v1455
    %1566 = vmatpush1.bf16.msra.mxu0 %v1454
    %1567 = vmatprep.subr.bf16.mxu0 %v1451
    %1568 = vmatpush1.bf16.msra.mxu0 %v1450
    %1569 = vmatprep.subr.bf16.mxu0 0
    %1570 = vmatpush2.bf16.msra.mxu0 0
    %1571 = vmatprep.subr.bf16.mxu0 0
    %1572 = vmatpush2.bf16.msra.mxu0 0
    %1573 = vmatprep.subr.bf16.mxu0 0
    %1574 = vmatpush2.bf16.msra.mxu0 0
    %1575 = vmatprep.subr.bf16.mxu0 0
    %1576 = vmatpush2.bf16.msra.mxu0 0
    %1577 = vmatprep.subr.bf16.mxu0 0
    %1578 = vmatpush2.bf16.msra.mxu0 0
    %1579 = vmatprep.subr.bf16.mxu0 0
    %1580 = vmatpush2.bf16.msra.mxu0 0
    %1581 = vmatprep.subr.bf16.mxu0 0
    %1582 = vmatpush2.bf16.msra.mxu0 0
    %1583 = vmatprep.subr.bf16.mxu0 0
    %1584 = vmatpush2.bf16.msra.mxu0 0
    %1585 = vmatprep.mubr.bf16.mxu0 0
    %1586 = vmatmul.mubr.bf16.gmra.mxu0 0
    %v1587 = vpop.f32.mrf.mxu0
    %v1588 = vadd.f32 0.0, %v1587
    %v1589 = vpop.f32.mrf.mxu0
    %v1590 = vadd.f32 0.0, %v1589
    %v1591 = vpop.f32.mrf.mxu0
    %v1592 = vpop.f32.mrf.mxu0
    %1593 = vdwg.mxu0
    %v1594 = vadd.f32 %v1273, %v1547
    %v1595 = vadd.f32 %v1275, %v1549
    %v1596 = vadd.f32 %v1314, %v1588
    %v1597 = vadd.f32 %v1316, %v1590
    %v1598 = vxor.u32 %v1594, 2147483648
    %v1599 = vxor.u32 %v1595, 2147483648
    %v1600 = vxor.u32 %v1596, 2147483648
    %v1601 = vxor.u32 %v1597, 2147483648
    %v1602 = vmul.f32 %v1598, 1.442695
    %v1603 = vpow.pop %v1602
    %v1604 = vmul.f32 %v1599, 1.442695
    %v1605 = vpow.pop %v1604
    %v1606 = vmul.f32 %v1600, 1.442695
    %v1607 = vpow.pop %v1606
    %v1608 = vmul.f32 %v1601, 1.442695
    %v1609 = vpow.pop %v1608
    %v1610 = vadd.f32 %v1603, 1.0
    %v1611 = vadd.f32 %v1605, 1.0
    %v1612 = vadd.f32 %v1607, 1.0
    %v1613 = vadd.f32 %v1609, 1.0
    %v1614 = vrcp.pop %v1610
    %v1615 = vmul.f32 1.0, %v1614
    %v1616 = vrcp.pop %v1611
    %v1617 = vmul.f32 1.0, %v1616
    %v1618 = vrcp.pop %v1612
    %v1619 = vmul.f32 1.0, %v1618
    %v1620 = vrcp.pop %v1613
    %v1621 = vmul.f32 1.0, %v1620
    %v1622 = vmul.f32 %v1619, 2.0
    %v1623 = vsub.f32 %v1622, 1.0
    %v1624 = vmul.f32 %v1617, 0.0
    %v1625 = vmul.f32 %v1615, %v1623
    %v1626 = vadd.f32 %v1624, %v1625
    %v1627 = vtanh.pop %v1626
    %v1628 = vmul.f32 %v1621, %v1627
    %v1629 = vpack.c.bf16 %v1628, %v1628
    %v1630 = vpack.c.bf16 0.0, 0.0
    %v1631 = vld [vmem:[%s12] sm:$0xff]
    %v1632 = vld [vmem:[%s12 + $0x8] sm:$0xff]
    %v1633 = vld [vmem:[%s12 + $0x10] sm:$0xff]
    %v1634 = vld [vmem:[%s12 + $0x18] sm:$0xff]
    %v1635 = vld [vmem:[%s12 + $0x20] sm:$0xff]
    %v1636 = vld [vmem:[%s12 + $0x28] sm:$0xff]
    %v1637 = vld [vmem:[%s12 + $0x30] sm:$0xff]
    %v1638 = vld [vmem:[%s12 + $0x38] sm:$0xff]
    %v1639 = vld [vmem:[%s12 + $0x40] sm:$0xff]
    %v1640 = vld [vmem:[%s12 + $0x48] sm:$0xff]
    %v1641 = vld [vmem:[%s12 + $0x50] sm:$0xff]
    %v1642 = vld [vmem:[%s12 + $0x58] sm:$0xff]
    %v1643 = vld [vmem:[%s12 + $0x60] sm:$0xff]
    %v1644 = vld [vmem:[%s12 + $0x68] sm:$0xff]
    %v1645 = vld [vmem:[%s12 + $0x70] sm:$0xff]
    %v1646 = vld [vmem:[%s12 + $0x78] sm:$0xff]
    %v1647 = vld [vmem:[%s12 + $0x80] sm:$0xff]
    %v1648 = vld [vmem:[%s12 + $0x88] sm:$0xff]
    %v1649 = vld [vmem:[%s12 + $0x90] sm:$0xff]
    %v1650 = vld [vmem:[%s12 + $0x98] sm:$0xff]
    %v1651 = vld [vmem:[%s12 + $0xa0] sm:$0xff]
    %v1652 = vld [vmem:[%s12 + $0xa8] sm:$0xff]
    %v1653 = vld [vmem:[%s12 + $0xb0] sm:$0xff]
    %v1654 = vld [vmem:[%s12 + $0xb8] sm:$0xff]
    %v1655 = vld [vmem:[%s12 + $0xc0] sm:$0xff]
    %v1656 = vld [vmem:[%s12 + $0xc8] sm:$0xff]
    %v1657 = vld [vmem:[%s12 + $0xd0] sm:$0xff]
    %v1658 = vld [vmem:[%s12 + $0xd8] sm:$0xff]
    %v1659 = vld [vmem:[%s12 + $0xe0] sm:$0xff]
    %v1660 = vld [vmem:[%s12 + $0xe8] sm:$0xff]
    %v1661 = vld [vmem:[%s12 + $0xf0] sm:$0xff]
    %v1662 = vld [vmem:[%s12 + $0xf8] sm:$0xff]
    %v1663 = vld [vmem:[%s12 + $0x100] sm:$0xff]
    %v1664 = vld [vmem:[%s12 + $0x108] sm:$0xff]
    %v1665 = vld [vmem:[%s12 + $0x110] sm:$0xff]
    %v1666 = vld [vmem:[%s12 + $0x118] sm:$0xff]
    %v1667 = vld [vmem:[%s12 + $0x120] sm:$0xff]
    %v1668 = vld [vmem:[%s12 + $0x128] sm:$0xff]
    %v1669 = vld [vmem:[%s12 + $0x130] sm:$0xff]
    %v1670 = vld [vmem:[%s12 + $0x138] sm:$0xff]
    %v1671 = vld [vmem:[%s12 + $0x140] sm:$0xff]
    %v1672 = vld [vmem:[%s12 + $0x148] sm:$0xff]
    %v1673 = vld [vmem:[%s12 + $0x150] sm:$0xff]
    %v1674 = vld [vmem:[%s12 + $0x158] sm:$0xff]
    %v1675 = vld [vmem:[%s12 + $0x160] sm:$0xff]
    %v1676 = vld [vmem:[%s12 + $0x168] sm:$0xff]
    %v1677 = vld [vmem:[%s12 + $0x170] sm:$0xff]
    %v1678 = vld [vmem:[%s12 + $0x178] sm:$0xff]
    %v1679 = vld [vmem:[%s12 + $0x180] sm:$0xff]
    %v1680 = vld [vmem:[%s12 + $0x188] sm:$0xff]
    %v1681 = vld [vmem:[%s12 + $0x190] sm:$0xff]
    %v1682 = vld [vmem:[%s12 + $0x198] sm:$0xff]
    %v1683 = vld [vmem:[%s12 + $0x1a0] sm:$0xff]
    %v1684 = vld [vmem:[%s12 + $0x1a8] sm:$0xff]
    %v1685 = vld [vmem:[%s12 + $0x1b0] sm:$0xff]
    %v1686 = vld [vmem:[%s12 + $0x1b8] sm:$0xff]
    %v1687 = vld [vmem:[%s12 + $0x1c0] sm:$0xff]
    %v1688 = vld [vmem:[%s12 + $0x1c8] sm:$0xff]
    %v1689 = vld [vmem:[%s12 + $0x1d0] sm:$0xff]
    %v1690 = vld [vmem:[%s12 + $0x1d8] sm:$0xff]
    %v1691 = vld [vmem:[%s12 + $0x1e0] sm:$0xff]
    %v1692 = vld [vmem:[%s12 + $0x1e8] sm:$0xff]
    %v1693 = vld [vmem:[%s12 + $0x1f0] sm:$0xff]
    %v1694 = vld [vmem:[%s12 + $0x1f8] sm:$0xff]
    %v1695 = vld [vmem:[#allocation16] sm:$0xf]
    %v1760 = vunpack.c.l.b16 %v1631
    %v1761 = vunpack.c.h.b16 %v1631
    %v1762 = vunpack.c.l.b16 %v1632
    %v1763 = vunpack.c.h.b16 %v1632
    %v1764 = vunpack.c.l.b16 %v1633
    %v1765 = vunpack.c.h.b16 %v1633
    %v1766 = vunpack.c.l.b16 %v1634
    %v1767 = vunpack.c.h.b16 %v1634
    %v1768 = vunpack.c.l.b16 %v1635
    %v1769 = vunpack.c.h.b16 %v1635
    %v1770 = vunpack.c.l.b16 %v1636
    %v1771 = vunpack.c.h.b16 %v1636
    %v1772 = vunpack.c.l.b16 %v1637
    %v1773 = vunpack.c.h.b16 %v1637
    %v1774 = vunpack.c.l.b16 %v1638
    %v1775 = vunpack.c.h.b16 %v1638
    %v1776 = vunpack.c.l.b16 %v1639
    %v1777 = vunpack.c.h.b16 %v1639
    %v1778 = vunpack.c.l.b16 %v1640
    %v1779 = vunpack.c.h.b16 %v1640
    %v1780 = vunpack.c.l.b16 %v1641
    %v1781 = vunpack.c.h.b16 %v1641
    %v1782 = vunpack.c.l.b16 %v1642
    %v1783 = vunpack.c.h.b16 %v1642
    %v1784 = vunpack.c.l.b16 %v1643
    %v1785 = vunpack.c.h.b16 %v1643
    %v1786 = vunpack.c.l.b16 %v1644
    %v1787 = vunpack.c.h.b16 %v1644
    %v1788 = vunpack.c.l.b16 %v1645
    %v1789 = vunpack.c.h.b16 %v1645
    %v1790 = vunpack.c.l.b16 %v1646
    %v1791 = vunpack.c.h.b16 %v1646
    %v1792 = vunpack.c.l.b16 %v1647
    %v1793 = vunpack.c.h.b16 %v1647
    %v1794 = vunpack.c.l.b16 %v1648
    %v1795 = vunpack.c.h.b16 %v1648
    %v1796 = vunpack.c.l.b16 %v1649
    %v1797 = vunpack.c.h.b16 %v1649
    %v1798 = vunpack.c.l.b16 %v1650
    %v1799 = vunpack.c.h.b16 %v1650
    %v1800 = vunpack.c.l.b16 %v1651
    %v1801 = vunpack.c.h.b16 %v1651
    %v1802 = vunpack.c.l.b16 %v1652
    %v1803 = vunpack.c.h.b16 %v1652
    %v1804 = vunpack.c.l.b16 %v1653
    %v1805 = vunpack.c.h.b16 %v1653
    %v1806 = vunpack.c.l.b16 %v1654
    %v1807 = vunpack.c.h.b16 %v1654
    %v1808 = vunpack.c.l.b16 %v1655
    %v1809 = vunpack.c.h.b16 %v1655
    %v1810 = vunpack.c.l.b16 %v1656
    %v1811 = vunpack.c.h.b16 %v1656
    %v1812 = vunpack.c.l.b16 %v1657
    %v1813 = vunpack.c.h.b16 %v1657
    %v1814 = vunpack.c.l.b16 %v1658
    %v1815 = vunpack.c.h.b16 %v1658
    %v1816 = vunpack.c.l.b16 %v1659
    %v1817 = vunpack.c.h.b16 %v1659
    %v1818 = vunpack.c.l.b16 %v1660
    %v1819 = vunpack.c.h.b16 %v1660
    %v1820 = vunpack.c.l.b16 %v1661
    %v1821 = vunpack.c.h.b16 %v1661
    %v1822 = vunpack.c.l.b16 %v1662
    %v1823 = vunpack.c.h.b16 %v1662
    %v1824 = vunpack.c.l.b16 %v1663
    %v1825 = vunpack.c.h.b16 %v1663
    %v1826 = vunpack.c.l.b16 %v1664
    %v1827 = vunpack.c.h.b16 %v1664
    %v1828 = vunpack.c.l.b16 %v1665
    %v1829 = vunpack.c.h.b16 %v1665
    %v1830 = vunpack.c.l.b16 %v1666
    %v1831 = vunpack.c.h.b16 %v1666
    %v1832 = vunpack.c.l.b16 %v1667
    %v1833 = vunpack.c.h.b16 %v1667
    %v1834 = vunpack.c.l.b16 %v1668
    %v1835 = vunpack.c.h.b16 %v1668
    %v1836 = vunpack.c.l.b16 %v1669
    %v1837 = vunpack.c.h.b16 %v1669
    %v1838 = vunpack.c.l.b16 %v1670
    %v1839 = vunpack.c.h.b16 %v1670
    %v1840 = vunpack.c.l.b16 %v1671
    %v1841 = vunpack.c.h.b16 %v1671
    %v1842 = vunpack.c.l.b16 %v1672
    %v1843 = vunpack.c.h.b16 %v1672
    %v1844 = vunpack.c.l.b16 %v1673
    %v1845 = vunpack.c.h.b16 %v1673
    %v1846 = vunpack.c.l.b16 %v1674
    %v1847 = vunpack.c.h.b16 %v1674
    %v1848 = vunpack.c.l.b16 %v1675
    %v1849 = vunpack.c.h.b16 %v1675
    %v1850 = vunpack.c.l.b16 %v1676
    %v1851 = vunpack.c.h.b16 %v1676
    %v1852 = vunpack.c.l.b16 %v1677
    %v1853 = vunpack.c.h.b16 %v1677
    %v1854 = vunpack.c.l.b16 %v1678
    %v1855 = vunpack.c.h.b16 %v1678
    %v1856 = vunpack.c.l.b16 %v1679
    %v1857 = vunpack.c.h.b16 %v1679
    %v1858 = vunpack.c.l.b16 %v1680
    %v1859 = vunpack.c.h.b16 %v1680
    %v1860 = vunpack.c.l.b16 %v1681
    %v1861 = vunpack.c.h.b16 %v1681
    %v1862 = vunpack.c.l.b16 %v1682
    %v1863 = vunpack.c.h.b16 %v1682
    %v1864 = vunpack.c.l.b16 %v1683
    %v1865 = vunpack.c.h.b16 %v1683
    %v1866 = vunpack.c.l.b16 %v1684
    %v1867 = vunpack.c.h.b16 %v1684
    %v1868 = vunpack.c.l.b16 %v1685
    %v1869 = vunpack.c.h.b16 %v1685
    %v1870 = vunpack.c.l.b16 %v1686
    %v1871 = vunpack.c.h.b16 %v1686
    %v1872 = vunpack.c.l.b16 %v1687
    %v1873 = vunpack.c.h.b16 %v1687
    %v1874 = vunpack.c.l.b16 %v1688
    %v1875 = vunpack.c.h.b16 %v1688
    %v1876 = vunpack.c.l.b16 %v1689
    %v1877 = vunpack.c.h.b16 %v1689
    %v1878 = vunpack.c.l.b16 %v1690
    %v1879 = vunpack.c.h.b16 %v1690
    %v1880 = vunpack.c.l.b16 %v1691
    %v1881 = vunpack.c.h.b16 %v1691
    %v1882 = vunpack.c.l.b16 %v1692
    %v1883 = vunpack.c.h.b16 %v1692
    %v1884 = vunpack.c.l.b16 %v1693
    %v1885 = vunpack.c.h.b16 %v1693
    %v1886 = vunpack.c.l.b16 %v1694
    %v1887 = vunpack.c.h.b16 %v1694
    %v1888 = vpack.c.b16 %v1764, %v1760
    %v1889 = vpack.c.b16 %v1765, %v1761
    %v1890 = vpack.c.b16 %v1766, %v1762
    %v1891 = vpack.c.b16 %v1767, %v1763
    %v1892 = vpack.c.b16 %v1772, %v1768
    %v1893 = vpack.c.b16 %v1773, %v1769
    %v1894 = vpack.c.b16 %v1774, %v1770
    %v1895 = vpack.c.b16 %v1775, %v1771
    %v1896 = vpack.c.b16 %v1780, %v1776
    %v1897 = vpack.c.b16 %v1781, %v1777
    %v1898 = vpack.c.b16 %v1782, %v1778
    %v1899 = vpack.c.b16 %v1783, %v1779
    %v1900 = vpack.c.b16 %v1788, %v1784
    %v1901 = vpack.c.b16 %v1789, %v1785
    %v1902 = vpack.c.b16 %v1790, %v1786
    %v1903 = vpack.c.b16 %v1791, %v1787
    %v1904 = vpack.c.b16 %v1796, %v1792
    %v1905 = vpack.c.b16 %v1797, %v1793
    %v1906 = vpack.c.b16 %v1798, %v1794
    %v1907 = vpack.c.b16 %v1799, %v1795
    %v1908 = vpack.c.b16 %v1804, %v1800
    %v1909 = vpack.c.b16 %v1805, %v1801
    %v1910 = vpack.c.b16 %v1806, %v1802
    %v1911 = vpack.c.b16 %v1807, %v1803
    %v1912 = vpack.c.b16 %v1812, %v1808
    %v1913 = vpack.c.b16 %v1813, %v1809
    %v1914 = vpack.c.b16 %v1814, %v1810
    %v1915 = vpack.c.b16 %v1815, %v1811
    %v1916 = vpack.c.b16 %v1820, %v1816
    %v1917 = vpack.c.b16 %v1821, %v1817
    %v1918 = vpack.c.b16 %v1822, %v1818
    %v1919 = vpack.c.b16 %v1823, %v1819
    %v1920 = vpack.c.b16 %v1828, %v1824
    %v1921 = vpack.c.b16 %v1829, %v1825
    %v1922 = vpack.c.b16 %v1830, %v1826
    %v1923 = vpack.c.b16 %v1831, %v1827
    %v1924 = vpack.c.b16 %v1836, %v1832
    %v1925 = vpack.c.b16 %v1837, %v1833
    %v1926 = vpack.c.b16 %v1838, %v1834
    %v1927 = vpack.c.b16 %v1839, %v1835
    %v1928 = vpack.c.b16 %v1844, %v1840
    %v1929 = vpack.c.b16 %v1845, %v1841
    %v1930 = vpack.c.b16 %v1846, %v1842
    %v1931 = vpack.c.b16 %v1847, %v1843
    %v1932 = vpack.c.b16 %v1852, %v1848
    %v1933 = vpack.c.b16 %v1853, %v1849
    %v1934 = vpack.c.b16 %v1854, %v1850
    %v1935 = vpack.c.b16 %v1855, %v1851
    %v1936 = vpack.c.b16 %v1860, %v1856
    %v1937 = vpack.c.b16 %v1861, %v1857
    %v1938 = vpack.c.b16 %v1862, %v1858
    %v1939 = vpack.c.b16 %v1863, %v1859
    %v1940 = vpack.c.b16 %v1868, %v1864
    %v1941 = vpack.c.b16 %v1869, %v1865
    %v1942 = vpack.c.b16 %v1870, %v1866
    %v1943 = vpack.c.b16 %v1871, %v1867
    %v1944 = vpack.c.b16 %v1876, %v1872
    %v1945 = vpack.c.b16 %v1877, %v1873
    %v1946 = vpack.c.b16 %v1878, %v1874
    %v1947 = vpack.c.b16 %v1879, %v1875
    %v1948 = vpack.c.b16 %v1884, %v1880
    %v1949 = vpack.c.b16 %v1885, %v1881
    %v1950 = vpack.c.b16 %v1886, %v1882
    %v1951 = vpack.c.b16 %v1887, %v1883
    %v2017 = vlaneseq
    %v2018 = vshrl.u32 %v2017, 7
    %v2019 = vsub.s32 0, %v2018
    %v2020 = vrot.slane %v1695, %v2019
    %v2021 = vlaneseq
    %v2022 = vshrl.u32 %v2021, 7
    %v2023 = vsub.s32 1, %v2022
    %v2024 = vrot.slane %v1695, %v2023
    %v2025 = vlaneseq
    %v2026 = vshrl.u32 %v2025, 7
    %v2027 = vsub.s32 2, %v2026
    %v2028 = vrot.slane %v1695, %v2027
    %v2029 = vlaneseq
    %v2030 = vshrl.u32 %v2029, 7
    %v2031 = vsub.s32 3, %v2030
    %v2032 = vrot.slane %v1695, %v2031
    %2037 = vmatprep.subr.bf16.mxu0 %v1917
    %2038 = vmatpush1.bf16.msra.mxu0 %v1916
    %2039 = vmatprep.subr.bf16.mxu0 %v1913
    %2040 = vmatpush1.bf16.msra.mxu0 %v1912
    %2041 = vmatprep.subr.bf16.mxu0 %v1909
    %2042 = vmatpush1.bf16.msra.mxu0 %v1908
    %2043 = vmatprep.subr.bf16.mxu0 %v1905
    %2044 = vmatpush1.bf16.msra.mxu0 %v1904
    %2045 = vmatprep.subr.bf16.mxu0 %v1901
    %2046 = vmatpush1.bf16.msra.mxu0 %v1900
    %2047 = vmatprep.subr.bf16.mxu0 %v1897
    %2048 = vmatpush1.bf16.msra.mxu0 %v1896
    %2049 = vmatprep.subr.bf16.mxu0 %v1893
    %2050 = vmatpush1.bf16.msra.mxu0 %v1892
    %2051 = vmatprep.subr.bf16.mxu0 %v1889
    %2052 = vmatpush1.bf16.msra.mxu0 %v1888
    %2053 = vmatprep.subr.bf16.mxu0 %v1949
    %2054 = vmatpush2.bf16.msra.mxu0 %v1948
    %2055 = vmatprep.subr.bf16.mxu0 %v1945
    %2056 = vmatpush2.bf16.msra.mxu0 %v1944
    %2057 = vmatprep.subr.bf16.mxu0 %v1941
    %2058 = vmatpush2.bf16.msra.mxu0 %v1940
    %2059 = vmatprep.subr.bf16.mxu0 %v1937
    %2060 = vmatpush2.bf16.msra.mxu0 %v1936
    %2061 = vmatprep.subr.bf16.mxu0 %v1933
    %2062 = vmatpush2.bf16.msra.mxu0 %v1932
    %2063 = vmatprep.subr.bf16.mxu0 %v1929
    %2064 = vmatpush2.bf16.msra.mxu0 %v1928
    %2065 = vmatprep.subr.bf16.mxu0 %v1925
    %2066 = vmatpush2.bf16.msra.mxu0 %v1924
    %2067 = vmatprep.subr.bf16.mxu0 %v1921
    %2068 = vmatpush2.bf16.msra.mxu0 %v1920
    %2069 = vmatprep.mubr.bf16.mxu0 %v1630
    %2070 = vmatmul.mubr.bf16.gmra.mxu0 %v1629
    %v2071 = vpop.f32.mrf.mxu0
    %v2072 = vadd.f32 %v2020, %v2071
    %v2073 = vpop.f32.mrf.mxu0
    %v2074 = vadd.f32 %v2024, %v2073
    %v2075 = vpop.f32.mrf.mxu0
    %v2076 = vpop.f32.mrf.mxu0
    %2077 = vdwg.mxu0
    %2078 = vmatprep.subr.bf16.mxu0 %v1919
    %2079 = vmatpush1.bf16.msra.mxu0 %v1918
    %2080 = vmatprep.subr.bf16.mxu0 %v1915
    %2081 = vmatpush1.bf16.msra.mxu0 %v1914
    %2082 = vmatprep.subr.bf16.mxu0 %v1911
    %2083 = vmatpush1.bf16.msra.mxu0 %v1910
    %2084 = vmatprep.subr.bf16.mxu0 %v1907
    %2085 = vmatpush1.bf16.msra.mxu0 %v1906
    %2086 = vmatprep.subr.bf16.mxu0 %v1903
    %2087 = vmatpush1.bf16.msra.mxu0 %v1902
    %2088 = vmatprep.subr.bf16.mxu0 %v1899
    %2089 = vmatpush1.bf16.msra.mxu0 %v1898
    %2090 = vmatprep.subr.bf16.mxu0 %v1895
    %2091 = vmatpush1.bf16.msra.mxu0 %v1894
    %2092 = vmatprep.subr.bf16.mxu0 %v1891
    %2093 = vmatpush1.bf16.msra.mxu0 %v1890
    %2094 = vmatprep.subr.bf16.mxu0 %v1951
    %2095 = vmatpush2.bf16.msra.mxu0 %v1950
    %2096 = vmatprep.subr.bf16.mxu0 %v1947
    %2097 = vmatpush2.bf16.msra.mxu0 %v1946
    %2098 = vmatprep.subr.bf16.mxu0 %v1943
    %2099 = vmatpush2.bf16.msra.mxu0 %v1942
    %2100 = vmatprep.subr.bf16.mxu0 %v1939
    %2101 = vmatpush2.bf16.msra.mxu0 %v1938
    %2102 = vmatprep.subr.bf16.mxu0 %v1935
    %2103 = vmatpush2.bf16.msra.mxu0 %v1934
    %2104 = vmatprep.subr.bf16.mxu0 %v1931
    %2105 = vmatpush2.bf16.msra.mxu0 %v1930
    %2106 = vmatprep.subr.bf16.mxu0 %v1927
    %2107 = vmatpush2.bf16.msra.mxu0 %v1926
    %2108 = vmatprep.subr.bf16.mxu0 %v1923
    %2109 = vmatpush2.bf16.msra.mxu0 %v1922
    %2110 = vmatprep.mubr.bf16.mxu0 %v1630
    %2111 = vmatmul.mubr.bf16.gmra.mxu0 %v1629
    %v2112 = vpop.f32.mrf.mxu0
    %v2113 = vadd.f32 %v2028, %v2112
    %v2114 = vpop.f32.mrf.mxu0
    %v2115 = vadd.f32 %v2032, %v2114
    %v2116 = vpop.f32.mrf.mxu0
    %v2117 = vpop.f32.mrf.mxu0
    %2118 = vdwg.mxu0
    %v2119 = vxor.u32 %v2072, 2147483648
    %v2120 = vxor.u32 %v2074, 2147483648
    %v2121 = vxor.u32 %v2113, 2147483648
    %v2122 = vxor.u32 %v2115, 2147483648
    %v2123 = vmul.f32 %v2119, 1.442695
    %v2124 = vpow.pop %v2123
    %v2125 = vmul.f32 %v2120, 1.442695
    %v2126 = vpow.pop %v2125
    %v2127 = vmul.f32 %v2121, 1.442695
    %v2128 = vpow.pop %v2127
    %v2129 = vmul.f32 %v2122, 1.442695
    %v2130 = vpow.pop %v2129
    %v2131 = vadd.f32 %v2124, 1.0
    %v2132 = vadd.f32 %v2126, 1.0
    %v2133 = vadd.f32 %v2128, 1.0
    %v2134 = vadd.f32 %v2130, 1.0
    %v2135 = vrcp.pop %v2131
    %v2136 = vmul.f32 1.0, %v2135
    %v2137 = vrcp.pop %v2132
    %v2138 = vmul.f32 1.0, %v2137
    %v2139 = vrcp.pop %v2133
    %v2140 = vmul.f32 1.0, %v2139
    %v2141 = vrcp.pop %v2134
    %v2142 = vmul.f32 1.0, %v2141
    %v2143 = vmul.f32 %v2140, 2.0
    %v2144 = vsub.f32 %v2143, 1.0
    %v2145 = vmul.f32 %v2138, 0.0
    %v2146 = vmul.f32 %v2136, %v2144
    %v2147 = vadd.f32 %v2145, %v2146
    %v2148 = vtanh.pop %v2147
    %v2149 = vmul.f32 %v2142, %v2148
    %2150 = vmatprep.subr.bf16.mxu0 %v1477
    %2151 = vmatpush1.bf16.msra.mxu0 %v1476
    %2152 = vmatprep.subr.bf16.mxu0 %v1473
    %2153 = vmatpush1.bf16.msra.mxu0 %v1472
    %2154 = vmatprep.subr.bf16.mxu0 %v1469
    %2155 = vmatpush1.bf16.msra.mxu0 %v1468
    %2156 = vmatprep.subr.bf16.mxu0 %v1465
    %2157 = vmatpush1.bf16.msra.mxu0 %v1464
    %2158 = vmatprep.subr.bf16.mxu0 %v1461
    %2159 = vmatpush1.bf16.msra.mxu0 %v1460
    %2160 = vmatprep.subr.bf16.mxu0 %v1457
    %2161 = vmatpush1.bf16.msra.mxu0 %v1456
    %2162 = vmatprep.subr.bf16.mxu0 %v1453
    %2163 = vmatpush1.bf16.msra.mxu0 %v1452
    %2164 = vmatprep.subr.bf16.mxu0 %v1449
    %2165 = vmatpush1.bf16.msra.mxu0 %v1448
    %2166 = vmatprep.subr.bf16.mxu0 0
    %2167 = vmatpush2.bf16.msra.mxu0 0
    %2168 = vmatprep.subr.bf16.mxu0 0
    %2169 = vmatpush2.bf16.msra.mxu0 0
    %2170 = vmatprep.subr.bf16.mxu0 0
    %2171 = vmatpush2.bf16.msra.mxu0 0
    %2172 = vmatprep.subr.bf16.mxu0 0
    %2173 = vmatpush2.bf16.msra.mxu0 0
    %2174 = vmatprep.subr.bf16.mxu0 0
    %2175 = vmatpush2.bf16.msra.mxu0 0
    %2176 = vmatprep.subr.bf16.mxu0 0
    %2177 = vmatpush2.bf16.msra.mxu0 0
    %2178 = vmatprep.subr.bf16.mxu0 0
    %2179 = vmatpush2.bf16.msra.mxu0 0
    %2180 = vmatprep.subr.bf16.mxu0 0
    %2181 = vmatpush2.bf16.msra.mxu0 0
    %2182 = vmatprep.mubr.bf16.mxu0 0
    %2183 = vmatmul.mubr.bf16.gmra.mxu0 %v1629
    %v2184 = vpop.f32.mrf.mxu0
    %v2185 = vadd.f32 0.0, %v2184
    %v2186 = vpop.f32.mrf.mxu0
    %v2187 = vadd.f32 0.0, %v2186
    %v2188 = vpop.f32.mrf.mxu0
    %v2189 = vpop.f32.mrf.mxu0
    %2190 = vdwg.mxu0
    %2191 = vmatprep.subr.bf16.mxu0 %v1479
    %2192 = vmatpush1.bf16.msra.mxu0 %v1478
    %2193 = vmatprep.subr.bf16.mxu0 %v1475
    %2194 = vmatpush1.bf16.msra.mxu0 %v1474
    %2195 = vmatprep.subr.bf16.mxu0 %v1471
    %2196 = vmatpush1.bf16.msra.mxu0 %v1470
    %2197 = vmatprep.subr.bf16.mxu0 %v1467
    %2198 = vmatpush1.bf16.msra.mxu0 %v1466
    %2199 = vmatprep.subr.bf16.mxu0 %v1463
    %2200 = vmatpush1.bf16.msra.mxu0 %v1462
    %2201 = vmatprep.subr.bf16.mxu0 %v1459
    %2202 = vmatpush1.bf16.msra.mxu0 %v1458
    %2203 = vmatprep.subr.bf16.mxu0 %v1455
    %2204 = vmatpush1.bf16.msra.mxu0 %v1454
    %2205 = vmatprep.subr.bf16.mxu0 %v1451
    %2206 = vmatpush1.bf16.msra.mxu0 %v1450
    %2207 = vmatprep.subr.bf16.mxu0 0
    %2208 = vmatpush2.bf16.msra.mxu0 0
    %2209 = vmatprep.subr.bf16.mxu0 0
    %2210 = vmatpush2.bf16.msra.mxu0 0
    %2211 = vmatprep.subr.bf16.mxu0 0
    %2212 = vmatpush2.bf16.msra.mxu0 0
    %2213 = vmatprep.subr.bf16.mxu0 0
    %2214 = vmatpush2.bf16.msra.mxu0 0
    %2215 = vmatprep.subr.bf16.mxu0 0
    %2216 = vmatpush2.bf16.msra.mxu0 0
    %2217 = vmatprep.subr.bf16.mxu0 0
    %2218 = vmatpush2.bf16.msra.mxu0 0
    %2219 = vmatprep.subr.bf16.mxu0 0
    %2220 = vmatpush2.bf16.msra.mxu0 0
    %2221 = vmatprep.subr.bf16.mxu0 0
    %2222 = vmatpush2.bf16.msra.mxu0 0
    %2223 = vmatprep.mubr.bf16.mxu0 0
    %2224 = vmatmul.mubr.bf16.gmra.mxu0 %v1629
    %v2225 = vpop.f32.mrf.mxu0
    %v2226 = vadd.f32 0.0, %v2225
    %v2227 = vpop.f32.mrf.mxu0
    %v2228 = vadd.f32 0.0, %v2227
    %v2229 = vpop.f32.mrf.mxu0
    %v2230 = vpop.f32.mrf.mxu0
    %2231 = vdwg.mxu0
    %v2236 = vrot.slane %v2185, 7
    %v2237 = vrot.slane %v2187, 7
    %v2238 = vrot.slane %v2226, 7
    %v2239 = vrot.slane %v2228, 7
    %v2244 = vadd.f32 %v1273, %v2236
    %v2245 = vadd.f32 %v1275, %v2237
    %v2246 = vadd.f32 %v1314, %v2238
    %v2247 = vadd.f32 %v1316, %v2239
    %v2248 = vxor.u32 %v2244, 2147483648
    %v2249 = vxor.u32 %v2245, 2147483648
    %v2250 = vxor.u32 %v2246, 2147483648
    %v2251 = vxor.u32 %v2247, 2147483648
    %v2252 = vmul.f32 %v2248, 1.442695
    %v2253 = vpow.pop %v2252
    %v2254 = vmul.f32 %v2249, 1.442695
    %v2255 = vpow.pop %v2254
    %v2256 = vmul.f32 %v2250, 1.442695
    %v2257 = vpow.pop %v2256
    %v2258 = vmul.f32 %v2251, 1.442695
    %v2259 = vpow.pop %v2258
    %v2260 = vadd.f32 %v2253, 1.0
    %v2261 = vadd.f32 %v2255, 1.0
    %v2262 = vadd.f32 %v2257, 1.0
    %v2263 = vadd.f32 %v2259, 1.0
    %v2264 = vrcp.pop %v2260
    %v2265 = vmul.f32 1.0, %v2264
    %v2266 = vrcp.pop %v2261
    %v2267 = vmul.f32 1.0, %v2266
    %v2268 = vrcp.pop %v2262
    %v2269 = vmul.f32 1.0, %v2268
    %v2270 = vrcp.pop %v2263
    %v2271 = vmul.f32 1.0, %v2270
    %v2272 = vmul.f32 %v2269, 2.0
    %v2273 = vsub.f32 %v2272, 1.0
    %v2275 = vrot.slane %v1626, 7
    %v2277 = vmul.f32 %v2267, %v2275
    %v2278 = vmul.f32 %v2265, %v2273
    %v2279 = vadd.f32 %v2277, %v2278
    %v2280 = vtanh.pop %v2279
    %v2281 = vmul.f32 %v2271, %v2280
    %v2283 = vrot.slane %v2149, 7
    %v2285 = vpack.c.bf16 %v2281, %v2281
    %v2286 = vpack.c.bf16 %v2283, %v2283
    %v2288 = vshrl.u32 %v2285, 16
    %v2291 = vshrl.u32 %v2286, 16
    %2295 = vmatprep.subr.bf16.mxu0 %v1917
    %2296 = vmatpush1.bf16.msra.mxu0 %v1916
    %2297 = vmatprep.subr.bf16.mxu0 %v1913
    %2298 = vmatpush1.bf16.msra.mxu0 %v1912
    %2299 = vmatprep.subr.bf16.mxu0 %v1909
    %2300 = vmatpush1.bf16.msra.mxu0 %v1908
    %2301 = vmatprep.subr.bf16.mxu0 %v1905
    %2302 = vmatpush1.bf16.msra.mxu0 %v1904
    %2303 = vmatprep.subr.bf16.mxu0 %v1901
    %2304 = vmatpush1.bf16.msra.mxu0 %v1900
    %2305 = vmatprep.subr.bf16.mxu0 %v1897
    %2306 = vmatpush1.bf16.msra.mxu0 %v1896
    %2307 = vmatprep.subr.bf16.mxu0 %v1893
    %2308 = vmatpush1.bf16.msra.mxu0 %v1892
    %2309 = vmatprep.subr.bf16.mxu0 %v1889
    %2310 = vmatpush1.bf16.msra.mxu0 %v1888
    %2311 = vmatprep.subr.bf16.mxu0 %v1949
    %2312 = vmatpush2.bf16.msra.mxu0 %v1948
    %2313 = vmatprep.subr.bf16.mxu0 %v1945
    %2314 = vmatpush2.bf16.msra.mxu0 %v1944
    %2315 = vmatprep.subr.bf16.mxu0 %v1941
    %2316 = vmatpush2.bf16.msra.mxu0 %v1940
    %2317 = vmatprep.subr.bf16.mxu0 %v1937
    %2318 = vmatpush2.bf16.msra.mxu0 %v1936
    %2319 = vmatprep.subr.bf16.mxu0 %v1933
    %2320 = vmatpush2.bf16.msra.mxu0 %v1932
    %2321 = vmatprep.subr.bf16.mxu0 %v1929
    %2322 = vmatpush2.bf16.msra.mxu0 %v1928
    %2323 = vmatprep.subr.bf16.mxu0 %v1925
    %2324 = vmatpush2.bf16.msra.mxu0 %v1924
    %2325 = vmatprep.subr.bf16.mxu0 %v1921
    %2326 = vmatpush2.bf16.msra.mxu0 %v1920
    %2327 = vmatprep.mubr.bf16.mxu0 %v2291
    %2328 = vmatmul.mubr.bf16.gmra.mxu0 %v2288
    %v2329 = vpop.f32.mrf.mxu0
    %v2330 = vadd.f32 %v2020, %v2329
    %v2331 = vpop.f32.mrf.mxu0
    %v2332 = vadd.f32 %v2024, %v2331
    %v2333 = vpop.f32.mrf.mxu0
    %v2334 = vpop.f32.mrf.mxu0
    %2335 = vdwg.mxu0
    %2336 = vmatprep.subr.bf16.mxu0 %v1919
    %2337 = vmatpush1.bf16.msra.mxu0 %v1918
    %2338 = vmatprep.subr.bf16.mxu0 %v1915
    %2339 = vmatpush1.bf16.msra.mxu0 %v1914
    %2340 = vmatprep.subr.bf16.mxu0 %v1911
    %2341 = vmatpush1.bf16.msra.mxu0 %v1910
    %2342 = vmatprep.subr.bf16.mxu0 %v1907
    %2343 = vmatpush1.bf16.msra.mxu0 %v1906
    %2344 = vmatprep.subr.bf16.mxu0 %v1903
    %2345 = vmatpush1.bf16.msra.mxu0 %v1902
    %2346 = vmatprep.subr.bf16.mxu0 %v1899
    %2347 = vmatpush1.bf16.msra.mxu0 %v1898
    %2348 = vmatprep.subr.bf16.mxu0 %v1895
    %2349 = vmatpush1.bf16.msra.mxu0 %v1894
    %2350 = vmatprep.subr.bf16.mxu0 %v1891
    %2351 = vmatpush1.bf16.msra.mxu0 %v1890
    %2352 = vmatprep.subr.bf16.mxu0 %v1951
    %2353 = vmatpush2.bf16.msra.mxu0 %v1950
    %2354 = vmatprep.subr.bf16.mxu0 %v1947
    %2355 = vmatpush2.bf16.msra.mxu0 %v1946
    %2356 = vmatprep.subr.bf16.mxu0 %v1943
    %2357 = vmatpush2.bf16.msra.mxu0 %v1942
    %2358 = vmatprep.subr.bf16.mxu0 %v1939
    %2359 = vmatpush2.bf16.msra.mxu0 %v1938
    %2360 = vmatprep.subr.bf16.mxu0 %v1935
    %2361 = vmatpush2.bf16.msra.mxu0 %v1934
    %2362 = vmatprep.subr.bf16.mxu0 %v1931
    %2363 = vmatpush2.bf16.msra.mxu0 %v1930
    %2364 = vmatprep.subr.bf16.mxu0 %v1927
    %2365 = vmatpush2.bf16.msra.mxu0 %v1926
    %2366 = vmatprep.subr.bf16.mxu0 %v1923
    %2367 = vmatpush2.bf16.msra.mxu0 %v1922
    %2368 = vmatprep.mubr.bf16.mxu0 %v2291
    %2369 = vmatmul.mubr.bf16.gmra.mxu0 %v2288
    %v2370 = vpop.f32.mrf.mxu0
    %v2371 = vadd.f32 %v2028, %v2370
    %v2372 = vpop.f32.mrf.mxu0
    %v2373 = vadd.f32 %v2032, %v2372
    %v2374 = vpop.f32.mrf.mxu0
    %v2375 = vpop.f32.mrf.mxu0
    %2376 = vdwg.mxu0
    %v2377 = vxor.u32 %v2330, 2147483648
    %v2378 = vxor.u32 %v2332, 2147483648
    %v2379 = vxor.u32 %v2371, 2147483648
    %v2380 = vxor.u32 %v2373, 2147483648
    %v2381 = vmul.f32 %v2377, 1.442695
    %v2382 = vpow.pop %v2381
    %v2383 = vmul.f32 %v2378, 1.442695
    %v2384 = vpow.pop %v2383
    %v2385 = vmul.f32 %v2379, 1.442695
    %v2386 = vpow.pop %v2385
    %v2387 = vmul.f32 %v2380, 1.442695
    %v2388 = vpow.pop %v2387
    %v2389 = vadd.f32 %v2382, 1.0
    %v2390 = vadd.f32 %v2384, 1.0
    %v2391 = vadd.f32 %v2386, 1.0
    %v2392 = vadd.f32 %v2388, 1.0
    %v2393 = vrcp.pop %v2389
    %v2394 = vmul.f32 1.0, %v2393
    %v2395 = vrcp.pop %v2390
    %v2396 = vmul.f32 1.0, %v2395
    %v2397 = vrcp.pop %v2391
    %v2398 = vmul.f32 1.0, %v2397
    %v2399 = vrcp.pop %v2392
    %v2400 = vmul.f32 1.0, %v2399
    %v2401 = vmul.f32 %v2398, 2.0
    %v2402 = vsub.f32 %v2401, 1.0
    %v2403 = vmul.f32 %v2396, %v2147
    %v2404 = vmul.f32 %v2394, %v2402
    %v2405 = vadd.f32 %v2403, %v2404
    %v2406 = vtanh.pop %v2405
    %v2407 = vmul.f32 %v2400, %v2406
    %2408 = vmatprep.subr.bf16.mxu0 %v1477
    %2409 = vmatpush1.bf16.msra.mxu0 %v1476
    %2410 = vmatprep.subr.bf16.mxu0 %v1473
    %2411 = vmatpush1.bf16.msra.mxu0 %v1472
    %2412 = vmatprep.subr.bf16.mxu0 %v1469
    %2413 = vmatpush1.bf16.msra.mxu0 %v1468
    %2414 = vmatprep.subr.bf16.mxu0 %v1465
    %2415 = vmatpush1.bf16.msra.mxu0 %v1464
    %2416 = vmatprep.subr.bf16.mxu0 %v1461
    %2417 = vmatpush1.bf16.msra.mxu0 %v1460
    %2418 = vmatprep.subr.bf16.mxu0 %v1457
    %2419 = vmatpush1.bf16.msra.mxu0 %v1456
    %2420 = vmatprep.subr.bf16.mxu0 %v1453
    %2421 = vmatpush1.bf16.msra.mxu0 %v1452
    %2422 = vmatprep.subr.bf16.mxu0 %v1449
    %2423 = vmatpush1.bf16.msra.mxu0 %v1448
    %2424 = vmatprep.subr.bf16.mxu0 0
    %2425 = vmatpush2.bf16.msra.mxu0 0
    %2426 = vmatprep.subr.bf16.mxu0 0
    %2427 = vmatpush2.bf16.msra.mxu0 0
    %2428 = vmatprep.subr.bf16.mxu0 0
    %2429 = vmatpush2.bf16.msra.mxu0 0
    %2430 = vmatprep.subr.bf16.mxu0 0
    %2431 = vmatpush2.bf16.msra.mxu0 0
    %2432 = vmatprep.subr.bf16.mxu0 0
    %2433 = vmatpush2.bf16.msra.mxu0 0
    %2434 = vmatprep.subr.bf16.mxu0 0
    %2435 = vmatpush2.bf16.msra.mxu0 0
    %2436 = vmatprep.subr.bf16.mxu0 0
    %2437 = vmatpush2.bf16.msra.mxu0 0
    %2438 = vmatprep.subr.bf16.mxu0 0
    %2439 = vmatpush2.bf16.msra.mxu0 0
    %2440 = vmatprep.mubr.bf16.mxu0 0
    %2441 = vmatmul.mubr.bf16.gmra.mxu0 %v2288
    %v2442 = vpop.f32.mrf.mxu0
    %v2443 = vadd.f32 0.0, %v2442
    %v2444 = vpop.f32.mrf.mxu0
    %v2445 = vadd.f32 0.0, %v2444
    %v2446 = vpop.f32.mrf.mxu0
    %v2447 = vpop.f32.mrf.mxu0
    %2448 = vdwg.mxu0
    %2449 = vmatprep.subr.bf16.mxu0 %v1479
    %2450 = vmatpush1.bf16.msra.mxu0 %v1478
    %2451 = vmatprep.subr.bf16.mxu0 %v1475
    %2452 = vmatpush1.bf16.msra.mxu0 %v1474
    %2453 = vmatprep.subr.bf16.mxu0 %v1471
    %2454 = vmatpush1.bf16.msra.mxu0 %v1470
    %2455 = vmatprep.subr.bf16.mxu0 %v1467
    %2456 = vmatpush1.bf16.msra.mxu0 %v1466
    %2457 = vmatprep.subr.bf16.mxu0 %v1463
    %2458 = vmatpush1.bf16.msra.mxu0 %v1462
    %2459 = vmatprep.subr.bf16.mxu0 %v1459
    %2460 = vmatpush1.bf16.msra.mxu0 %v1458
    %2461 = vmatprep.subr.bf16.mxu0 %v1455
    %2462 = vmatpush1.bf16.msra.mxu0 %v1454
    %2463 = vmatprep.subr.bf16.mxu0 %v1451
    %2464 = vmatpush1.bf16.msra.mxu0 %v1450
    %2465 = vmatprep.subr.bf16.mxu0 0
    %2466 = vmatpush2.bf16.msra.mxu0 0
    %2467 = vmatprep.subr.bf16.mxu0 0
    %2468 = vmatpush2.bf16.msra.mxu0 0
    %2469 = vmatprep.subr.bf16.mxu0 0
    %2470 = vmatpush2.bf16.msra.mxu0 0
    %2471 = vmatprep.subr.bf16.mxu0 0
    %2472 = vmatpush2.bf16.msra.mxu0 0
    %2473 = vmatprep.subr.bf16.mxu0 0
    %2474 = vmatpush2.bf16.msra.mxu0 0
    %2475 = vmatprep.subr.bf16.mxu0 0
    %2476 = vmatpush2.bf16.msra.mxu0 0
    %2477 = vmatprep.subr.bf16.mxu0 0
    %2478 = vmatpush2.bf16.msra.mxu0 0
    %2479 = vmatprep.subr.bf16.mxu0 0
    %2480 = vmatpush2.bf16.msra.mxu0 0
    %2481 = vmatprep.mubr.bf16.mxu0 0
    %2482 = vmatmul.mubr.bf16.gmra.mxu0 %v2288
    %v2483 = vpop.f32.mrf.mxu0
    %v2484 = vadd.f32 0.0, %v2483
    %v2485 = vpop.f32.mrf.mxu0
    %v2486 = vadd.f32 0.0, %v2485
    %v2487 = vpop.f32.mrf.mxu0
    %v2488 = vpop.f32.mrf.mxu0
    %2489 = vdwg.mxu0
    %v2494 = vrot.slane %v2443, 6
    %v2495 = vrot.slane %v2445, 6
    %v2496 = vrot.slane %v2484, 6
    %v2497 = vrot.slane %v2486, 6
    %v2502 = vadd.f32 %v1273, %v2494
    %v2503 = vadd.f32 %v1275, %v2495
    %v2504 = vadd.f32 %v1314, %v2496
    %v2505 = vadd.f32 %v1316, %v2497
    %v2506 = vxor.u32 %v2502, 2147483648
    %v2507 = vxor.u32 %v2503, 2147483648
    %v2508 = vxor.u32 %v2504, 2147483648
    %v2509 = vxor.u32 %v2505, 2147483648
    %v2510 = vmul.f32 %v2506, 1.442695
    %v2511 = vpow.pop %v2510
    %v2512 = vmul.f32 %v2507, 1.442695
    %v2513 = vpow.pop %v2512
    %v2514 = vmul.f32 %v2508, 1.442695
    %v2515 = vpow.pop %v2514
    %v2516 = vmul.f32 %v2509, 1.442695
    %v2517 = vpow.pop %v2516
    %v2518 = vadd.f32 %v2511, 1.0
    %v2519 = vadd.f32 %v2513, 1.0
    %v2520 = vadd.f32 %v2515, 1.0
    %v2521 = vadd.f32 %v2517, 1.0
    %v2522 = vrcp.pop %v2518
    %v2523 = vmul.f32 1.0, %v2522
    %v2524 = vrcp.pop %v2519
    %v2525 = vmul.f32 1.0, %v2524
    %v2526 = vrcp.pop %v2520
    %v2527 = vmul.f32 1.0, %v2526
    %v2528 = vrcp.pop %v2521
    %v2529 = vmul.f32 1.0, %v2528
    %v2530 = vmul.f32 %v2527, 2.0
    %v2531 = vsub.f32 %v2530, 1.0
    %v2533 = vrot.slane %v2279, 7
    %v2535 = vmul.f32 %v2525, %v2533
    %v2536 = vmul.f32 %v2523, %v2531
    %v2537 = vadd.f32 %v2535, %v2536
    %v2538 = vtanh.pop %v2537
    %v2539 = vmul.f32 %v2529, %v2538
    %v2541 = vrot.slane %v2407, 6
    %v2543 = vpack.c.bf16 %v2539, %v2539
    %v2544 = vpack.c.bf16 %v2541, %v2541
    %v2547 = vrot.slane %v2543, 1
    %v2548 = vrot.slane %v2544, 1
    %2551 = vmatprep.subr.bf16.mxu0 %v1917
    %2552 = vmatpush1.bf16.msra.mxu0 %v1916
    %2553 = vmatprep.subr.bf16.mxu0 %v1913
    %2554 = vmatpush1.bf16.msra.mxu0 %v1912
    %2555 = vmatprep.subr.bf16.mxu0 %v1909
    %2556 = vmatpush1.bf16.msra.mxu0 %v1908
    %2557 = vmatprep.subr.bf16.mxu0 %v1905
    %2558 = vmatpush1.bf16.msra.mxu0 %v1904
    %2559 = vmatprep.subr.bf16.mxu0 %v1901
    %2560 = vmatpush1.bf16.msra.mxu0 %v1900
    %2561 = vmatprep.subr.bf16.mxu0 %v1897
    %2562 = vmatpush1.bf16.msra.mxu0 %v1896
    %2563 = vmatprep.subr.bf16.mxu0 %v1893
    %2564 = vmatpush1.bf16.msra.mxu0 %v1892
    %2565 = vmatprep.subr.bf16.mxu0 %v1889
    %2566 = vmatpush1.bf16.msra.mxu0 %v1888
    %2567 = vmatprep.subr.bf16.mxu0 %v1949
    %2568 = vmatpush2.bf16.msra.mxu0 %v1948
    %2569 = vmatprep.subr.bf16.mxu0 %v1945
    %2570 = vmatpush2.bf16.msra.mxu0 %v1944
    %2571 = vmatprep.subr.bf16.mxu0 %v1941
    %2572 = vmatpush2.bf16.msra.mxu0 %v1940
    %2573 = vmatprep.subr.bf16.mxu0 %v1937
    %2574 = vmatpush2.bf16.msra.mxu0 %v1936
    %2575 = vmatprep.subr.bf16.mxu0 %v1933
    %2576 = vmatpush2.bf16.msra.mxu0 %v1932
    %2577 = vmatprep.subr.bf16.mxu0 %v1929
    %2578 = vmatpush2.bf16.msra.mxu0 %v1928
    %2579 = vmatprep.subr.bf16.mxu0 %v1925
    %2580 = vmatpush2.bf16.msra.mxu0 %v1924
    %2581 = vmatprep.subr.bf16.mxu0 %v1921
    %2582 = vmatpush2.bf16.msra.mxu0 %v1920
    %2583 = vmatprep.mubr.bf16.mxu0 %v2548
    %2584 = vmatmul.mubr.bf16.gmra.mxu0 %v2547
    %v2585 = vpop.f32.mrf.mxu0
    %v2586 = vadd.f32 %v2020, %v2585
    %v2587 = vpop.f32.mrf.mxu0
    %v2588 = vadd.f32 %v2024, %v2587
    %v2589 = vpop.f32.mrf.mxu0
    %v2590 = vpop.f32.mrf.mxu0
    %2591 = vdwg.mxu0
    %2592 = vmatprep.subr.bf16.mxu0 %v1919
    %2593 = vmatpush1.bf16.msra.mxu0 %v1918
    %2594 = vmatprep.subr.bf16.mxu0 %v1915
    %2595 = vmatpush1.bf16.msra.mxu0 %v1914
    %2596 = vmatprep.subr.bf16.mxu0 %v1911
    %2597 = vmatpush1.bf16.msra.mxu0 %v1910
    %2598 = vmatprep.subr.bf16.mxu0 %v1907
    %2599 = vmatpush1.bf16.msra.mxu0 %v1906
    %2600 = vmatprep.subr.bf16.mxu0 %v1903
    %2601 = vmatpush1.bf16.msra.mxu0 %v1902
    %2602 = vmatprep.subr.bf16.mxu0 %v1899
    %2603 = vmatpush1.bf16.msra.mxu0 %v1898
    %2604 = vmatprep.subr.bf16.mxu0 %v1895
    %2605 = vmatpush1.bf16.msra.mxu0 %v1894
    %2606 = vmatprep.subr.bf16.mxu0 %v1891
    %2607 = vmatpush1.bf16.msra.mxu0 %v1890
    %2608 = vmatprep.subr.bf16.mxu0 %v1951
    %2609 = vmatpush2.bf16.msra.mxu0 %v1950
    %2610 = vmatprep.subr.bf16.mxu0 %v1947
    %2611 = vmatpush2.bf16.msra.mxu0 %v1946
    %2612 = vmatprep.subr.bf16.mxu0 %v1943
    %2613 = vmatpush2.bf16.msra.mxu0 %v1942
    %2614 = vmatprep.subr.bf16.mxu0 %v1939
    %2615 = vmatpush2.bf16.msra.mxu0 %v1938
    %2616 = vmatprep.subr.bf16.mxu0 %v1935
    %2617 = vmatpush2.bf16.msra.mxu0 %v1934
    %2618 = vmatprep.subr.bf16.mxu0 %v1931
    %2619 = vmatpush2.bf16.msra.mxu0 %v1930
    %2620 = vmatprep.subr.bf16.mxu0 %v1927
    %2621 = vmatpush2.bf16.msra.mxu0 %v1926
    %2622 = vmatprep.subr.bf16.mxu0 %v1923
    %2623 = vmatpush2.bf16.msra.mxu0 %v1922
    %2624 = vmatprep.mubr.bf16.mxu0 %v2548
    %2625 = vmatmul.mubr.bf16.gmra.mxu0 %v2547
    %v2626 = vpop.f32.mrf.mxu0
    %v2627 = vadd.f32 %v2028, %v2626
    %v2628 = vpop.f32.mrf.mxu0
    %v2629 = vadd.f32 %v2032, %v2628
    %v2630 = vpop.f32.mrf.mxu0
    %v2631 = vpop.f32.mrf.mxu0
    %2632 = vdwg.mxu0
    %v2633 = vxor.u32 %v2586, 2147483648
    %v2634 = vxor.u32 %v2588, 2147483648
    %v2635 = vxor.u32 %v2627, 2147483648
    %v2636 = vxor.u32 %v2629, 2147483648
    %v2637 = vmul.f32 %v2633, 1.442695
    %v2638 = vpow.pop %v2637
    %v2639 = vmul.f32 %v2634, 1.442695
    %v2640 = vpow.pop %v2639
    %v2641 = vmul.f32 %v2635, 1.442695
    %v2642 = vpow.pop %v2641
    %v2643 = vmul.f32 %v2636, 1.442695
    %v2644 = vpow.pop %v2643
    %v2645 = vadd.f32 %v2638, 1.0
    %v2646 = vadd.f32 %v2640, 1.0
    %v2647 = vadd.f32 %v2642, 1.0
    %v2648 = vadd.f32 %v2644, 1.0
    %v2649 = vrcp.pop %v2645
    %v2650 = vmul.f32 1.0, %v2649
    %v2651 = vrcp.pop %v2646
    %v2652 = vmul.f32 1.0, %v2651
    %v2653 = vrcp.pop %v2647
    %v2654 = vmul.f32 1.0, %v2653
    %v2655 = vrcp.pop %v2648
    %v2656 = vmul.f32 1.0, %v2655
    %v2657 = vmul.f32 %v2654, 2.0
    %v2658 = vsub.f32 %v2657, 1.0
    %v2659 = vmul.f32 %v2652, %v2405
    %v2660 = vmul.f32 %v2650, %v2658
    %v2661 = vadd.f32 %v2659, %v2660
    %v2662 = vtanh.pop %v2661
    %v2663 = vmul.f32 %v2656, %v2662
    %2664 = vmatprep.subr.bf16.mxu0 %v1477
    %2665 = vmatpush1.bf16.msra.mxu0 %v1476
    %2666 = vmatprep.subr.bf16.mxu0 %v1473
    %2667 = vmatpush1.bf16.msra.mxu0 %v1472
    %2668 = vmatprep.subr.bf16.mxu0 %v1469
    %2669 = vmatpush1.bf16.msra.mxu0 %v1468
    %2670 = vmatprep.subr.bf16.mxu0 %v1465
    %2671 = vmatpush1.bf16.msra.mxu0 %v1464
    %2672 = vmatprep.subr.bf16.mxu0 %v1461
    %2673 = vmatpush1.bf16.msra.mxu0 %v1460
    %2674 = vmatprep.subr.bf16.mxu0 %v1457
    %2675 = vmatpush1.bf16.msra.mxu0 %v1456
    %2676 = vmatprep.subr.bf16.mxu0 %v1453
    %2677 = vmatpush1.bf16.msra.mxu0 %v1452
    %2678 = vmatprep.subr.bf16.mxu0 %v1449
    %2679 = vmatpush1.bf16.msra.mxu0 %v1448
    %2680 = vmatprep.subr.bf16.mxu0 0
    %2681 = vmatpush2.bf16.msra.mxu0 0
    %2682 = vmatprep.subr.bf16.mxu0 0
    %2683 = vmatpush2.bf16.msra.mxu0 0
    %2684 = vmatprep.subr.bf16.mxu0 0
    %2685 = vmatpush2.bf16.msra.mxu0 0
    %2686 = vmatprep.subr.bf16.mxu0 0
    %2687 = vmatpush2.bf16.msra.mxu0 0
    %2688 = vmatprep.subr.bf16.mxu0 0
    %2689 = vmatpush2.bf16.msra.mxu0 0
    %2690 = vmatprep.subr.bf16.mxu0 0
    %2691 = vmatpush2.bf16.msra.mxu0 0
    %2692 = vmatprep.subr.bf16.mxu0 0
    %2693 = vmatpush2.bf16.msra.mxu0 0
    %2694 = vmatprep.subr.bf16.mxu0 0
    %2695 = vmatpush2.bf16.msra.mxu0 0
    %2696 = vmatprep.mubr.bf16.mxu0 0
    %2697 = vmatmul.mubr.bf16.gmra.mxu0 %v2547
    %v2698 = vpop.f32.mrf.mxu0
    %v2699 = vadd.f32 0.0, %v2698
    %v2700 = vpop.f32.mrf.mxu0
    %v2701 = vadd.f32 0.0, %v2700
    %v2702 = vpop.f32.mrf.mxu0
    %v2703 = vpop.f32.mrf.mxu0
    %2704 = vdwg.mxu0
    %2705 = vmatprep.subr.bf16.mxu0 %v1479
    %2706 = vmatpush1.bf16.msra.mxu0 %v1478
    %2707 = vmatprep.subr.bf16.mxu0 %v1475
    %2708 = vmatpush1.bf16.msra.mxu0 %v1474
    %2709 = vmatprep.subr.bf16.mxu0 %v1471
    %2710 = vmatpush1.bf16.msra.mxu0 %v1470
    %2711 = vmatprep.subr.bf16.mxu0 %v1467
    %2712 = vmatpush1.bf16.msra.mxu0 %v1466
    %2713 = vmatprep.subr.bf16.mxu0 %v1463
    %2714 = vmatpush1.bf16.msra.mxu0 %v1462
    %2715 = vmatprep.subr.bf16.mxu0 %v1459
    %2716 = vmatpush1.bf16.msra.mxu0 %v1458
    %2717 = vmatprep.subr.bf16.mxu0 %v1455
    %2718 = vmatpush1.bf16.msra.mxu0 %v1454
    %2719 = vmatprep.subr.bf16.mxu0 %v1451
    %2720 = vmatpush1.bf16.msra.mxu0 %v1450
    %2721 = vmatprep.subr.bf16.mxu0 0
    %2722 = vmatpush2.bf16.msra.mxu0 0
    %2723 = vmatprep.subr.bf16.mxu0 0
    %2724 = vmatpush2.bf16.msra.mxu0 0
    %2725 = vmatprep.subr.bf16.mxu0 0
    %2726 = vmatpush2.bf16.msra.mxu0 0
    %2727 = vmatprep.subr.bf16.mxu0 0
    %2728 = vmatpush2.bf16.msra.mxu0 0
    %2729 = vmatprep.subr.bf16.mxu0 0
    %2730 = vmatpush2.bf16.msra.mxu0 0
    %2731 = vmatprep.subr.bf16.mxu0 0
    %2732 = vmatpush2.bf16.msra.mxu0 0
    %2733 = vmatprep.subr.bf16.mxu0 0
    %2734 = vmatpush2.bf16.msra.mxu0 0
    %2735 = vmatprep.subr.bf16.mxu0 0
    %2736 = vmatpush2.bf16.msra.mxu0 0
    %2737 = vmatprep.mubr.bf16.mxu0 0
    %2738 = vmatmul.mubr.bf16.gmra.mxu0 %v2547
    %v2739 = vpop.f32.mrf.mxu0
    %v2740 = vadd.f32 0.0, %v2739
    %v2741 = vpop.f32.mrf.mxu0
    %v2742 = vadd.f32 0.0, %v2741
    %v2743 = vpop.f32.mrf.mxu0
    %v2744 = vpop.f32.mrf.mxu0
    %2745 = vdwg.mxu0
    %v2750 = vrot.slane %v2699, 5
    %v2751 = vrot.slane %v2701, 5
    %v2752 = vrot.slane %v2740, 5
    %v2753 = vrot.slane %v2742, 5
    %v2758 = vadd.f32 %v1273, %v2750
    %v2759 = vadd.f32 %v1275, %v2751
    %v2760 = vadd.f32 %v1314, %v2752
    %v2761 = vadd.f32 %v1316, %v2753
    %v2762 = vxor.u32 %v2758, 2147483648
    %v2763 = vxor.u32 %v2759, 2147483648
    %v2764 = vxor.u32 %v2760, 2147483648
    %v2765 = vxor.u32 %v2761, 2147483648
    %v2766 = vmul.f32 %v2762, 1.442695
    %v2767 = vpow.pop %v2766
    %v2768 = vmul.f32 %v2763, 1.442695
    %v2769 = vpow.pop %v2768
    %v2770 = vmul.f32 %v2764, 1.442695
    %v2771 = vpow.pop %v2770
    %v2772 = vmul.f32 %v2765, 1.442695
    %v2773 = vpow.pop %v2772
    %v2774 = vadd.f32 %v2767, 1.0
    %v2775 = vadd.f32 %v2769, 1.0
    %v2776 = vadd.f32 %v2771, 1.0
    %v2777 = vadd.f32 %v2773, 1.0
    %v2778 = vrcp.pop %v2774
    %v2779 = vmul.f32 1.0, %v2778
    %v2780 = vrcp.pop %v2775
    %v2781 = vmul.f32 1.0, %v2780
    %v2782 = vrcp.pop %v2776
    %v2783 = vmul.f32 1.0, %v2782
    %v2784 = vrcp.pop %v2777
    %v2785 = vmul.f32 1.0, %v2784
    %v2786 = vmul.f32 %v2783, 2.0
    %v2787 = vsub.f32 %v2786, 1.0
    %v2789 = vrot.slane %v2537, 7
    %v2791 = vmul.f32 %v2781, %v2789
    %v2792 = vmul.f32 %v2779, %v2787
    %v2793 = vadd.f32 %v2791, %v2792
    %v2794 = vtanh.pop %v2793
    %v2795 = vmul.f32 %v2785, %v2794
    %v2797 = vrot.slane %v2663, 5
    %v2799 = vpack.c.bf16 %v2795, %v2795
    %v2800 = vpack.c.bf16 %v2797, %v2797
    %v2802 = vshrl.u32 %v2799, 16
    %v2804 = vrot.slane %v2802, 1
    %v2806 = vshrl.u32 %v2800, 16
    %v2808 = vrot.slane %v2806, 1
    %2811 = vmatprep.subr.bf16.mxu0 %v1917
    %2812 = vmatpush1.bf16.msra.mxu0 %v1916
    %2813 = vmatprep.subr.bf16.mxu0 %v1913
    %2814 = vmatpush1.bf16.msra.mxu0 %v1912
    %2815 = vmatprep.subr.bf16.mxu0 %v1909
    %2816 = vmatpush1.bf16.msra.mxu0 %v1908
    %2817 = vmatprep.subr.bf16.mxu0 %v1905
    %2818 = vmatpush1.bf16.msra.mxu0 %v1904
    %2819 = vmatprep.subr.bf16.mxu0 %v1901
    %2820 = vmatpush1.bf16.msra.mxu0 %v1900
    %2821 = vmatprep.subr.bf16.mxu0 %v1897
    %2822 = vmatpush1.bf16.msra.mxu0 %v1896
    %2823 = vmatprep.subr.bf16.mxu0 %v1893
    %2824 = vmatpush1.bf16.msra.mxu0 %v1892
    %2825 = vmatprep.subr.bf16.mxu0 %v1889
    %2826 = vmatpush1.bf16.msra.mxu0 %v1888
    %2827 = vmatprep.subr.bf16.mxu0 %v1949
    %2828 = vmatpush2.bf16.msra.mxu0 %v1948
    %2829 = vmatprep.subr.bf16.mxu0 %v1945
    %2830 = vmatpush2.bf16.msra.mxu0 %v1944
    %2831 = vmatprep.subr.bf16.mxu0 %v1941
    %2832 = vmatpush2.bf16.msra.mxu0 %v1940
    %2833 = vmatprep.subr.bf16.mxu0 %v1937
    %2834 = vmatpush2.bf16.msra.mxu0 %v1936
    %2835 = vmatprep.subr.bf16.mxu0 %v1933
    %2836 = vmatpush2.bf16.msra.mxu0 %v1932
    %2837 = vmatprep.subr.bf16.mxu0 %v1929
    %2838 = vmatpush2.bf16.msra.mxu0 %v1928
    %2839 = vmatprep.subr.bf16.mxu0 %v1925
    %2840 = vmatpush2.bf16.msra.mxu0 %v1924
    %2841 = vmatprep.subr.bf16.mxu0 %v1921
    %2842 = vmatpush2.bf16.msra.mxu0 %v1920
    %2843 = vmatprep.mubr.bf16.mxu0 %v2808
    %2844 = vmatmul.mubr.bf16.gmra.mxu0 %v2804
    %v2845 = vpop.f32.mrf.mxu0
    %v2846 = vadd.f32 %v2020, %v2845
    %v2847 = vpop.f32.mrf.mxu0
    %v2848 = vadd.f32 %v2024, %v2847
    %v2849 = vpop.f32.mrf.mxu0
    %v2850 = vpop.f32.mrf.mxu0
    %2851 = vdwg.mxu0
    %2852 = vmatprep.subr.bf16.mxu0 %v1919
    %2853 = vmatpush1.bf16.msra.mxu0 %v1918
    %2854 = vmatprep.subr.bf16.mxu0 %v1915
    %2855 = vmatpush1.bf16.msra.mxu0 %v1914
    %2856 = vmatprep.subr.bf16.mxu0 %v1911
    %2857 = vmatpush1.bf16.msra.mxu0 %v1910
    %2858 = vmatprep.subr.bf16.mxu0 %v1907
    %2859 = vmatpush1.bf16.msra.mxu0 %v1906
    %2860 = vmatprep.subr.bf16.mxu0 %v1903
    %2861 = vmatpush1.bf16.msra.mxu0 %v1902
    %2862 = vmatprep.subr.bf16.mxu0 %v1899
    %2863 = vmatpush1.bf16.msra.mxu0 %v1898
    %2864 = vmatprep.subr.bf16.mxu0 %v1895
    %2865 = vmatpush1.bf16.msra.mxu0 %v1894
    %2866 = vmatprep.subr.bf16.mxu0 %v1891
    %2867 = vmatpush1.bf16.msra.mxu0 %v1890
    %2868 = vmatprep.subr.bf16.mxu0 %v1951
    %2869 = vmatpush2.bf16.msra.mxu0 %v1950
    %2870 = vmatprep.subr.bf16.mxu0 %v1947
    %2871 = vmatpush2.bf16.msra.mxu0 %v1946
    %2872 = vmatprep.subr.bf16.mxu0 %v1943
    %2873 = vmatpush2.bf16.msra.mxu0 %v1942
    %2874 = vmatprep.subr.bf16.mxu0 %v1939
    %2875 = vmatpush2.bf16.msra.mxu0 %v1938
    %2876 = vmatprep.subr.bf16.mxu0 %v1935
    %2877 = vmatpush2.bf16.msra.mxu0 %v1934
    %2878 = vmatprep.subr.bf16.mxu0 %v1931
    %2879 = vmatpush2.bf16.msra.mxu0 %v1930
    %2880 = vmatprep.subr.bf16.mxu0 %v1927
    %2881 = vmatpush2.bf16.msra.mxu0 %v1926
    %2882 = vmatprep.subr.bf16.mxu0 %v1923
    %2883 = vmatpush2.bf16.msra.mxu0 %v1922
    %2884 = vmatprep.mubr.bf16.mxu0 %v2808
    %2885 = vmatmul.mubr.bf16.gmra.mxu0 %v2804
    %v2886 = vpop.f32.mrf.mxu0
    %v2887 = vadd.f32 %v2028, %v2886
    %v2888 = vpop.f32.mrf.mxu0
    %v2889 = vadd.f32 %v2032, %v2888
    %v2890 = vpop.f32.mrf.mxu0
    %v2891 = vpop.f32.mrf.mxu0
    %2892 = vdwg.mxu0
    %v2893 = vxor.u32 %v2846, 2147483648
    %v2894 = vxor.u32 %v2848, 2147483648
    %v2895 = vxor.u32 %v2887, 2147483648
    %v2896 = vxor.u32 %v2889, 2147483648
    %v2897 = vmul.f32 %v2893, 1.442695
    %v2898 = vpow.pop %v2897
    %v2899 = vmul.f32 %v2894, 1.442695
    %v2900 = vpow.pop %v2899
    %v2901 = vmul.f32 %v2895, 1.442695
    %v2902 = vpow.pop %v2901
    %v2903 = vmul.f32 %v2896, 1.442695
    %v2904 = vpow.pop %v2903
    %v2905 = vadd.f32 %v2898, 1.0
    %v2906 = vadd.f32 %v2900, 1.0
    %v2907 = vadd.f32 %v2902, 1.0
    %v2908 = vadd.f32 %v2904, 1.0
    %v2909 = vrcp.pop %v2905
    %v2910 = vmul.f32 1.0, %v2909
    %v2911 = vrcp.pop %v2906
    %v2912 = vmul.f32 1.0, %v2911
    %v2913 = vrcp.pop %v2907
    %v2914 = vmul.f32 1.0, %v2913
    %v2915 = vrcp.pop %v2908
    %v2916 = vmul.f32 1.0, %v2915
    %v2917 = vmul.f32 %v2914, 2.0
    %v2918 = vsub.f32 %v2917, 1.0
    %v2919 = vmul.f32 %v2912, %v2661
    %v2920 = vmul.f32 %v2910, %v2918
    %v2921 = vadd.f32 %v2919, %v2920
    %v2922 = vtanh.pop %v2921
    %v2923 = vmul.f32 %v2916, %v2922
    %2924 = vmatprep.subr.bf16.mxu0 %v1477
    %2925 = vmatpush1.bf16.msra.mxu0 %v1476
    %2926 = vmatprep.subr.bf16.mxu0 %v1473
    %2927 = vmatpush1.bf16.msra.mxu0 %v1472
    %2928 = vmatprep.subr.bf16.mxu0 %v1469
    %2929 = vmatpush1.bf16.msra.mxu0 %v1468
    %2930 = vmatprep.subr.bf16.mxu0 %v1465
    %2931 = vmatpush1.bf16.msra.mxu0 %v1464
    %2932 = vmatprep.subr.bf16.mxu0 %v1461
    %2933 = vmatpush1.bf16.msra.mxu0 %v1460
    %2934 = vmatprep.subr.bf16.mxu0 %v1457
    %2935 = vmatpush1.bf16.msra.mxu0 %v1456
    %2936 = vmatprep.subr.bf16.mxu0 %v1453
    %2937 = vmatpush1.bf16.msra.mxu0 %v1452
    %2938 = vmatprep.subr.bf16.mxu0 %v1449
    %2939 = vmatpush1.bf16.msra.mxu0 %v1448
    %2940 = vmatprep.subr.bf16.mxu0 0
    %2941 = vmatpush2.bf16.msra.mxu0 0
    %2942 = vmatprep.subr.bf16.mxu0 0
    %2943 = vmatpush2.bf16.msra.mxu0 0
    %2944 = vmatprep.subr.bf16.mxu0 0
    %2945 = vmatpush2.bf16.msra.mxu0 0
    %2946 = vmatprep.subr.bf16.mxu0 0
    %2947 = vmatpush2.bf16.msra.mxu0 0
    %2948 = vmatprep.subr.bf16.mxu0 0
    %2949 = vmatpush2.bf16.msra.mxu0 0
    %2950 = vmatprep.subr.bf16.mxu0 0
    %2951 = vmatpush2.bf16.msra.mxu0 0
    %2952 = vmatprep.subr.bf16.mxu0 0
    %2953 = vmatpush2.bf16.msra.mxu0 0
    %2954 = vmatprep.subr.bf16.mxu0 0
    %2955 = vmatpush2.bf16.msra.mxu0 0
    %2956 = vmatprep.mubr.bf16.mxu0 0
    %2957 = vmatmul.mubr.bf16.gmra.mxu0 %v2804
    %v2958 = vpop.f32.mrf.mxu0
    %v2959 = vadd.f32 0.0, %v2958
    %v2960 = vpop.f32.mrf.mxu0
    %v2961 = vadd.f32 0.0, %v2960
    %v2962 = vpop.f32.mrf.mxu0
    %v2963 = vpop.f32.mrf.mxu0
    %2964 = vdwg.mxu0
    %2965 = vmatprep.subr.bf16.mxu0 %v1479
    %2966 = vmatpush1.bf16.msra.mxu0 %v1478
    %2967 = vmatprep.subr.bf16.mxu0 %v1475
    %2968 = vmatpush1.bf16.msra.mxu0 %v1474
    %2969 = vmatprep.subr.bf16.mxu0 %v1471
    %2970 = vmatpush1.bf16.msra.mxu0 %v1470
    %2971 = vmatprep.subr.bf16.mxu0 %v1467
    %2972 = vmatpush1.bf16.msra.mxu0 %v1466
    %2973 = vmatprep.subr.bf16.mxu0 %v1463
    %2974 = vmatpush1.bf16.msra.mxu0 %v1462
    %2975 = vmatprep.subr.bf16.mxu0 %v1459
    %2976 = vmatpush1.bf16.msra.mxu0 %v1458
    %2977 = vmatprep.subr.bf16.mxu0 %v1455
    %2978 = vmatpush1.bf16.msra.mxu0 %v1454
    %2979 = vmatprep.subr.bf16.mxu0 %v1451
    %2980 = vmatpush1.bf16.msra.mxu0 %v1450
    %2981 = vmatprep.subr.bf16.mxu0 0
    %2982 = vmatpush2.bf16.msra.mxu0 0
    %2983 = vmatprep.subr.bf16.mxu0 0
    %2984 = vmatpush2.bf16.msra.mxu0 0
    %2985 = vmatprep.subr.bf16.mxu0 0
    %2986 = vmatpush2.bf16.msra.mxu0 0
    %2987 = vmatprep.subr.bf16.mxu0 0
    %2988 = vmatpush2.bf16.msra.mxu0 0
    %2989 = vmatprep.subr.bf16.mxu0 0
    %2990 = vmatpush2.bf16.msra.mxu0 0
    %2991 = vmatprep.subr.bf16.mxu0 0
    %2992 = vmatpush2.bf16.msra.mxu0 0
    %2993 = vmatprep.subr.bf16.mxu0 0
    %2994 = vmatpush2.bf16.msra.mxu0 0
    %2995 = vmatprep.subr.bf16.mxu0 0
    %2996 = vmatpush2.bf16.msra.mxu0 0
    %2997 = vmatprep.mubr.bf16.mxu0 0
    %2998 = vmatmul.mubr.bf16.gmra.mxu0 %v2804
    %v2999 = vpop.f32.mrf.mxu0
    %v3000 = vadd.f32 0.0, %v2999
    %v3001 = vpop.f32.mrf.mxu0
    %v3002 = vadd.f32 0.0, %v3001
    %v3003 = vpop.f32.mrf.mxu0
    %v3004 = vpop.f32.mrf.mxu0
    %3005 = vdwg.mxu0
    %v3010 = vrot.slane %v2959, 4
    %v3011 = vrot.slane %v2961, 4
    %v3012 = vrot.slane %v3000, 4
    %v3013 = vrot.slane %v3002, 4
    %v3018 = vadd.f32 %v1273, %v3010
    %v3019 = vadd.f32 %v1275, %v3011
    %v3020 = vadd.f32 %v1314, %v3012
    %v3021 = vadd.f32 %v1316, %v3013
    %v3022 = vxor.u32 %v3018, 2147483648
    %v3023 = vxor.u32 %v3019, 2147483648
    %v3024 = vxor.u32 %v3020, 2147483648
    %v3025 = vxor.u32 %v3021, 2147483648
    %v3026 = vmul.f32 %v3022, 1.442695
    %v3027 = vpow.pop %v3026
    %v3028 = vmul.f32 %v3023, 1.442695
    %v3029 = vpow.pop %v3028
    %v3030 = vmul.f32 %v3024, 1.442695
    %v3031 = vpow.pop %v3030
    %v3032 = vmul.f32 %v3025, 1.442695
    %v3033 = vpow.pop %v3032
    %v3034 = vadd.f32 %v3027, 1.0
    %v3035 = vadd.f32 %v3029, 1.0
    %v3036 = vadd.f32 %v3031, 1.0
    %v3037 = vadd.f32 %v3033, 1.0
    %v3038 = vrcp.pop %v3034
    %v3039 = vmul.f32 1.0, %v3038
    %v3040 = vrcp.pop %v3035
    %v3041 = vmul.f32 1.0, %v3040
    %v3042 = vrcp.pop %v3036
    %v3043 = vmul.f32 1.0, %v3042
    %v3044 = vrcp.pop %v3037
    %v3045 = vmul.f32 1.0, %v3044
    %v3046 = vmul.f32 %v3043, 2.0
    %v3047 = vsub.f32 %v3046, 1.0
    %v3049 = vrot.slane %v2793, 7
    %v3051 = vmul.f32 %v3041, %v3049
    %v3052 = vmul.f32 %v3039, %v3047
    %v3053 = vadd.f32 %v3051, %v3052
    %v3054 = vtanh.pop %v3053
    %v3055 = vmul.f32 %v3045, %v3054
    %v3057 = vrot.slane %v2923, 4
    %v3059 = vpack.c.bf16 %v3055, %v3055
    %v3060 = vpack.c.bf16 %v3057, %v3057
    %v3063 = vrot.slane %v3059, 2
    %v3064 = vrot.slane %v3060, 2
    %3067 = vmatprep.subr.bf16.mxu0 %v1917
    %3068 = vmatpush1.bf16.msra.mxu0 %v1916
    %3069 = vmatprep.subr.bf16.mxu0 %v1913
    %3070 = vmatpush1.bf16.msra.mxu0 %v1912
    %3071 = vmatprep.subr.bf16.mxu0 %v1909
    %3072 = vmatpush1.bf16.msra.mxu0 %v1908
    %3073 = vmatprep.subr.bf16.mxu0 %v1905
    %3074 = vmatpush1.bf16.msra.mxu0 %v1904
    %3075 = vmatprep.subr.bf16.mxu0 %v1901
    %3076 = vmatpush1.bf16.msra.mxu0 %v1900
    %3077 = vmatprep.subr.bf16.mxu0 %v1897
    %3078 = vmatpush1.bf16.msra.mxu0 %v1896
    %3079 = vmatprep.subr.bf16.mxu0 %v1893
    %3080 = vmatpush1.bf16.msra.mxu0 %v1892
    %3081 = vmatprep.subr.bf16.mxu0 %v1889
    %3082 = vmatpush1.bf16.msra.mxu0 %v1888
    %3083 = vmatprep.subr.bf16.mxu0 %v1949
    %3084 = vmatpush2.bf16.msra.mxu0 %v1948
    %3085 = vmatprep.subr.bf16.mxu0 %v1945
    %3086 = vmatpush2.bf16.msra.mxu0 %v1944
    %3087 = vmatprep.subr.bf16.mxu0 %v1941
    %3088 = vmatpush2.bf16.msra.mxu0 %v1940
    %3089 = vmatprep.subr.bf16.mxu0 %v1937
    %3090 = vmatpush2.bf16.msra.mxu0 %v1936
    %3091 = vmatprep.subr.bf16.mxu0 %v1933
    %3092 = vmatpush2.bf16.msra.mxu0 %v1932
    %3093 = vmatprep.subr.bf16.mxu0 %v1929
    %3094 = vmatpush2.bf16.msra.mxu0 %v1928
    %3095 = vmatprep.subr.bf16.mxu0 %v1925
    %3096 = vmatpush2.bf16.msra.mxu0 %v1924
    %3097 = vmatprep.subr.bf16.mxu0 %v1921
    %3098 = vmatpush2.bf16.msra.mxu0 %v1920
    %3099 = vmatprep.mubr.bf16.mxu0 %v3064
    %3100 = vmatmul.mubr.bf16.gmra.mxu0 %v3063
    %v3101 = vpop.f32.mrf.mxu0
    %v3102 = vadd.f32 %v2020, %v3101
    %v3103 = vpop.f32.mrf.mxu0
    %v3104 = vadd.f32 %v2024, %v3103
    %v3105 = vpop.f32.mrf.mxu0
    %v3106 = vpop.f32.mrf.mxu0
    %3107 = vdwg.mxu0
    %3108 = vmatprep.subr.bf16.mxu0 %v1919
    %3109 = vmatpush1.bf16.msra.mxu0 %v1918
    %3110 = vmatprep.subr.bf16.mxu0 %v1915
    %3111 = vmatpush1.bf16.msra.mxu0 %v1914
    %3112 = vmatprep.subr.bf16.mxu0 %v1911
    %3113 = vmatpush1.bf16.msra.mxu0 %v1910
    %3114 = vmatprep.subr.bf16.mxu0 %v1907
    %3115 = vmatpush1.bf16.msra.mxu0 %v1906
    %3116 = vmatprep.subr.bf16.mxu0 %v1903
    %3117 = vmatpush1.bf16.msra.mxu0 %v1902
    %3118 = vmatprep.subr.bf16.mxu0 %v1899
    %3119 = vmatpush1.bf16.msra.mxu0 %v1898
    %3120 = vmatprep.subr.bf16.mxu0 %v1895
    %3121 = vmatpush1.bf16.msra.mxu0 %v1894
    %3122 = vmatprep.subr.bf16.mxu0 %v1891
    %3123 = vmatpush1.bf16.msra.mxu0 %v1890
    %3124 = vmatprep.subr.bf16.mxu0 %v1951
    %3125 = vmatpush2.bf16.msra.mxu0 %v1950
    %3126 = vmatprep.subr.bf16.mxu0 %v1947
    %3127 = vmatpush2.bf16.msra.mxu0 %v1946
    %3128 = vmatprep.subr.bf16.mxu0 %v1943
    %3129 = vmatpush2.bf16.msra.mxu0 %v1942
    %3130 = vmatprep.subr.bf16.mxu0 %v1939
    %3131 = vmatpush2.bf16.msra.mxu0 %v1938
    %3132 = vmatprep.subr.bf16.mxu0 %v1935
    %3133 = vmatpush2.bf16.msra.mxu0 %v1934
    %3134 = vmatprep.subr.bf16.mxu0 %v1931
    %3135 = vmatpush2.bf16.msra.mxu0 %v1930
    %3136 = vmatprep.subr.bf16.mxu0 %v1927
    %3137 = vmatpush2.bf16.msra.mxu0 %v1926
    %3138 = vmatprep.subr.bf16.mxu0 %v1923
    %3139 = vmatpush2.bf16.msra.mxu0 %v1922
    %3140 = vmatprep.mubr.bf16.mxu0 %v3064
    %3141 = vmatmul.mubr.bf16.gmra.mxu0 %v3063
    %v3142 = vpop.f32.mrf.mxu0
    %v3143 = vadd.f32 %v2028, %v3142
    %v3144 = vpop.f32.mrf.mxu0
    %v3145 = vadd.f32 %v2032, %v3144
    %v3146 = vpop.f32.mrf.mxu0
    %v3147 = vpop.f32.mrf.mxu0
    %3148 = vdwg.mxu0
    %v3149 = vxor.u32 %v3102, 2147483648
    %v3150 = vxor.u32 %v3104, 2147483648
    %v3151 = vxor.u32 %v3143, 2147483648
    %v3152 = vxor.u32 %v3145, 2147483648
    %v3153 = vmul.f32 %v3149, 1.442695
    %v3154 = vpow.pop %v3153
    %v3155 = vmul.f32 %v3150, 1.442695
    %v3156 = vpow.pop %v3155
    %v3157 = vmul.f32 %v3151, 1.442695
    %v3158 = vpow.pop %v3157
    %v3159 = vmul.f32 %v3152, 1.442695
    %v3160 = vpow.pop %v3159
    %v3161 = vadd.f32 %v3154, 1.0
    %v3162 = vadd.f32 %v3156, 1.0
    %v3163 = vadd.f32 %v3158, 1.0
    %v3164 = vadd.f32 %v3160, 1.0
    %v3165 = vrcp.pop %v3161
    %v3166 = vmul.f32 1.0, %v3165
    %v3167 = vrcp.pop %v3162
    %v3168 = vmul.f32 1.0, %v3167
    %v3169 = vrcp.pop %v3163
    %v3170 = vmul.f32 1.0, %v3169
    %v3171 = vrcp.pop %v3164
    %v3172 = vmul.f32 1.0, %v3171
    %v3173 = vmul.f32 %v3170, 2.0
    %v3174 = vsub.f32 %v3173, 1.0
    %v3175 = vmul.f32 %v3168, %v2921
    %v3176 = vmul.f32 %v3166, %v3174
    %v3177 = vadd.f32 %v3175, %v3176
    %v3178 = vtanh.pop %v3177
    %v3179 = vmul.f32 %v3172, %v3178
    %3180 = vmatprep.subr.bf16.mxu0 %v1477
    %3181 = vmatpush1.bf16.msra.mxu0 %v1476
    %3182 = vmatprep.subr.bf16.mxu0 %v1473
    %3183 = vmatpush1.bf16.msra.mxu0 %v1472
    %3184 = vmatprep.subr.bf16.mxu0 %v1469
    %3185 = vmatpush1.bf16.msra.mxu0 %v1468
    %3186 = vmatprep.subr.bf16.mxu0 %v1465
    %3187 = vmatpush1.bf16.msra.mxu0 %v1464
    %3188 = vmatprep.subr.bf16.mxu0 %v1461
    %3189 = vmatpush1.bf16.msra.mxu0 %v1460
    %3190 = vmatprep.subr.bf16.mxu0 %v1457
    %3191 = vmatpush1.bf16.msra.mxu0 %v1456
    %3192 = vmatprep.subr.bf16.mxu0 %v1453
    %3193 = vmatpush1.bf16.msra.mxu0 %v1452
    %3194 = vmatprep.subr.bf16.mxu0 %v1449
    %3195 = vmatpush1.bf16.msra.mxu0 %v1448
    %3196 = vmatprep.subr.bf16.mxu0 0
    %3197 = vmatpush2.bf16.msra.mxu0 0
    %3198 = vmatprep.subr.bf16.mxu0 0
    %3199 = vmatpush2.bf16.msra.mxu0 0
    %3200 = vmatprep.subr.bf16.mxu0 0
    %3201 = vmatpush2.bf16.msra.mxu0 0
    %3202 = vmatprep.subr.bf16.mxu0 0
    %3203 = vmatpush2.bf16.msra.mxu0 0
    %3204 = vmatprep.subr.bf16.mxu0 0
    %3205 = vmatpush2.bf16.msra.mxu0 0
    %3206 = vmatprep.subr.bf16.mxu0 0
    %3207 = vmatpush2.bf16.msra.mxu0 0
    %3208 = vmatprep.subr.bf16.mxu0 0
    %3209 = vmatpush2.bf16.msra.mxu0 0
    %3210 = vmatprep.subr.bf16.mxu0 0
    %3211 = vmatpush2.bf16.msra.mxu0 0
    %3212 = vmatprep.mubr.bf16.mxu0 0
    %3213 = vmatmul.mubr.bf16.gmra.mxu0 %v3063
    %v3214 = vpop.f32.mrf.mxu0
    %v3215 = vadd.f32 0.0, %v3214
    %v3216 = vpop.f32.mrf.mxu0
    %v3217 = vadd.f32 0.0, %v3216
    %v3218 = vpop.f32.mrf.mxu0
    %v3219 = vpop.f32.mrf.mxu0
    %3220 = vdwg.mxu0
    %3221 = vmatprep.subr.bf16.mxu0 %v1479
    %3222 = vmatpush1.bf16.msra.mxu0 %v1478
    %3223 = vmatprep.subr.bf16.mxu0 %v1475
    %3224 = vmatpush1.bf16.msra.mxu0 %v1474
    %3225 = vmatprep.subr.bf16.mxu0 %v1471
    %3226 = vmatpush1.bf16.msra.mxu0 %v1470
    %3227 = vmatprep.subr.bf16.mxu0 %v1467
    %3228 = vmatpush1.bf16.msra.mxu0 %v1466
    %3229 = vmatprep.subr.bf16.mxu0 %v1463
    %3230 = vmatpush1.bf16.msra.mxu0 %v1462
    %3231 = vmatprep.subr.bf16.mxu0 %v1459
    %3232 = vmatpush1.bf16.msra.mxu0 %v1458
    %3233 = vmatprep.subr.bf16.mxu0 %v1455
    %3234 = vmatpush1.bf16.msra.mxu0 %v1454
    %3235 = vmatprep.subr.bf16.mxu0 %v1451
    %3236 = vmatpush1.bf16.msra.mxu0 %v1450
    %3237 = vmatprep.subr.bf16.mxu0 0
    %3238 = vmatpush2.bf16.msra.mxu0 0
    %3239 = vmatprep.subr.bf16.mxu0 0
    %3240 = vmatpush2.bf16.msra.mxu0 0
    %3241 = vmatprep.subr.bf16.mxu0 0
    %3242 = vmatpush2.bf16.msra.mxu0 0
    %3243 = vmatprep.subr.bf16.mxu0 0
    %3244 = vmatpush2.bf16.msra.mxu0 0
    %3245 = vmatprep.subr.bf16.mxu0 0
    %3246 = vmatpush2.bf16.msra.mxu0 0
    %3247 = vmatprep.subr.bf16.mxu0 0
    %3248 = vmatpush2.bf16.msra.mxu0 0
    %3249 = vmatprep.subr.bf16.mxu0 0
    %3250 = vmatpush2.bf16.msra.mxu0 0
    %3251 = vmatprep.subr.bf16.mxu0 0
    %3252 = vmatpush2.bf16.msra.mxu0 0
    %3253 = vmatprep.mubr.bf16.mxu0 0
    %3254 = vmatmul.mubr.bf16.gmra.mxu0 %v3063
    %v3255 = vpop.f32.mrf.mxu0
    %v3256 = vadd.f32 0.0, %v3255
    %v3257 = vpop.f32.mrf.mxu0
    %v3258 = vadd.f32 0.0, %v3257
    %v3259 = vpop.f32.mrf.mxu0
    %v3260 = vpop.f32.mrf.mxu0
    %3261 = vdwg.mxu0
    %v3266 = vrot.slane %v3215, 3
    %v3267 = vrot.slane %v3217, 3
    %v3268 = vrot.slane %v3256, 3
    %v3269 = vrot.slane %v3258, 3
    %v3274 = vadd.f32 %v1273, %v3266
    %v3275 = vadd.f32 %v1275, %v3267
    %v3276 = vadd.f32 %v1314, %v3268
    %v3277 = vadd.f32 %v1316, %v3269
    %v3278 = vxor.u32 %v3274, 2147483648
    %v3279 = vxor.u32 %v3275, 2147483648
    %v3280 = vxor.u32 %v3276, 2147483648
    %v3281 = vxor.u32 %v3277, 2147483648
    %v3282 = vmul.f32 %v3278, 1.442695
    %v3283 = vpow.pop %v3282
    %v3284 = vmul.f32 %v3279, 1.442695
    %v3285 = vpow.pop %v3284
    %v3286 = vmul.f32 %v3280, 1.442695
    %v3287 = vpow.pop %v3286
    %v3288 = vmul.f32 %v3281, 1.442695
    %v3289 = vpow.pop %v3288
    %v3290 = vadd.f32 %v3283, 1.0
    %v3291 = vadd.f32 %v3285, 1.0
    %v3292 = vadd.f32 %v3287, 1.0
    %v3293 = vadd.f32 %v3289, 1.0
    %v3294 = vrcp.pop %v3290
    %v3295 = vmul.f32 1.0, %v3294
    %v3296 = vrcp.pop %v3291
    %v3297 = vmul.f32 1.0, %v3296
    %v3298 = vrcp.pop %v3292
    %v3299 = vmul.f32 1.0, %v3298
    %v3300 = vrcp.pop %v3293
    %v3301 = vmul.f32 1.0, %v3300
    %v3302 = vmul.f32 %v3299, 2.0
    %v3303 = vsub.f32 %v3302, 1.0
    %v3305 = vrot.slane %v3053, 7
    %v3307 = vmul.f32 %v3297, %v3305
    %v3308 = vmul.f32 %v3295, %v3303
    %v3309 = vadd.f32 %v3307, %v3308
    %v3310 = vtanh.pop %v3309
    %v3311 = vmul.f32 %v3301, %v3310
    %v3313 = vrot.slane %v3179, 3
    %v3315 = vpack.c.bf16 %v3311, %v3311
    %v3316 = vpack.c.bf16 %v3313, %v3313
    %v3318 = vshrl.u32 %v3315, 16
    %v3320 = vrot.slane %v3318, 2
    %v3322 = vshrl.u32 %v3316, 16
    %v3324 = vrot.slane %v3322, 2
    %3327 = vmatprep.subr.bf16.mxu0 %v1917
    %3328 = vmatpush1.bf16.msra.mxu0 %v1916
    %3329 = vmatprep.subr.bf16.mxu0 %v1913
    %3330 = vmatpush1.bf16.msra.mxu0 %v1912
    %3331 = vmatprep.subr.bf16.mxu0 %v1909
    %3332 = vmatpush1.bf16.msra.mxu0 %v1908
    %3333 = vmatprep.subr.bf16.mxu0 %v1905
    %3334 = vmatpush1.bf16.msra.mxu0 %v1904
    %3335 = vmatprep.subr.bf16.mxu0 %v1901
    %3336 = vmatpush1.bf16.msra.mxu0 %v1900
    %3337 = vmatprep.subr.bf16.mxu0 %v1897
    %3338 = vmatpush1.bf16.msra.mxu0 %v1896
    %3339 = vmatprep.subr.bf16.mxu0 %v1893
    %3340 = vmatpush1.bf16.msra.mxu0 %v1892
    %3341 = vmatprep.subr.bf16.mxu0 %v1889
    %3342 = vmatpush1.bf16.msra.mxu0 %v1888
    %3343 = vmatprep.subr.bf16.mxu0 %v1949
    %3344 = vmatpush2.bf16.msra.mxu0 %v1948
    %3345 = vmatprep.subr.bf16.mxu0 %v1945
    %3346 = vmatpush2.bf16.msra.mxu0 %v1944
    %3347 = vmatprep.subr.bf16.mxu0 %v1941
    %3348 = vmatpush2.bf16.msra.mxu0 %v1940
    %3349 = vmatprep.subr.bf16.mxu0 %v1937
    %3350 = vmatpush2.bf16.msra.mxu0 %v1936
    %3351 = vmatprep.subr.bf16.mxu0 %v1933
    %3352 = vmatpush2.bf16.msra.mxu0 %v1932
    %3353 = vmatprep.subr.bf16.mxu0 %v1929
    %3354 = vmatpush2.bf16.msra.mxu0 %v1928
    %3355 = vmatprep.subr.bf16.mxu0 %v1925
    %3356 = vmatpush2.bf16.msra.mxu0 %v1924
    %3357 = vmatprep.subr.bf16.mxu0 %v1921
    %3358 = vmatpush2.bf16.msra.mxu0 %v1920
    %3359 = vmatprep.mubr.bf16.mxu0 %v3324
    %3360 = vmatmul.mubr.bf16.gmra.mxu0 %v3320
    %v3361 = vpop.f32.mrf.mxu0
    %v3362 = vadd.f32 %v2020, %v3361
    %v3363 = vpop.f32.mrf.mxu0
    %v3364 = vadd.f32 %v2024, %v3363
    %v3365 = vpop.f32.mrf.mxu0
    %v3366 = vpop.f32.mrf.mxu0
    %3367 = vdwg.mxu0
    %3368 = vmatprep.subr.bf16.mxu0 %v1919
    %3369 = vmatpush1.bf16.msra.mxu0 %v1918
    %3370 = vmatprep.subr.bf16.mxu0 %v1915
    %3371 = vmatpush1.bf16.msra.mxu0 %v1914
    %3372 = vmatprep.subr.bf16.mxu0 %v1911
    %3373 = vmatpush1.bf16.msra.mxu0 %v1910
    %3374 = vmatprep.subr.bf16.mxu0 %v1907
    %3375 = vmatpush1.bf16.msra.mxu0 %v1906
    %3376 = vmatprep.subr.bf16.mxu0 %v1903
    %3377 = vmatpush1.bf16.msra.mxu0 %v1902
    %3378 = vmatprep.subr.bf16.mxu0 %v1899
    %3379 = vmatpush1.bf16.msra.mxu0 %v1898
    %3380 = vmatprep.subr.bf16.mxu0 %v1895
    %3381 = vmatpush1.bf16.msra.mxu0 %v1894
    %3382 = vmatprep.subr.bf16.mxu0 %v1891
    %3383 = vmatpush1.bf16.msra.mxu0 %v1890
    %3384 = vmatprep.subr.bf16.mxu0 %v1951
    %3385 = vmatpush2.bf16.msra.mxu0 %v1950
    %3386 = vmatprep.subr.bf16.mxu0 %v1947
    %3387 = vmatpush2.bf16.msra.mxu0 %v1946
    %3388 = vmatprep.subr.bf16.mxu0 %v1943
    %3389 = vmatpush2.bf16.msra.mxu0 %v1942
    %3390 = vmatprep.subr.bf16.mxu0 %v1939
    %3391 = vmatpush2.bf16.msra.mxu0 %v1938
    %3392 = vmatprep.subr.bf16.mxu0 %v1935
    %3393 = vmatpush2.bf16.msra.mxu0 %v1934
    %3394 = vmatprep.subr.bf16.mxu0 %v1931
    %3395 = vmatpush2.bf16.msra.mxu0 %v1930
    %3396 = vmatprep.subr.bf16.mxu0 %v1927
    %3397 = vmatpush2.bf16.msra.mxu0 %v1926
    %3398 = vmatprep.subr.bf16.mxu0 %v1923
    %3399 = vmatpush2.bf16.msra.mxu0 %v1922
    %3400 = vmatprep.mubr.bf16.mxu0 %v3324
    %3401 = vmatmul.mubr.bf16.gmra.mxu0 %v3320
    %v3402 = vpop.f32.mrf.mxu0
    %v3403 = vadd.f32 %v2028, %v3402
    %v3404 = vpop.f32.mrf.mxu0
    %v3405 = vadd.f32 %v2032, %v3404
    %v3406 = vpop.f32.mrf.mxu0
    %v3407 = vpop.f32.mrf.mxu0
    %3408 = vdwg.mxu0
    %v3409 = vxor.u32 %v3362, 2147483648
    %v3410 = vxor.u32 %v3364, 2147483648
    %v3411 = vxor.u32 %v3403, 2147483648
    %v3412 = vxor.u32 %v3405, 2147483648
    %v3413 = vmul.f32 %v3409, 1.442695
    %v3414 = vpow.pop %v3413
    %v3415 = vmul.f32 %v3410, 1.442695
    %v3416 = vpow.pop %v3415
    %v3417 = vmul.f32 %v3411, 1.442695
    %v3418 = vpow.pop %v3417
    %v3419 = vmul.f32 %v3412, 1.442695
    %v3420 = vpow.pop %v3419
    %v3421 = vadd.f32 %v3414, 1.0
    %v3422 = vadd.f32 %v3416, 1.0
    %v3423 = vadd.f32 %v3418, 1.0
    %v3424 = vadd.f32 %v3420, 1.0
    %v3425 = vrcp.pop %v3421
    %v3426 = vmul.f32 1.0, %v3425
    %v3427 = vrcp.pop %v3422
    %v3428 = vmul.f32 1.0, %v3427
    %v3429 = vrcp.pop %v3423
    %v3430 = vmul.f32 1.0, %v3429
    %v3431 = vrcp.pop %v3424
    %v3432 = vmul.f32 1.0, %v3431
    %v3433 = vmul.f32 %v3430, 2.0
    %v3434 = vsub.f32 %v3433, 1.0
    %v3435 = vmul.f32 %v3428, %v3177
    %v3436 = vmul.f32 %v3426, %v3434
    %v3437 = vadd.f32 %v3435, %v3436
    %v3438 = vtanh.pop %v3437
    %v3439 = vmul.f32 %v3432, %v3438
    %3440 = vmatprep.subr.bf16.mxu0 %v1477
    %3441 = vmatpush1.bf16.msra.mxu0 %v1476
    %3442 = vmatprep.subr.bf16.mxu0 %v1473
    %3443 = vmatpush1.bf16.msra.mxu0 %v1472
    %3444 = vmatprep.subr.bf16.mxu0 %v1469
    %3445 = vmatpush1.bf16.msra.mxu0 %v1468
    %3446 = vmatprep.subr.bf16.mxu0 %v1465
    %3447 = vmatpush1.bf16.msra.mxu0 %v1464
    %3448 = vmatprep.subr.bf16.mxu0 %v1461
    %3449 = vmatpush1.bf16.msra.mxu0 %v1460
    %3450 = vmatprep.subr.bf16.mxu0 %v1457
    %3451 = vmatpush1.bf16.msra.mxu0 %v1456
    %3452 = vmatprep.subr.bf16.mxu0 %v1453
    %3453 = vmatpush1.bf16.msra.mxu0 %v1452
    %3454 = vmatprep.subr.bf16.mxu0 %v1449
    %3455 = vmatpush1.bf16.msra.mxu0 %v1448
    %3456 = vmatprep.subr.bf16.mxu0 0
    %3457 = vmatpush2.bf16.msra.mxu0 0
    %3458 = vmatprep.subr.bf16.mxu0 0
    %3459 = vmatpush2.bf16.msra.mxu0 0
    %3460 = vmatprep.subr.bf16.mxu0 0
    %3461 = vmatpush2.bf16.msra.mxu0 0
    %3462 = vmatprep.subr.bf16.mxu0 0
    %3463 = vmatpush2.bf16.msra.mxu0 0
    %3464 = vmatprep.subr.bf16.mxu0 0
    %3465 = vmatpush2.bf16.msra.mxu0 0
    %3466 = vmatprep.subr.bf16.mxu0 0
    %3467 = vmatpush2.bf16.msra.mxu0 0
    %3468 = vmatprep.subr.bf16.mxu0 0
    %3469 = vmatpush2.bf16.msra.mxu0 0
    %3470 = vmatprep.subr.bf16.mxu0 0
    %3471 = vmatpush2.bf16.msra.mxu0 0
    %3472 = vmatprep.mubr.bf16.mxu0 0
    %3473 = vmatmul.mubr.bf16.gmra.mxu0 %v3320
    %v3474 = vpop.f32.mrf.mxu0
    %v3475 = vadd.f32 0.0, %v3474
    %v3476 = vpop.f32.mrf.mxu0
    %v3477 = vadd.f32 0.0, %v3476
    %v3478 = vpop.f32.mrf.mxu0
    %v3479 = vpop.f32.mrf.mxu0
    %3480 = vdwg.mxu0
    %3481 = vmatprep.subr.bf16.mxu0 %v1479
    %3482 = vmatpush1.bf16.msra.mxu0 %v1478
    %3483 = vmatprep.subr.bf16.mxu0 %v1475
    %3484 = vmatpush1.bf16.msra.mxu0 %v1474
    %3485 = vmatprep.subr.bf16.mxu0 %v1471
    %3486 = vmatpush1.bf16.msra.mxu0 %v1470
    %3487 = vmatprep.subr.bf16.mxu0 %v1467
    %3488 = vmatpush1.bf16.msra.mxu0 %v1466
    %3489 = vmatprep.subr.bf16.mxu0 %v1463
    %3490 = vmatpush1.bf16.msra.mxu0 %v1462
    %3491 = vmatprep.subr.bf16.mxu0 %v1459
    %3492 = vmatpush1.bf16.msra.mxu0 %v1458
    %3493 = vmatprep.subr.bf16.mxu0 %v1455
    %3494 = vmatpush1.bf16.msra.mxu0 %v1454
    %3495 = vmatprep.subr.bf16.mxu0 %v1451
    %3496 = vmatpush1.bf16.msra.mxu0 %v1450
    %3497 = vmatprep.subr.bf16.mxu0 0
    %3498 = vmatpush2.bf16.msra.mxu0 0
    %3499 = vmatprep.subr.bf16.mxu0 0
    %3500 = vmatpush2.bf16.msra.mxu0 0
    %3501 = vmatprep.subr.bf16.mxu0 0
    %3502 = vmatpush2.bf16.msra.mxu0 0
    %3503 = vmatprep.subr.bf16.mxu0 0
    %3504 = vmatpush2.bf16.msra.mxu0 0
    %3505 = vmatprep.subr.bf16.mxu0 0
    %3506 = vmatpush2.bf16.msra.mxu0 0
    %3507 = vmatprep.subr.bf16.mxu0 0
    %3508 = vmatpush2.bf16.msra.mxu0 0
    %3509 = vmatprep.subr.bf16.mxu0 0
    %3510 = vmatpush2.bf16.msra.mxu0 0
    %3511 = vmatprep.subr.bf16.mxu0 0
    %3512 = vmatpush2.bf16.msra.mxu0 0
    %3513 = vmatprep.mubr.bf16.mxu0 0
    %3514 = vmatmul.mubr.bf16.gmra.mxu0 %v3320
    %v3515 = vpop.f32.mrf.mxu0
    %v3516 = vadd.f32 0.0, %v3515
    %v3517 = vpop.f32.mrf.mxu0
    %v3518 = vadd.f32 0.0, %v3517
    %v3519 = vpop.f32.mrf.mxu0
    %v3520 = vpop.f32.mrf.mxu0
    %3521 = vdwg.mxu0
    %v3526 = vrot.slane %v3475, 2
    %v3527 = vrot.slane %v3477, 2
    %v3528 = vrot.slane %v3516, 2
    %v3529 = vrot.slane %v3518, 2
    %v3534 = vadd.f32 %v1273, %v3526
    %v3535 = vadd.f32 %v1275, %v3527
    %v3536 = vadd.f32 %v1314, %v3528
    %v3537 = vadd.f32 %v1316, %v3529
    %v3538 = vxor.u32 %v3534, 2147483648
    %v3539 = vxor.u32 %v3535, 2147483648
    %v3540 = vxor.u32 %v3536, 2147483648
    %v3541 = vxor.u32 %v3537, 2147483648
    %v3542 = vmul.f32 %v3538, 1.442695
    %v3543 = vpow.pop %v3542
    %v3544 = vmul.f32 %v3539, 1.442695
    %v3545 = vpow.pop %v3544
    %v3546 = vmul.f32 %v3540, 1.442695
    %v3547 = vpow.pop %v3546
    %v3548 = vmul.f32 %v3541, 1.442695
    %v3549 = vpow.pop %v3548
    %v3550 = vadd.f32 %v3543, 1.0
    %v3551 = vadd.f32 %v3545, 1.0
    %v3552 = vadd.f32 %v3547, 1.0
    %v3553 = vadd.f32 %v3549, 1.0
    %v3554 = vrcp.pop %v3550
    %v3555 = vmul.f32 1.0, %v3554
    %v3556 = vrcp.pop %v3551
    %v3557 = vmul.f32 1.0, %v3556
    %v3558 = vrcp.pop %v3552
    %v3559 = vmul.f32 1.0, %v3558
    %v3560 = vrcp.pop %v3553
    %v3561 = vmul.f32 1.0, %v3560
    %v3562 = vmul.f32 %v3559, 2.0
    %v3563 = vsub.f32 %v3562, 1.0
    %v3565 = vrot.slane %v3309, 7
    %v3567 = vmul.f32 %v3557, %v3565
    %v3568 = vmul.f32 %v3555, %v3563
    %v3569 = vadd.f32 %v3567, %v3568
    %v3570 = vtanh.pop %v3569
    %v3571 = vmul.f32 %v3561, %v3570
    %v3573 = vrot.slane %v3439, 2
    %v3575 = vpack.c.bf16 %v3571, %v3571
    %v3576 = vpack.c.bf16 %v3573, %v3573
    %v3579 = vrot.slane %v3575, 3
    %v3580 = vrot.slane %v3576, 3
    %3583 = vmatprep.subr.bf16.mxu0 %v1917
    %3584 = vmatpush1.bf16.msra.mxu0 %v1916
    %3585 = vmatprep.subr.bf16.mxu0 %v1913
    %3586 = vmatpush1.bf16.msra.mxu0 %v1912
    %3587 = vmatprep.subr.bf16.mxu0 %v1909
    %3588 = vmatpush1.bf16.msra.mxu0 %v1908
    %3589 = vmatprep.subr.bf16.mxu0 %v1905
    %3590 = vmatpush1.bf16.msra.mxu0 %v1904
    %3591 = vmatprep.subr.bf16.mxu0 %v1901
    %3592 = vmatpush1.bf16.msra.mxu0 %v1900
    %3593 = vmatprep.subr.bf16.mxu0 %v1897
    %3594 = vmatpush1.bf16.msra.mxu0 %v1896
    %3595 = vmatprep.subr.bf16.mxu0 %v1893
    %3596 = vmatpush1.bf16.msra.mxu0 %v1892
    %3597 = vmatprep.subr.bf16.mxu0 %v1889
    %3598 = vmatpush1.bf16.msra.mxu0 %v1888
    %3599 = vmatprep.subr.bf16.mxu0 %v1949
    %3600 = vmatpush2.bf16.msra.mxu0 %v1948
    %3601 = vmatprep.subr.bf16.mxu0 %v1945
    %3602 = vmatpush2.bf16.msra.mxu0 %v1944
    %3603 = vmatprep.subr.bf16.mxu0 %v1941
    %3604 = vmatpush2.bf16.msra.mxu0 %v1940
    %3605 = vmatprep.subr.bf16.mxu0 %v1937
    %3606 = vmatpush2.bf16.msra.mxu0 %v1936
    %3607 = vmatprep.subr.bf16.mxu0 %v1933
    %3608 = vmatpush2.bf16.msra.mxu0 %v1932
    %3609 = vmatprep.subr.bf16.mxu0 %v1929
    %3610 = vmatpush2.bf16.msra.mxu0 %v1928
    %3611 = vmatprep.subr.bf16.mxu0 %v1925
    %3612 = vmatpush2.bf16.msra.mxu0 %v1924
    %3613 = vmatprep.subr.bf16.mxu0 %v1921
    %3614 = vmatpush2.bf16.msra.mxu0 %v1920
    %3615 = vmatprep.mubr.bf16.mxu0 %v3580
    %3616 = vmatmul.mubr.bf16.gmra.mxu0 %v3579
    %v3617 = vpop.f32.mrf.mxu0
    %v3618 = vadd.f32 %v2020, %v3617
    %v3619 = vpop.f32.mrf.mxu0
    %v3620 = vadd.f32 %v2024, %v3619
    %v3621 = vpop.f32.mrf.mxu0
    %v3622 = vpop.f32.mrf.mxu0
    %3623 = vdwg.mxu0
    %3624 = vmatprep.subr.bf16.mxu0 %v1919
    %3625 = vmatpush1.bf16.msra.mxu0 %v1918
    %3626 = vmatprep.subr.bf16.mxu0 %v1915
    %3627 = vmatpush1.bf16.msra.mxu0 %v1914
    %3628 = vmatprep.subr.bf16.mxu0 %v1911
    %3629 = vmatpush1.bf16.msra.mxu0 %v1910
    %3630 = vmatprep.subr.bf16.mxu0 %v1907
    %3631 = vmatpush1.bf16.msra.mxu0 %v1906
    %3632 = vmatprep.subr.bf16.mxu0 %v1903
    %3633 = vmatpush1.bf16.msra.mxu0 %v1902
    %3634 = vmatprep.subr.bf16.mxu0 %v1899
    %3635 = vmatpush1.bf16.msra.mxu0 %v1898
    %3636 = vmatprep.subr.bf16.mxu0 %v1895
    %3637 = vmatpush1.bf16.msra.mxu0 %v1894
    %3638 = vmatprep.subr.bf16.mxu0 %v1891
    %3639 = vmatpush1.bf16.msra.mxu0 %v1890
    %3640 = vmatprep.subr.bf16.mxu0 %v1951
    %3641 = vmatpush2.bf16.msra.mxu0 %v1950
    %3642 = vmatprep.subr.bf16.mxu0 %v1947
    %3643 = vmatpush2.bf16.msra.mxu0 %v1946
    %3644 = vmatprep.subr.bf16.mxu0 %v1943
    %3645 = vmatpush2.bf16.msra.mxu0 %v1942
    %3646 = vmatprep.subr.bf16.mxu0 %v1939
    %3647 = vmatpush2.bf16.msra.mxu0 %v1938
    %3648 = vmatprep.subr.bf16.mxu0 %v1935
    %3649 = vmatpush2.bf16.msra.mxu0 %v1934
    %3650 = vmatprep.subr.bf16.mxu0 %v1931
    %3651 = vmatpush2.bf16.msra.mxu0 %v1930
    %3652 = vmatprep.subr.bf16.mxu0 %v1927
    %3653 = vmatpush2.bf16.msra.mxu0 %v1926
    %3654 = vmatprep.subr.bf16.mxu0 %v1923
    %3655 = vmatpush2.bf16.msra.mxu0 %v1922
    %3656 = vmatprep.mubr.bf16.mxu0 %v3580
    %3657 = vmatmul.mubr.bf16.gmra.mxu0 %v3579
    %v3658 = vpop.f32.mrf.mxu0
    %v3659 = vadd.f32 %v2028, %v3658
    %v3660 = vpop.f32.mrf.mxu0
    %v3661 = vadd.f32 %v2032, %v3660
    %v3662 = vpop.f32.mrf.mxu0
    %v3663 = vpop.f32.mrf.mxu0
    %3664 = vdwg.mxu0
    %v3665 = vxor.u32 %v3618, 2147483648
    %v3666 = vxor.u32 %v3620, 2147483648
    %v3667 = vxor.u32 %v3659, 2147483648
    %v3668 = vxor.u32 %v3661, 2147483648
    %v3669 = vmul.f32 %v3665, 1.442695
    %v3670 = vpow.pop %v3669
    %v3671 = vmul.f32 %v3666, 1.442695
    %v3672 = vpow.pop %v3671
    %v3673 = vmul.f32 %v3667, 1.442695
    %v3674 = vpow.pop %v3673
    %v3675 = vmul.f32 %v3668, 1.442695
    %v3676 = vpow.pop %v3675
    %v3677 = vadd.f32 %v3670, 1.0
    %v3678 = vadd.f32 %v3672, 1.0
    %v3679 = vadd.f32 %v3674, 1.0
    %v3680 = vadd.f32 %v3676, 1.0
    %v3681 = vrcp.pop %v3677
    %v3682 = vmul.f32 1.0, %v3681
    %v3683 = vrcp.pop %v3678
    %v3684 = vmul.f32 1.0, %v3683
    %v3685 = vrcp.pop %v3679
    %v3686 = vmul.f32 1.0, %v3685
    %v3687 = vrcp.pop %v3680
    %v3688 = vmul.f32 1.0, %v3687
    %v3689 = vmul.f32 %v3686, 2.0
    %v3690 = vsub.f32 %v3689, 1.0
    %v3691 = vmul.f32 %v3684, %v3437
    %v3692 = vmul.f32 %v3682, %v3690
    %v3693 = vadd.f32 %v3691, %v3692
    %v3694 = vtanh.pop %v3693
    %v3695 = vmul.f32 %v3688, %v3694
    %3696 = vmatprep.subr.bf16.mxu0 %v1477
    %3697 = vmatpush1.bf16.msra.mxu0 %v1476
    %3698 = vmatprep.subr.bf16.mxu0 %v1473
    %3699 = vmatpush1.bf16.msra.mxu0 %v1472
    %3700 = vmatprep.subr.bf16.mxu0 %v1469
    %3701 = vmatpush1.bf16.msra.mxu0 %v1468
    %3702 = vmatprep.subr.bf16.mxu0 %v1465
    %3703 = vmatpush1.bf16.msra.mxu0 %v1464
    %3704 = vmatprep.subr.bf16.mxu0 %v1461
    %3705 = vmatpush1.bf16.msra.mxu0 %v1460
    %3706 = vmatprep.subr.bf16.mxu0 %v1457
    %3707 = vmatpush1.bf16.msra.mxu0 %v1456
    %3708 = vmatprep.subr.bf16.mxu0 %v1453
    %3709 = vmatpush1.bf16.msra.mxu0 %v1452
    %3710 = vmatprep.subr.bf16.mxu0 %v1449
    %3711 = vmatpush1.bf16.msra.mxu0 %v1448
    %3712 = vmatprep.subr.bf16.mxu0 0
    %3713 = vmatpush2.bf16.msra.mxu0 0
    %3714 = vmatprep.subr.bf16.mxu0 0
    %3715 = vmatpush2.bf16.msra.mxu0 0
    %3716 = vmatprep.subr.bf16.mxu0 0
    %3717 = vmatpush2.bf16.msra.mxu0 0
    %3718 = vmatprep.subr.bf16.mxu0 0
    %3719 = vmatpush2.bf16.msra.mxu0 0
    %3720 = vmatprep.subr.bf16.mxu0 0
    %3721 = vmatpush2.bf16.msra.mxu0 0
    %3722 = vmatprep.subr.bf16.mxu0 0
    %3723 = vmatpush2.bf16.msra.mxu0 0
    %3724 = vmatprep.subr.bf16.mxu0 0
    %3725 = vmatpush2.bf16.msra.mxu0 0
    %3726 = vmatprep.subr.bf16.mxu0 0
    %3727 = vmatpush2.bf16.msra.mxu0 0
    %3728 = vmatprep.mubr.bf16.mxu0 0
    %3729 = vmatmul.mubr.bf16.gmra.mxu0 %v3579
    %v3730 = vpop.f32.mrf.mxu0
    %v3731 = vadd.f32 0.0, %v3730
    %v3732 = vpop.f32.mrf.mxu0
    %v3733 = vadd.f32 0.0, %v3732
    %v3734 = vpop.f32.mrf.mxu0
    %v3735 = vpop.f32.mrf.mxu0
    %3736 = vdwg.mxu0
    %3737 = vmatprep.subr.bf16.mxu0 %v1479
    %3738 = vmatpush1.bf16.msra.mxu0 %v1478
    %3739 = vmatprep.subr.bf16.mxu0 %v1475
    %3740 = vmatpush1.bf16.msra.mxu0 %v1474
    %3741 = vmatprep.subr.bf16.mxu0 %v1471
    %3742 = vmatpush1.bf16.msra.mxu0 %v1470
    %3743 = vmatprep.subr.bf16.mxu0 %v1467
    %3744 = vmatpush1.bf16.msra.mxu0 %v1466
    %3745 = vmatprep.subr.bf16.mxu0 %v1463
    %3746 = vmatpush1.bf16.msra.mxu0 %v1462
    %3747 = vmatprep.subr.bf16.mxu0 %v1459
    %3748 = vmatpush1.bf16.msra.mxu0 %v1458
    %3749 = vmatprep.subr.bf16.mxu0 %v1455
    %3750 = vmatpush1.bf16.msra.mxu0 %v1454
    %3751 = vmatprep.subr.bf16.mxu0 %v1451
    %3752 = vmatpush1.bf16.msra.mxu0 %v1450
    %3753 = vmatprep.subr.bf16.mxu0 0
    %3754 = vmatpush2.bf16.msra.mxu0 0
    %3755 = vmatprep.subr.bf16.mxu0 0
    %3756 = vmatpush2.bf16.msra.mxu0 0
    %3757 = vmatprep.subr.bf16.mxu0 0
    %3758 = vmatpush2.bf16.msra.mxu0 0
    %3759 = vmatprep.subr.bf16.mxu0 0
    %3760 = vmatpush2.bf16.msra.mxu0 0
    %3761 = vmatprep.subr.bf16.mxu0 0
    %3762 = vmatpush2.bf16.msra.mxu0 0
    %3763 = vmatprep.subr.bf16.mxu0 0
    %3764 = vmatpush2.bf16.msra.mxu0 0
    %3765 = vmatprep.subr.bf16.mxu0 0
    %3766 = vmatpush2.bf16.msra.mxu0 0
    %3767 = vmatprep.subr.bf16.mxu0 0
    %3768 = vmatpush2.bf16.msra.mxu0 0
    %3769 = vmatprep.mubr.bf16.mxu0 0
    %3770 = vmatmul.mubr.bf16.gmra.mxu0 %v3579
    %v3771 = vpop.f32.mrf.mxu0
    %v3772 = vadd.f32 0.0, %v3771
    %v3773 = vpop.f32.mrf.mxu0
    %v3774 = vadd.f32 0.0, %v3773
    %v3775 = vpop.f32.mrf.mxu0
    %v3776 = vpop.f32.mrf.mxu0
    %3777 = vdwg.mxu0
    %v3782 = vrot.slane %v3731, 1
    %v3783 = vrot.slane %v3733, 1
    %v3784 = vrot.slane %v3772, 1
    %v3785 = vrot.slane %v3774, 1
    %v3790 = vadd.f32 %v1273, %v3782
    %v3791 = vadd.f32 %v1275, %v3783
    %v3792 = vadd.f32 %v1314, %v3784
    %v3793 = vadd.f32 %v1316, %v3785
    %v3794 = vxor.u32 %v3790, 2147483648
    %v3795 = vxor.u32 %v3791, 2147483648
    %v3796 = vxor.u32 %v3792, 2147483648
    %v3797 = vxor.u32 %v3793, 2147483648
    %v3798 = vmul.f32 %v3794, 1.442695
    %v3799 = vpow.pop %v3798
    %v3800 = vmul.f32 %v3795, 1.442695
    %v3801 = vpow.pop %v3800
    %v3802 = vmul.f32 %v3796, 1.442695
    %v3803 = vpow.pop %v3802
    %v3804 = vmul.f32 %v3797, 1.442695
    %v3805 = vpow.pop %v3804
    %v3806 = vadd.f32 %v3799, 1.0
    %v3807 = vadd.f32 %v3801, 1.0
    %v3808 = vadd.f32 %v3803, 1.0
    %v3809 = vadd.f32 %v3805, 1.0
    %v3810 = vrcp.pop %v3806
    %v3811 = vmul.f32 1.0, %v3810
    %v3812 = vrcp.pop %v3807
    %v3813 = vmul.f32 1.0, %v3812
    %v3814 = vrcp.pop %v3808
    %v3815 = vmul.f32 1.0, %v3814
    %v3816 = vrcp.pop %v3809
    %v3817 = vmul.f32 1.0, %v3816
    %v3818 = vmul.f32 %v3815, 2.0
    %v3819 = vsub.f32 %v3818, 1.0
    %v3821 = vrot.slane %v3569, 7
    %v3823 = vmul.f32 %v3813, %v3821
    %v3824 = vmul.f32 %v3811, %v3819
    %v3825 = vadd.f32 %v3823, %v3824
    %v3826 = vtanh.pop %v3825
    %v3827 = vmul.f32 %v3817, %v3826
    %v3829 = vrot.slane %v3695, 1
    %v3831 = vpack.c.bf16 %v3827, %v3827
    %v3832 = vpack.c.bf16 %v3829, %v3829
    %v3834 = vshrl.u32 %v3831, 16
    %v3836 = vrot.slane %v3834, 3
    %v3838 = vshrl.u32 %v3832, 16
    %v3840 = vrot.slane %v3838, 3
    %3843 = vmatprep.subr.bf16.mxu0 %v1917
    %3844 = vmatpush1.bf16.msra.mxu0 %v1916
    %3845 = vmatprep.subr.bf16.mxu0 %v1913
    %3846 = vmatpush1.bf16.msra.mxu0 %v1912
    %3847 = vmatprep.subr.bf16.mxu0 %v1909
    %3848 = vmatpush1.bf16.msra.mxu0 %v1908
    %3849 = vmatprep.subr.bf16.mxu0 %v1905
    %3850 = vmatpush1.bf16.msra.mxu0 %v1904
    %3851 = vmatprep.subr.bf16.mxu0 %v1901
    %3852 = vmatpush1.bf16.msra.mxu0 %v1900
    %3853 = vmatprep.subr.bf16.mxu0 %v1897
    %3854 = vmatpush1.bf16.msra.mxu0 %v1896
    %3855 = vmatprep.subr.bf16.mxu0 %v1893
    %3856 = vmatpush1.bf16.msra.mxu0 %v1892
    %3857 = vmatprep.subr.bf16.mxu0 %v1889
    %3858 = vmatpush1.bf16.msra.mxu0 %v1888
    %3859 = vmatprep.subr.bf16.mxu0 %v1949
    %3860 = vmatpush2.bf16.msra.mxu0 %v1948
    %3861 = vmatprep.subr.bf16.mxu0 %v1945
    %3862 = vmatpush2.bf16.msra.mxu0 %v1944
    %3863 = vmatprep.subr.bf16.mxu0 %v1941
    %3864 = vmatpush2.bf16.msra.mxu0 %v1940
    %3865 = vmatprep.subr.bf16.mxu0 %v1937
    %3866 = vmatpush2.bf16.msra.mxu0 %v1936
    %3867 = vmatprep.subr.bf16.mxu0 %v1933
    %3868 = vmatpush2.bf16.msra.mxu0 %v1932
    %3869 = vmatprep.subr.bf16.mxu0 %v1929
    %3870 = vmatpush2.bf16.msra.mxu0 %v1928
    %3871 = vmatprep.subr.bf16.mxu0 %v1925
    %3872 = vmatpush2.bf16.msra.mxu0 %v1924
    %3873 = vmatprep.subr.bf16.mxu0 %v1921
    %3874 = vmatpush2.bf16.msra.mxu0 %v1920
    %3875 = vmatprep.mubr.bf16.mxu0 %v3840
    %3876 = vmatmul.mubr.bf16.gmra.mxu0 %v3836
    %v3877 = vpop.f32.mrf.mxu0
    %v3878 = vadd.f32 %v2020, %v3877
    %v3879 = vpop.f32.mrf.mxu0
    %v3880 = vadd.f32 %v2024, %v3879
    %v3881 = vpop.f32.mrf.mxu0
    %v3882 = vpop.f32.mrf.mxu0
    %3883 = vdwg.mxu0
    %3884 = vmatprep.subr.bf16.mxu0 %v1919
    %3885 = vmatpush1.bf16.msra.mxu0 %v1918
    %3886 = vmatprep.subr.bf16.mxu0 %v1915
    %3887 = vmatpush1.bf16.msra.mxu0 %v1914
    %3888 = vmatprep.subr.bf16.mxu0 %v1911
    %3889 = vmatpush1.bf16.msra.mxu0 %v1910
    %3890 = vmatprep.subr.bf16.mxu0 %v1907
    %3891 = vmatpush1.bf16.msra.mxu0 %v1906
    %3892 = vmatprep.subr.bf16.mxu0 %v1903
    %3893 = vmatpush1.bf16.msra.mxu0 %v1902
    %3894 = vmatprep.subr.bf16.mxu0 %v1899
    %3895 = vmatpush1.bf16.msra.mxu0 %v1898
    %3896 = vmatprep.subr.bf16.mxu0 %v1895
    %3897 = vmatpush1.bf16.msra.mxu0 %v1894
    %3898 = vmatprep.subr.bf16.mxu0 %v1891
    %3899 = vmatpush1.bf16.msra.mxu0 %v1890
    %3900 = vmatprep.subr.bf16.mxu0 %v1951
    %3901 = vmatpush2.bf16.msra.mxu0 %v1950
    %3902 = vmatprep.subr.bf16.mxu0 %v1947
    %3903 = vmatpush2.bf16.msra.mxu0 %v1946
    %3904 = vmatprep.subr.bf16.mxu0 %v1943
    %3905 = vmatpush2.bf16.msra.mxu0 %v1942
    %3906 = vmatprep.subr.bf16.mxu0 %v1939
    %3907 = vmatpush2.bf16.msra.mxu0 %v1938
    %3908 = vmatprep.subr.bf16.mxu0 %v1935
    %3909 = vmatpush2.bf16.msra.mxu0 %v1934
    %3910 = vmatprep.subr.bf16.mxu0 %v1931
    %3911 = vmatpush2.bf16.msra.mxu0 %v1930
    %3912 = vmatprep.subr.bf16.mxu0 %v1927
    %3913 = vmatpush2.bf16.msra.mxu0 %v1926
    %3914 = vmatprep.subr.bf16.mxu0 %v1923
    %3915 = vmatpush2.bf16.msra.mxu0 %v1922
    %3916 = vmatprep.mubr.bf16.mxu0 %v3840
    %3917 = vmatmul.mubr.bf16.gmra.mxu0 %v3836
    %v3918 = vpop.f32.mrf.mxu0
    %v3919 = vadd.f32 %v2028, %v3918
    %v3920 = vpop.f32.mrf.mxu0
    %v3921 = vadd.f32 %v2032, %v3920
    %v3922 = vpop.f32.mrf.mxu0
    %v3923 = vpop.f32.mrf.mxu0
    %3924 = vdwg.mxu0
    %v3925 = vxor.u32 %v3878, 2147483648
    %v3926 = vxor.u32 %v3880, 2147483648
    %v3927 = vxor.u32 %v3919, 2147483648
    %v3928 = vxor.u32 %v3921, 2147483648
    %v3929 = vmul.f32 %v3925, 1.442695
    %v3930 = vpow.pop %v3929
    %v3931 = vmul.f32 %v3926, 1.442695
    %v3932 = vpow.pop %v3931
    %v3933 = vmul.f32 %v3927, 1.442695
    %v3934 = vpow.pop %v3933
    %v3935 = vmul.f32 %v3928, 1.442695
    %v3936 = vpow.pop %v3935
    %v3937 = vadd.f32 %v3930, 1.0
    %v3938 = vadd.f32 %v3932, 1.0
    %v3939 = vadd.f32 %v3934, 1.0
    %v3940 = vadd.f32 %v3936, 1.0
    %v3941 = vrcp.pop %v3937
    %v3942 = vmul.f32 1.0, %v3941
    %v3943 = vrcp.pop %v3938
    %v3944 = vmul.f32 1.0, %v3943
    %v3945 = vrcp.pop %v3939
    %v3946 = vmul.f32 1.0, %v3945
    %v3947 = vrcp.pop %v3940
    %v3948 = vmul.f32 1.0, %v3947
    %v3949 = vmul.f32 %v3946, 2.0
    %v3950 = vsub.f32 %v3949, 1.0
    %v3951 = vmul.f32 %v3944, %v3693
    %v3952 = vmul.f32 %v3942, %v3950
    %v3953 = vadd.f32 %v3951, %v3952
    %v3954 = vtanh.pop %v3953
    %v3955 = vmul.f32 %v3948, %v3954
    %v3956 = vmax.f32 %v3955, 0.0
    %v3957 = vmax.f32 %v847, 0.0
    %v3958 = vld [vmem:[%s22] sm:$0xff]
    %v3959 = vld [vmem:[%s22 + $0x8] sm:$0xff]
    %v3960 = vld [vmem:[%s22 + $0x10] sm:$0xff]
    %v3961 = vld [vmem:[%s22 + $0x18] sm:$0xff]
    %v3962 = vld [vmem:[%s22 + $0x20] sm:$0xff]
    %v3963 = vld [vmem:[%s22 + $0x28] sm:$0xff]
    %v3964 = vld [vmem:[%s22 + $0x30] sm:$0xff]
    %v3965 = vld [vmem:[%s22 + $0x38] sm:$0xff]
    %v3966 = vld [vmem:[%s22 + $0x40] sm:$0xff]
    %v3967 = vld [vmem:[%s22 + $0x48] sm:$0xff]
    %v3968 = vld [vmem:[%s22 + $0x50] sm:$0xff]
    %v3969 = vld [vmem:[%s22 + $0x58] sm:$0xff]
    %v3970 = vld [vmem:[%s22 + $0x60] sm:$0xff]
    %v3971 = vld [vmem:[%s22 + $0x68] sm:$0xff]
    %v3972 = vld [vmem:[%s22 + $0x70] sm:$0xff]
    %v3973 = vld [vmem:[%s22 + $0x78] sm:$0xff]
    %v3974 = vld [vmem:[%s23] sm:$0xff]
    %v3975 = vld [vmem:[%s23 + $0x8] sm:$0xff]
    %v3976 = vld [vmem:[%s23 + $0x10] sm:$0xff]
    %v3977 = vld [vmem:[%s23 + $0x18] sm:$0xff]
    %v3978 = vld [vmem:[%s23 + $0x20] sm:$0xff]
    %v3979 = vld [vmem:[%s23 + $0x28] sm:$0xff]
    %v3980 = vld [vmem:[%s23 + $0x30] sm:$0xff]
    %v3981 = vld [vmem:[%s23 + $0x38] sm:$0xff]
    %v3982 = vld [vmem:[%s23 + $0x40] sm:$0xff]
    %v3983 = vld [vmem:[%s23 + $0x48] sm:$0xff]
    %v3984 = vld [vmem:[%s23 + $0x50] sm:$0xff]
    %v3985 = vld [vmem:[%s23 + $0x58] sm:$0xff]
    %v3986 = vld [vmem:[%s23 + $0x60] sm:$0xff]
    %v3987 = vld [vmem:[%s23 + $0x68] sm:$0xff]
    %v3988 = vld [vmem:[%s23 + $0x70] sm:$0xff]
    %v3989 = vld [vmem:[%s23 + $0x78] sm:$0xff]
    %3990 = vmatprep.subr.mxu0 0.0
    %3991 = vmatpush1.msra.mxu0 %v3989
    %3992 = vmatprep.subr.mxu0 0.0
    %3993 = vmatpush1.msra.mxu0 %v3988
    %3994 = vmatprep.subr.mxu0 0.0
    %3995 = vmatpush1.msra.mxu0 %v3987
    %3996 = vmatprep.subr.mxu0 0.0
    %3997 = vmatpush1.msra.mxu0 %v3986
    %3998 = vmatprep.subr.mxu0 0.0
    %3999 = vmatpush1.msra.mxu0 %v3985
    %4000 = vmatprep.subr.mxu0 0.0
    %4001 = vmatpush1.msra.mxu0 %v3984
    %4002 = vmatprep.subr.mxu0 0.0
    %4003 = vmatpush1.msra.mxu0 %v3983
    %4004 = vmatprep.subr.mxu0 0.0
    %4005 = vmatpush1.msra.mxu0 %v3982
    %4006 = vmatprep.subr.mxu0 0.0
    %4007 = vmatpush1.msra.mxu0 %v3981
    %4008 = vmatprep.subr.mxu0 0.0
    %4009 = vmatpush1.msra.mxu0 %v3980
    %4010 = vmatprep.subr.mxu0 0.0
    %4011 = vmatpush1.msra.mxu0 %v3979
    %4012 = vmatprep.subr.mxu0 0.0
    %4013 = vmatpush1.msra.mxu0 %v3978
    %4014 = vmatprep.subr.mxu0 0.0
    %4015 = vmatpush1.msra.mxu0 %v3977
    %4016 = vmatprep.subr.mxu0 0.0
    %4017 = vmatpush1.msra.mxu0 %v3976
    %4018 = vmatprep.subr.mxu0 0.0
    %4019 = vmatpush1.msra.mxu0 %v3975
    %4020 = vmatprep.subr.mxu0 0.0
    %4021 = vmatpush1.msra.mxu0 %v3974
    %4022 = vmatprep.subr.mxu0 0.0
    %4023 = vmatpush2.msra.mxu0 0.0
    %4024 = vmatprep.subr.mxu0 0.0
    %4025 = vmatpush2.msra.mxu0 0.0
    %4026 = vmatprep.subr.mxu0 0.0
    %4027 = vmatpush2.msra.mxu0 0.0
    %4028 = vmatprep.subr.mxu0 0.0
    %4029 = vmatpush2.msra.mxu0 0.0
    %4030 = vmatprep.subr.mxu0 0.0
    %4031 = vmatpush2.msra.mxu0 0.0
    %4032 = vmatprep.subr.mxu0 0.0
    %4033 = vmatpush2.msra.mxu0 0.0
    %4034 = vmatprep.subr.mxu0 0.0
    %4035 = vmatpush2.msra.mxu0 0.0
    %4036 = vmatprep.subr.mxu0 0.0
    %4037 = vmatpush2.msra.mxu0 0.0
    %4038 = vmatprep.subr.mxu0 0.0
    %4039 = vmatpush2.msra.mxu0 0.0
    %4040 = vmatprep.subr.mxu0 0.0
    %4041 = vmatpush2.msra.mxu0 0.0
    %4042 = vmatprep.subr.mxu0 0.0
    %4043 = vmatpush2.msra.mxu0 0.0
    %4044 = vmatprep.subr.mxu0 0.0
    %4045 = vmatpush2.msra.mxu0 0.0
    %4046 = vmatprep.subr.mxu0 0.0
    %4047 = vmatpush2.msra.mxu0 0.0
    %4048 = vmatprep.subr.mxu0 0.0
    %4049 = vmatpush2.msra.mxu0 0.0
    %4050 = vmatprep.subr.mxu0 0.0
    %4051 = vmatpush2.msra.mxu0 0.0
    %4052 = vmatprep.subr.mxu0 0.0
    %4053 = vmatpush2.msra.mxu0 0.0
    %4054 = vmatprep.mubr.f32.mxu0 0.0
    %4055 = vmatmul.mubr.f32.gmra.mxu0 %v3957
    %v4056 = vpop.f32.mrf.mxu0
    %v4057 = vadd.f32 0.0, %v4056
    %v4058 = vpop.f32.mrf.mxu0
    %4059 = vdwg.mxu0
    %4060 = vmatprep.subr.mxu0 0.0
    %4061 = vmatpush1.msra.mxu0 %v3973
    %4062 = vmatprep.subr.mxu0 0.0
    %4063 = vmatpush1.msra.mxu0 %v3972
    %4064 = vmatprep.subr.mxu0 0.0
    %4065 = vmatpush1.msra.mxu0 %v3971
    %4066 = vmatprep.subr.mxu0 0.0
    %4067 = vmatpush1.msra.mxu0 %v3970
    %4068 = vmatprep.subr.mxu0 0.0
    %4069 = vmatpush1.msra.mxu0 %v3969
    %4070 = vmatprep.subr.mxu0 0.0
    %4071 = vmatpush1.msra.mxu0 %v3968
    %4072 = vmatprep.subr.mxu0 0.0
    %4073 = vmatpush1.msra.mxu0 %v3967
    %4074 = vmatprep.subr.mxu0 0.0
    %4075 = vmatpush1.msra.mxu0 %v3966
    %4076 = vmatprep.subr.mxu0 0.0
    %4077 = vmatpush1.msra.mxu0 %v3965
    %4078 = vmatprep.subr.mxu0 0.0
    %4079 = vmatpush1.msra.mxu0 %v3964
    %4080 = vmatprep.subr.mxu0 0.0
    %4081 = vmatpush1.msra.mxu0 %v3963
    %4082 = vmatprep.subr.mxu0 0.0
    %4083 = vmatpush1.msra.mxu0 %v3962
    %4084 = vmatprep.subr.mxu0 0.0
    %4085 = vmatpush1.msra.mxu0 %v3961
    %4086 = vmatprep.subr.mxu0 0.0
    %4087 = vmatpush1.msra.mxu0 %v3960
    %4088 = vmatprep.subr.mxu0 0.0
    %4089 = vmatpush1.msra.mxu0 %v3959
    %4090 = vmatprep.subr.mxu0 0.0
    %4091 = vmatpush1.msra.mxu0 %v3958
    %4092 = vmatprep.subr.mxu0 0.0
    %4093 = vmatpush2.msra.mxu0 0.0
    %4094 = vmatprep.subr.mxu0 0.0
    %4095 = vmatpush2.msra.mxu0 0.0
    %4096 = vmatprep.subr.mxu0 0.0
    %4097 = vmatpush2.msra.mxu0 0.0
    %4098 = vmatprep.subr.mxu0 0.0
    %4099 = vmatpush2.msra.mxu0 0.0
    %4100 = vmatprep.subr.mxu0 0.0
    %4101 = vmatpush2.msra.mxu0 0.0
    %4102 = vmatprep.subr.mxu0 0.0
    %4103 = vmatpush2.msra.mxu0 0.0
    %4104 = vmatprep.subr.mxu0 0.0
    %4105 = vmatpush2.msra.mxu0 0.0
    %4106 = vmatprep.subr.mxu0 0.0
    %4107 = vmatpush2.msra.mxu0 0.0
    %4108 = vmatprep.subr.mxu0 0.0
    %4109 = vmatpush2.msra.mxu0 0.0
    %4110 = vmatprep.subr.mxu0 0.0
    %4111 = vmatpush2.msra.mxu0 0.0
    %4112 = vmatprep.subr.mxu0 0.0
    %4113 = vmatpush2.msra.mxu0 0.0
    %4114 = vmatprep.subr.mxu0 0.0
    %4115 = vmatpush2.msra.mxu0 0.0
    %4116 = vmatprep.subr.mxu0 0.0
    %4117 = vmatpush2.msra.mxu0 0.0
    %4118 = vmatprep.subr.mxu0 0.0
    %4119 = vmatpush2.msra.mxu0 0.0
    %4120 = vmatprep.subr.mxu0 0.0
    %4121 = vmatpush2.msra.mxu0 0.0
    %4122 = vmatprep.subr.mxu0 0.0
    %4123 = vmatpush2.msra.mxu0 0.0
    %4124 = vmatprep.mubr.f32.mxu0 0.0
    %4125 = vmatmul.mubr.f32.gmra.mxu0 %v3956
    %v4126 = vpop.f32.mrf.mxu0
    %v4127 = vadd.f32 %v4057, %v4126
    %v4128 = vpop.f32.mrf.mxu0
    %4129 = vdwg.mxu0
    %v4130 = vld [vmem:[%s24] sm:$0x1]
    %v4131 = vadd.f32 %v4127, %v4130
    %v4132 = vmax.f32 %v4131, 0.0
    %v4133 = vld [vmem:[#allocation25] sm:$0xff]
    %v4134 = vld [vmem:[#allocation25 + $0x8] sm:$0xff]
    %v4135 = vld [vmem:[#allocation25 + $0x10] sm:$0x1]
    %v4136 = vld [vmem:[%s26] sm:$0x1]
    %vm4137 = vcmask 138240
    %v4139 = vsel %vm4137, %v4132, 0
    %vm4141 = vcmask 1040384
    %v4143 = vsel %vm4141, %v4135, 0
    %4145 = vmatprep.subr.mxu0 0.0
    %4146 = vmatpush1.msra.mxu0 0.0
    %4147 = vmatprep.subr.mxu0 0.0
    %4148 = vmatpush1.msra.mxu0 0.0
    %4149 = vmatprep.subr.mxu0 0.0
    %4150 = vmatpush1.msra.mxu0 0.0
    %4151 = vmatprep.subr.mxu0 0.0
    %4152 = vmatpush1.msra.mxu0 0.0
    %4153 = vmatprep.subr.mxu0 0.0
    %4154 = vmatpush1.msra.mxu0 0.0
    %4155 = vmatprep.subr.mxu0 0.0
    %4156 = vmatpush1.msra.mxu0 0.0
    %4157 = vmatprep.subr.mxu0 0.0
    %4158 = vmatpush1.msra.mxu0 0.0
    %4159 = vmatprep.subr.mxu0 0.0
    %4160 = vmatpush1.msra.mxu0 0.0
    %4161 = vmatprep.subr.mxu0 0.0
    %4162 = vmatpush1.msra.mxu0 0.0
    %4163 = vmatprep.subr.mxu0 0.0
    %4164 = vmatpush1.msra.mxu0 0.0
    %4165 = vmatprep.subr.mxu0 0.0
    %4166 = vmatpush1.msra.mxu0 0.0
    %4167 = vmatprep.subr.mxu0 0.0
    %4168 = vmatpush1.msra.mxu0 0.0
    %4169 = vmatprep.subr.mxu0 0.0
    %4170 = vmatpush1.msra.mxu0 0.0
    %4171 = vmatprep.subr.mxu0 0.0
    %4172 = vmatpush1.msra.mxu0 %v4143
    %4173 = vmatprep.subr.mxu0 0.0
    %4174 = vmatpush1.msra.mxu0 %v4134
    %4175 = vmatprep.subr.mxu0 0.0
    %4176 = vmatpush1.msra.mxu0 %v4133
    %4177 = vmatprep.subr.mxu0 0.0
    %4178 = vmatpush2.msra.mxu0 0.0
    %4179 = vmatprep.subr.mxu0 0.0
    %4180 = vmatpush2.msra.mxu0 0.0
    %4181 = vmatprep.subr.mxu0 0.0
    %4182 = vmatpush2.msra.mxu0 0.0
    %4183 = vmatprep.subr.mxu0 0.0
    %4184 = vmatpush2.msra.mxu0 0.0
    %4185 = vmatprep.subr.mxu0 0.0
    %4186 = vmatpush2.msra.mxu0 0.0
    %4187 = vmatprep.subr.mxu0 0.0
    %4188 = vmatpush2.msra.mxu0 0.0
    %4189 = vmatprep.subr.mxu0 0.0
    %4190 = vmatpush2.msra.mxu0 0.0
    %4191 = vmatprep.subr.mxu0 0.0
    %4192 = vmatpush2.msra.mxu0 0.0
    %4193 = vmatprep.subr.mxu0 0.0
    %4194 = vmatpush2.msra.mxu0 0.0
    %4195 = vmatprep.subr.mxu0 0.0
    %4196 = vmatpush2.msra.mxu0 0.0
    %4197 = vmatprep.subr.mxu0 0.0
    %4198 = vmatpush2.msra.mxu0 0.0
    %4199 = vmatprep.subr.mxu0 0.0
    %4200 = vmatpush2.msra.mxu0 0.0
    %4201 = vmatprep.subr.mxu0 0.0
    %4202 = vmatpush2.msra.mxu0 0.0
    %4203 = vmatprep.subr.mxu0 0.0
    %4204 = vmatpush2.msra.mxu0 0.0
    %4205 = vmatprep.subr.mxu0 0.0
    %4206 = vmatpush2.msra.mxu0 0.0
    %4207 = vmatprep.subr.mxu0 0.0
    %4208 = vmatpush2.msra.mxu0 0.0
    %4209 = vmatprep.mubr.f32.mxu0 0.0
    %4210 = vmatmul.mubr.f32.gmra.mxu0 %v4139
    %v4211 = vpop.f32.mrf.mxu0
    %v4212 = vadd.f32 %v4136, %v4211
    %v4213 = vpop.f32.mrf.mxu0
    %4214 = vdwg.mxu0
    %vm4215 = vcmask 131072
    %4216 = vst.msk [vmem:[#allocation26] sm:$0x1] %vm4215, %v4212
    // Predicated region
    $region170: #{tpu_custom_call.1} parent=1 // pred_check
      _
    $region171: #{tpu_custom_call.1} parent=1 // pred_check_branch
      %4218 = sbr.rel (0) target = $region173
    $region172: #{tpu_custom_call.1} parent=1 // pred_region
      %s4220 = ssub.s32 16, 16
      %4221 = vsyncadd [#allocation4], %s4220
      %s4223 = sshll.u32 [#allocation26], 4
      %s4224 = int_to_ptr.vmem [resolvable:$true] %s4223
      %4226 = dma.vmem_to_hbm [thread:$0]  %s4224, 16, %s27, [#allocation4]
    $region173: #{tpu_custom_call.1} parent=1 // pred_fallthru
      _
    // Predicated region
    $region174: #{tpu_custom_call.1} parent=1 // pred_check
      _
    $region175: #{tpu_custom_call.1} parent=1 // pred_check_branch
      %4228 = sbr.rel (0) target = $region177
    $region176: #{tpu_custom_call.1} parent=1 // pred_region
      %4229 = dma.done [#allocation4], 16
    $region177: #{tpu_custom_call.1} parent=1 // pred_fallthru
      _
    %4230 = vsyncpa [#allocation3], 1
    %4231 = vsyncpa [#allocation6], 1
    %4232 = vsyncpa [#allocation9], 1
    %4233 = vsyncpa [#allocation12], 1
    %4234 = vsyncpa [#allocation15], 1
    %4235 = vsyncpa [#allocation18], 1
    %4236 = vsyncpa [#allocation21], 1
    %4237 = vsyncpa [#allocation24], 1
    %4238 = vsyncpa [#allocation4], 1

</llo_original>
